<compile_context>
chip_gen: v7x
topology: tpu7x:2x2x1
jax: 0.10.0
libtpu: 0.0.40
codegen_flags: <defaults>
</compile_context>

<pallas_src>
import math

import jax
import jax.numpy as jnp
from jax.experimental import pallas as pl
from jax.experimental.pallas import tpu as pltpu

_LANE = 128
_SUBLANE = 8


def _round_up(x, m):
    return ((x + m - 1) // m) * m


def _sine_kernel(x_ref, w_ref, b_ref, o_ref):
    # omega_0 is already folded into w and b by the wrapper:
    #   sin(w0 * (x @ W + b)) == sin(x @ (w0*W) + (w0*b))
    x = x_ref[...]                                            # (tile, in_f)
    w = w_ref[...]                                            # (in_f, out_fp)
    b = b_ref[...]                                            # (1, out_fp) f32
    y = jnp.dot(x, w, preferred_element_type=jnp.float32)     # MXU, f32 acc
    y = y + b
    o_ref[...] = jnp.sin(y).astype(o_ref.dtype)


def _vmem_ceiling_bytes():
    """75% of the chip's physical VMEM (64 MiB on v7x, 128 MiB on v5e/v6e)."""
    try:
        cap = int(getattr(pltpu.get_tpu_info(), "vmem_capacity_bytes",
                          64 << 20))
    except Exception:  # pragma: no cover - interpret mode / odd backends
        cap = 64 << 20
    return max(16 << 20, int(cap * 0.75))


def sine_layer(x, w_t, b, omega_0=30.0, *, tile_n=None, input_dtype=None,
               out_dtype=jnp.float32, keep_padded_output=False):
    """SIREN SineLayer forward: sin(omega_0 * (x @ w_t + b)).

    x:   [N, in_features]
    w_t: [in_features, out_features]   (PyTorch nn.Linear weight, transposed)
    b:   [out_features] or [1, out_features]

    tile_n:       optional row-tile override (default: auto-sized).
    input_dtype:  dtype for x / W on the MXU. None = auto (bf16 for large
                  hidden layers, f32 otherwise).  Accumulation/bias/sin are f32.
    out_dtype:    dtype of the stored activation (f32 default, bf16 for chained
                  SIREN layers).
    keep_padded_output: return the lane-padded [N, round_up(out_f,128)] array
                  and skip the extra HBM slice pass.
    """
    N, in_f = x.shape
    out_f = w_t.shape[1]
    b = jnp.reshape(b, (1, out_f)).astype(jnp.float32)

    # ---- fold omega_0 into the small parameters (one-time, tiny arrays) ----
    omega_0 = float(omega_0)
    w_s = w_t.astype(jnp.float32) * omega_0
    b_s = b * omega_0

    # ---- lane-dense output: pad out_features to a multiple of 128 ----------
    out_fp = _round_up(out_f, _LANE)
    if out_fp != out_f:
        w_s = jnp.pad(w_s, ((0, 0), (0, out_fp - out_f)))
        b_s = jnp.pad(b_s, ((0, 0), (0, out_fp - out_f)))

    # ---- input dtype: bf16 auto-path for large, mem-bound hidden layers ----
    if input_dtype is None:
        # First SIREN layer (tiny in_f) and small problems stay f32: precision
        # sensitive and not HBM-bound anyway.
        input_dtype = jnp.bfloat16 if (N >= 4096 and in_f >= 64) else x.dtype
    x = x.astype(input_dtype)
    w_s = w_s.astype(input_dtype)
    x_it = jnp.dtype(input_dtype).itemsize
    o_it = jnp.dtype(out_dtype).itemsize

    # ---- tile-size selection -------------------------------------------------
    vmem_ceiling = _vmem_ceiling_bytes()
    in_f_lanes = _round_up(in_f, _LANE)          # VMEM lane padding of x block
    in_f_sub = _round_up(in_f, _SUBLANE)         # VMEM sublane padding of W

    # Target ~8 MiB of real HBM traffic per grid step to amortize the
    # ~0.35us/step pipeline overhead.
    hbm_row_bytes = in_f * x_it + out_fp * o_it
    tile = (8 << 20) // max(hbm_row_bytes, 1)
    if tile_n is not None:
        tile = min(tile, int(tile_n))
    tile = max(_SUBLANE, min(tile, _round_up(N, _SUBLANE)))
    tile = _round_up(tile, _SUBLANE)

    # Cap the tile so double-buffered x/out tiles + (double-buffer-worst-case)
    # resident params fit the per-chip VMEM ceiling (lane-padding aware).
    param_bytes = 2 * (in_f_sub * out_fp * x_it + _SUBLANE * out_fp * 4)
    per_row_vmem = 2 * (in_f_lanes * x_it + out_fp * o_it)
    headroom = 2 << 20
    max_rows = (vmem_ceiling - param_bytes - headroom) // max(per_row_vmem, 1)
    if max_rows >= _SUBLANE:
        tile = min(tile, (max_rows // _SUBLANE) * _SUBLANE)
    tile = max(_SUBLANE, tile)

    grid_n = pl.cdiv(N, tile)
    # Two-TC split (v7x megacore): if everything landed in a single grid step,
    # halve the tile so the "parallel" axis has >= 2 steps to shard.
    if grid_n == 1 and N >= 2 * _SUBLANE:
        tile = _round_up(pl.cdiv(N, 2), _SUBLANE)
        grid_n = pl.cdiv(N, tile)

    # ---- explicit VMEM budget (layout-padded) --------------------------------
    x_blk = _round_up(tile, _SUBLANE) * in_f_lanes * x_it
    o_blk = _round_up(tile, _SUBLANE) * out_fp * o_it
    vmem_bytes = 2 * (x_blk + o_blk) + param_bytes + headroom
    vmem_bytes = int(min(max(vmem_bytes, 4 << 20), vmem_ceiling))

    out_shape = jax.ShapeDtypeStruct((N, out_fp), out_dtype)

    def _call(single_buffer_params):
        pm = {}
        if single_buffer_params and hasattr(pl, "Buffered"):
            # W / b index_maps are constant across the grid: one VMEM copy is
            # enough; avoids duplicating W (matters for wide layers on v7x).
            pm = dict(pipeline_mode=pl.Buffered(1))
        in_specs = [
            pl.BlockSpec((tile, in_f), lambda i: (i, 0)),        # x row-tile
            pl.BlockSpec((in_f, out_fp), lambda i: (0, 0), **pm),  # resident W
            pl.BlockSpec((1, out_fp), lambda i: (0, 0), **pm),     # resident b
        ]
        return pl.pallas_call(
            _sine_kernel,
            out_shape=out_shape,
            grid_spec=pltpu.PrefetchScalarGridSpec(
                num_scalar_prefetch=0,
                grid=(grid_n,),
                in_specs=in_specs,
                out_specs=pl.BlockSpec((tile, out_fp), lambda i: (i, 0)),
            ),
            compiler_params=pltpu.CompilerParams(
                dimension_semantics=("parallel",),
                vmem_limit_bytes=vmem_bytes,
            ),
        )(x, w_s, b_s)

    try:
        out_padded = _call(single_buffer_params=True)
    except Exception:
        # Older/newer JAX without pipeline_mode support on pallas_call specs.
        out_padded = _call(single_buffer_params=False)

    if keep_padded_output or out_fp == out_f:
        return out_padded
    return out_padded[:, :out_f]


def init_sine_layer_params(key, in_features, out_features,
                           is_first=False, omega_0=30.0):
    """Deterministic SIREN init (matches SineLayer.init_weights semantics)."""
    kw, kb = jax.random.split(key)
    if is_first:
        bound_w = 1.0 / in_features
    else:
        bound_w = math.sqrt(6.0 / in_features) / omega_0
    # PyTorch stores weight as [out, in]; keep the transposed [in, out] layout
    # so the kernel does x @ W_t directly.
    w_t = jax.random.uniform(kw, (in_features, out_features),
                             minval=-bound_w, maxval=bound_w,
                             dtype=jnp.float32)
    # nn.Linear default bias init: U(-1/sqrt(in), 1/sqrt(in))
    bound_b = 1.0 / math.sqrt(in_features)
    b = jax.random.uniform(kb, (1, out_features),
                           minval=-bound_b, maxval=bound_b,
                           dtype=jnp.float32)
    return w_t, b


if __name__ == "__main__":
    key = jax.random.PRNGKey(0)
    k_x, k_p = jax.random.split(key)

    # Small shapes; N is deliberately not a multiple of the chosen tile so the
    # ragged-tail path runs, and out_features < 128 exercises lane padding.
    # The auto-split gives a 2-step grid even at this size.
    N, in_features, out_features = 200, 16, 32
    omega_0 = 30.0
    is_first = True

    x = jax.random.uniform(k_x, (N, in_features),
                           minval=-1.0, maxval=1.0, dtype=jnp.float32)
    w_t, b = init_sine_layer_params(k_p, in_features, out_features,
                                    is_first=is_first, omega_0=omega_0)

    out = sine_layer(x, w_t, b, omega_0=omega_0)
    out = jax.block_until_ready(out)

    # Reference: the PyTorch module's forward, in plain JAX.
    ref = jnp.sin(omega_0 * (x @ w_t + b))
    assert out.shape == (N, out_features)
    assert jnp.allclose(out, ref, atol=1e-4, rtol=1e-4), float(
        jnp.max(jnp.abs(out - ref)))

    print("KERNEL_OK")
</pallas_src>

<mosaic_0001>
module attributes {stable_mosaic.version = 11 : i64} {
  func.func @_sine_kernel(%arg0: i32, %arg1: memref<104x16xf32, #tpu.memory_space<vmem>>, %arg2: memref<16x128xf32, #tpu.memory_space<vmem>>, %arg3: memref<1x128xf32, #tpu.memory_space<vmem>>, %arg4: memref<104x128xf32, #tpu.memory_space<vmem>>) attributes {dimension_semantics = [#tpu.dimension_semantics<parallel>], iteration_bounds = array<i64: 2>, scalar_prefetch = 0 : i64, scratch_operands = 0 : i64, tpu.core_type = #tpu.core_type<tc>, window_params = [{transform_indices = @transform_0, window_bounds = array<i64: 104, 16>}, {pipeline_mode = #tpu.pipeline_mode<synchronous>, transform_indices = @transform_1, window_bounds = array<i64: 16, 128>}, {pipeline_mode = #tpu.pipeline_mode<synchronous>, transform_indices = @transform_2, window_bounds = array<i64: 1, 128>}, {transform_indices = @transform_3, window_bounds = array<i64: 104, 128>}]} {
    %c0 = arith.constant 0 : index
    %c0_0 = arith.constant 0 : index
    %0 = vector.load %arg1[%c0, %c0_0] : memref<104x16xf32, #tpu.memory_space<vmem>>, vector<104x16xf32>
    %c0_1 = arith.constant 0 : index
    %c0_2 = arith.constant 0 : index
    %1 = vector.load %arg2[%c0_1, %c0_2] : memref<16x128xf32, #tpu.memory_space<vmem>>, vector<16x128xf32>
    %c0_3 = arith.constant 0 : index
    %c0_4 = arith.constant 0 : index
    %2 = vector.load %arg3[%c0_3, %c0_4] : memref<1x128xf32, #tpu.memory_space<vmem>>, vector<1x128xf32>
    %cst = arith.constant dense<0.000000e+00> : vector<104x128xf32>
    %3 = tpu.matmul %0, %1, %cst {dimension_numbers = #tpu.dot_dimension_numbers<[1], [0], [0], [1], [0, 0, 1, 1], [], []>} : vector<104x16xf32>, vector<16x128xf32>, vector<104x128xf32> -> vector<104x128xf32>
    %4 = vector.broadcast %2 : vector<1x128xf32> to vector<104x128xf32>
    %5 = arith.addf %3, %4 : vector<104x128xf32>
    %6 = math.sin %5 : vector<104x128xf32>
    %c0_5 = arith.constant 0 : index
    %c0_6 = arith.constant 0 : index
    %7 = vector.load %arg4[%c0_5, %c0_6] : memref<104x128xf32, #tpu.memory_space<vmem>>, vector<104x128xf32>
    tpu.vector_store %arg4[%c0_5, %c0_6], %6 {strides = array<i32>} : memref<104x128xf32, #tpu.memory_space<vmem>>, vector<104x128xf32>,
    return
  }
  func.func @transform_0(%arg0: i32) -> (i32, i32) {
    %c0_i32 = arith.constant 0 : i32
    %c0_i32_0 = arith.constant 0 : i32
    return %arg0, %c0_i32 : i32, i32
  }
  func.func @transform_1(%arg0: i32) -> (i32, i32) {
    %c0_i32 = arith.constant 0 : i32
    %c0_i32_0 = arith.constant 0 : i32
    %c0_i32_1 = arith.constant 0 : i32
    return %c0_i32, %c0_i32_0 : i32, i32
  }
  func.func @transform_2(%arg0: i32) -> (i32, i32) {
    %c0_i32 = arith.constant 0 : i32
    %c0_i32_0 = arith.constant 0 : i32
    %c0_i32_1 = arith.constant 0 : i32
    return %c0_i32, %c0_i32_0 : i32, i32
  }
  func.func @transform_3(%arg0: i32) -> (i32, i32) {
    %c0_i32 = arith.constant 0 : i32
    %c0_i32_0 = arith.constant 0 : i32
    return %arg0, %c0_i32 : i32, i32
  }
}

module attributes {stable_mosaic.version = 11 : i64} {
  func.func @_sine_kernel(%arg0: i32, %arg1: memref<104x16xf32, #tpu.memory_space<vmem>>, %arg2: memref<16x128xf32, #tpu.memory_space<vmem>>, %arg3: memref<1x128xf32, #tpu.memory_space<vmem>>, %arg4: memref<104x128xf32, #tpu.memory_space<vmem>>) attributes {dimension_semantics = [#tpu.dimension_semantics<parallel>], iteration_bounds = array<i64: 2>, scalar_prefetch = 0 : i64, scratch_operands = 0 : i64, tpu.core_type = #tpu.core_type<tc>, window_params = [{transform_indices = @transform_0, window_bounds = array<i64: 104, 16>}, {pipeline_mode = #tpu.pipeline_mode<synchronous>, transform_indices = @transform_1, window_bounds = array<i64: 16, 128>}, {pipeline_mode = #tpu.pipeline_mode<synchronous>, transform_indices = @transform_2, window_bounds = array<i64: 1, 128>}, {transform_indices = @transform_3, window_bounds = array<i64: 104, 128>}]} {
    %c0 = arith.constant 0 : index
    %c0_0 = arith.constant 0 : index
    %0 = vector.load %arg1[%c0, %c0_0] : memref<104x16xf32, #tpu.memory_space<vmem>>, vector<104x16xf32>
    %c0_1 = arith.constant 0 : index
    %c0_2 = arith.constant 0 : index
    %1 = vector.load %arg2[%c0_1, %c0_2] : memref<16x128xf32, #tpu.memory_space<vmem>>, vector<16x128xf32>
    %c0_3 = arith.constant 0 : index
    %c0_4 = arith.constant 0 : index
    %2 = vector.load %arg3[%c0_3, %c0_4] : memref<1x128xf32, #tpu.memory_space<vmem>>, vector<1x128xf32>
    %cst = arith.constant dense<0.000000e+00> : vector<104x128xf32>
    %3 = tpu.matmul %0, %1, %cst {dimension_numbers = #tpu.dot_dimension_numbers<[1], [0], [0], [1], [0, 0, 1, 1], [], []>} : vector<104x16xf32>, vector<16x128xf32>, vector<104x128xf32> -> vector<104x128xf32>
    %4 = vector.broadcast %2 : vector<1x128xf32> to vector<104x128xf32>
    %5 = arith.addf %3, %4 : vector<104x128xf32>
    %6 = math.sin %5 : vector<104x128xf32>
    %c0_5 = arith.constant 0 : index
    %c0_6 = arith.constant 0 : index
    %7 = vector.load %arg4[%c0_5, %c0_6] : memref<104x128xf32, #tpu.memory_space<vmem>>, vector<104x128xf32>
    tpu.vector_store %arg4[%c0_5, %c0_6], %6 {strides = array<i32>} : memref<104x128xf32, #tpu.memory_space<vmem>>, vector<104x128xf32>,
    return
  }
  func.func @transform_0(%arg0: i32) -> (i32, i32) {
    %c0_i32 = arith.constant 0 : i32
    %c0_i32_0 = arith.constant 0 : i32
    return %arg0, %c0_i32 : i32, i32
  }
  func.func @transform_1(%arg0: i32) -> (i32, i32) {
    %c0_i32 = arith.constant 0 : i32
    %c0_i32_0 = arith.constant 0 : i32
    %c0_i32_1 = arith.constant 0 : i32
    return %c0_i32, %c0_i32_0 : i32, i32
  }
  func.func @transform_2(%arg0: i32) -> (i32, i32) {
    %c0_i32 = arith.constant 0 : i32
    %c0_i32_0 = arith.constant 0 : i32
    %c0_i32_1 = arith.constant 0 : i32
    return %c0_i32, %c0_i32_0 : i32, i32
  }
  func.func @transform_3(%arg0: i32) -> (i32, i32) {
    %c0_i32 = arith.constant 0 : i32
    %c0_i32_0 = arith.constant 0 : i32
    return %arg0, %c0_i32 : i32, i32
  }
}

</mosaic_0001>

<llo_original>
// kernel: tpu_custom_call.1
$region0: #{tpu_custom_call.1}
  #allocation0 [shape = 'u32[]', space=smem, size = 0x4, offset = 0x4, fixed_abs, tag = 'smem constant byte address 0x4 - core index']
  #allocation1 [shape = 'u32[144,128]{1,0:T(1,128)}', space=vmem, size = 0x12000, scoped, tag = 'internal scratch']
  %s0 = inlined_call_operand.vmem [shape: f32[200,16], index: 0, kind: input, shape index: {}]
  %s1 = inlined_call_operand.vmem [shape: f32[16,128], index: 1, kind: input, shape index: {}]
  %s2 = inlined_call_operand.vmem [shape: f32[1,128], index: 2, kind: input, shape index: {}]
  %s3 = inlined_call_operand.hbm [shape: f32[200,128], index: 3, kind: output, shape index: {}]
  %s4 = sld [smem:[#allocation0]]
  $region45: #{tpu_custom_call.1} parent=0
    _
  %s6 = ssub.s32 1, %s4
  %s7 = scalar_select 0, %s6, %s4
  $region1: #{tpu_custom_call.1} parent=0
    #allocation2 [shape = 'u8[106496]{0}', space=vmem, size = 0x1a000, scoped, tag = 'output window, operand 0']
    #allocation3 [shape = 's32[2]{0}', space=sflag, size = 0x8, scoped, tag = 'scoped memory for tpu_custom_call.1']
    %8 = vsyncpa [#allocation3], 0
    %s9 = scalar_lea.sflag [#allocation3], 1
    %10 = vsyncpa %s9, 0
    loop: start=0, step=1, limit=4
    $region2: #{tpu_custom_call.1} parent=1 // loop_pre_header
      _
    $region3: #{tpu_custom_call.1} parent=1 // loop_header
      %s12 = sphi 0, %s16
      %p13 = scmp.ge.s32.totalorder %s12, 4
      %s22 = sphi 0, %s24
      %s25 = sphi 0, %s22
      %s26 = sphi 0, %s25
      %s42 = sphi 0, %s26
      %s46 = sphi 0, %s46
      %s48 = sphi 0, %s46
      %s49 = sphi 0, %s48
      %s63 = sphi 0, %s49
      %s67 = sphi 0, %s67
      %s69 = sphi 0, %s67
      %s70 = sphi 0, %s69
      %s84 = sphi 0, %s70
      %s90 = sphi 0, %s92
      %s93 = sphi 0, %s90
      %s94 = sphi 0, %s93
      %s110 = sphi 0, %s94
    $region4: #{tpu_custom_call.1} parent=1 // loop_header_branch
      %15 = sbr.rel (%p13) target = $region8
    $region5: #{tpu_custom_call.1} parent=1 // loop_body
      %s17 = ssub.s32 %s12, 1
      %s18 = ssub.s32 %s12, 2
      %s19 = sadd.s32 %s12, 1
      %s20 = ssub.s32 %s12, %s19
      %p21 = scmp.eq.s32.totalorder %s20, 0
      %s23 = sadd.s32 %s22, 1
      %s24 = scalar_select %p21, %s22, %s23
      %p27 = pneg %p21
      %p28 = scmp.eq.s32.totalorder %s12, 1
      %p29 = por %p27, %p28
      %p30 = scmp.ne.s32.totalorder %s22, %s25
      %p31 = scmp.eq.s32.totalorder %s12, 0
      %p32 = por %p30, %p31
      %p33 = scmp.ne.s32.totalorder %s22, %s25
      %p34 = scmp.eq.s32.totalorder %s17, 1
      %p35 = por %p33, %p34
      %p36 = scmp.ne.s32.totalorder %s25, %s26
      %p37 = scmp.eq.s32.totalorder %s17, 0
      %p38 = por %p36, %p37
      %p39 = scmp.ne.s32.totalorder %s25, %s26
      %p40 = scmp.eq.s32.totalorder %s18, 1
      %p41 = por %p39, %p40
      %p43 = scmp.ne.s32.totalorder %s26, %s42
      %p44 = scmp.eq.s32.totalorder %s18, 0
      %p45 = por %p43, %p44
      %s47 = sadd.s32 %s46, 1
      %p50 = scmp.eq.s32.totalorder %s12, 1
      %p51 = scmp.ne.s32.totalorder %s46, %s48
      %p52 = scmp.eq.s32.totalorder %s12, 0
      %p53 = por %p51, %p52
      %p54 = scmp.ne.s32.totalorder %s46, %s48
      %p55 = scmp.eq.s32.totalorder %s17, 1
      %p56 = por %p54, %p55
      %p57 = scmp.ne.s32.totalorder %s48, %s49
      %p58 = scmp.eq.s32.totalorder %s17, 0
      %p59 = por %p57, %p58
      %p60 = scmp.ne.s32.totalorder %s48, %s49
      %p61 = scmp.eq.s32.totalorder %s18, 1
      %p62 = por %p60, %p61
      %p64 = scmp.ne.s32.totalorder %s49, %s63
      %p65 = scmp.eq.s32.totalorder %s18, 0
      %p66 = por %p64, %p65
      %s68 = sadd.s32 %s67, 1
      %p71 = scmp.eq.s32.totalorder %s12, 1
      %p72 = scmp.ne.s32.totalorder %s67, %s69
      %p73 = scmp.eq.s32.totalorder %s12, 0
      %p74 = por %p72, %p73
      %p75 = scmp.ne.s32.totalorder %s67, %s69
      %p76 = scmp.eq.s32.totalorder %s17, 1
      %p77 = por %p75, %p76
      %p78 = scmp.ne.s32.totalorder %s69, %s70
      %p79 = scmp.eq.s32.totalorder %s17, 0
      %p80 = por %p78, %p79
      %p81 = scmp.ne.s32.totalorder %s69, %s70
      %p82 = scmp.eq.s32.totalorder %s18, 1
      %p83 = por %p81, %p82
      %p85 = scmp.ne.s32.totalorder %s70, %s84
      %p86 = scmp.eq.s32.totalorder %s18, 0
      %p87 = por %p85, %p86
      %s88 = ssub.s32 %s12, %s19
      %p89 = scmp.eq.s32.totalorder %s88, 0
      %s91 = sadd.s32 %s90, 1
      %s92 = scalar_select %p89, %s90, %s91
      %p95 = pneg %p89
      %p96 = scmp.eq.s32.totalorder %s12, 1
      %p97 = por %p95, %p96
      %p98 = scmp.ne.s32.totalorder %s90, %s93
      %p99 = scmp.eq.s32.totalorder %s12, 0
      %p100 = por %p98, %p99
      %p101 = scmp.ne.s32.totalorder %s90, %s93
      %p102 = scmp.eq.s32.totalorder %s17, 1
      %p103 = por %p101, %p102
      %p104 = scmp.ne.s32.totalorder %s93, %s94
      %p105 = scmp.eq.s32.totalorder %s17, 0
      %p106 = por %p104, %p105
      %p107 = scmp.ne.s32.totalorder %s93, %s94
      %p108 = scmp.eq.s32.totalorder %s18, 1
      %p109 = por %p107, %p108
      %p111 = scmp.ne.s32.totalorder %s94, %s110
      %p112 = scmp.eq.s32.totalorder %s18, 0
      %p113 = por %p111, %p112
      %p114 = scmp.le.s32.totalorder 1, %s12
      %p115 = scmp.lt.s32.totalorder %s12, 3
      %p116 = pnand %p114, %p115
      %p117 = pneg %p116
      // Predicated region
      $region9: #{tpu_custom_call.1} parent=5 // pred_check
        _
      $region10: #{tpu_custom_call.1} parent=5 // pred_check_branch
        %119 = sbr.rel (%p116) target = $region12
      $region11: #{tpu_custom_call.1} parent=5 // pred_region
        %s120 = ssub.s32 %s12, 1
        // Predicated region
        $region13: #{tpu_custom_call.1} parent=11 // pred_check
          %p121 = pneg %p59
        $region14: #{tpu_custom_call.1} parent=11 // pred_check_branch
          %123 = sbr.rel (%p121) target = $region16
        $region15: #{tpu_custom_call.1} parent=11 // pred_region
          _
        $region16: #{tpu_custom_call.1} parent=11 // pred_fallthru
          _
        // Predicated region
        $region17: #{tpu_custom_call.1} parent=11 // pred_check
          %p124 = pneg %p80
        $region18: #{tpu_custom_call.1} parent=11 // pred_check_branch
          %126 = sbr.rel (%p124) target = $region20
        $region19: #{tpu_custom_call.1} parent=11 // pred_region
          _
        $region20: #{tpu_custom_call.1} parent=11 // pred_fallthru
          _
      $region12: #{tpu_custom_call.1} parent=5 // pred_fallthru
        _
      %p127 = scmp.lt.s32.totalorder %s12, 2
      // Predicated region
      $region21: #{tpu_custom_call.1} parent=5 // pred_check
        %p128 = pneg %p127
      $region22: #{tpu_custom_call.1} parent=5 // pred_check_branch
        %130 = sbr.rel (%p128) target = $region24
      $region23: #{tpu_custom_call.1} parent=5 // pred_region
        // Predicated region
        $region25: #{tpu_custom_call.1} parent=23 // pred_check
          %p131 = pneg %p32
        $region26: #{tpu_custom_call.1} parent=23 // pred_check_branch
          %133 = sbr.rel (%p131) target = $region28
        $region27: #{tpu_custom_call.1} parent=23 // pred_region
          %s134 = smul.u32 13, %s12
          %s135 = ssub.s32 25, %s134
          %p136 = scmp.lt.s32.totalorder %s135, 13
          %s137 = scalar_select %p136, %s135, 13
          %s138 = smul.u32 128, %s137
          %p139 = scmp.lt.s32.totalorder %s134, 24
          %s140 = scalar_select %p139, %s134, 24
          %s141 = smul.addr %s140, 8
          %s142 = scalar_lea.vmem %s0, %s141
          %s143 = smul.u32 13, %s12
          %s144 = ssub.s32 25, %s143
          %p145 = scmp.lt.s32.totalorder %s144, 13
          %s146 = scalar_select %p145, %s144, 13
          %s147 = smul.u32 128, %s146
        $region28: #{tpu_custom_call.1} parent=23 // pred_fallthru
          _
      $region24: #{tpu_custom_call.1} parent=5 // pred_fallthru
        _
      %p148 = scmp.le.s32.totalorder 1, %s12
      %p149 = scmp.lt.s32.totalorder %s12, 3
      %p150 = pnand %p148, %p149
      %p151 = pneg %p150
      // Predicated region
      $region29: #{tpu_custom_call.1} parent=5 // pred_check
        _
      $region30: #{tpu_custom_call.1} parent=5 // pred_check_branch
        %153 = sbr.rel (%p150) target = $region32
      $region31: #{tpu_custom_call.1} parent=5 // pred_region
        %s154 = ssub.s32 %s12, 1
        %s155 = smul.u32 13, %s17
        %s156 = ssub.s32 25, %s155
        %p157 = scmp.lt.s32.totalorder %s156, 13
        %s158 = scalar_select %p157, %s156, 13
        %s159 = smul.u32 128, %s158
        %p160 = scmp.lt.s32.totalorder %s155, 24
        %s161 = scalar_select %p160, %s155, 24
        %s162 = smul.addr %s161, 8
        %s163 = scalar_lea.vmem %s0, %s162
        %p164 = pneg %p38
        %p165 = pneg %p35
        %p166 = pneg %p59
        %p167 = pneg %p56
        %p168 = pneg %p80
        %p169 = pneg %p77
        %p170 = pneg %p106
        %p171 = pneg %p103
        %s172 = sand.u32 %s93, 1
        %s173 = scalar_lea.sflag [#allocation3], %s172
        %s174 = sand.u32 %s93, 1
        %s175 = smul.addr %s174, 104
        %s176 = scalar_lea.vmem [#allocation2], %s175
        %s177 = smul.u32 13, %s17
        %s178 = ssub.s32 25, %s177
        %p179 = scmp.lt.s32.totalorder %s178, 13
        %s180 = scalar_select %p179, %s178, 13
        %s181 = smul.u32 128, %s180
        %p182 = scmp.lt.s32.totalorder %s177, 24
        %s183 = scalar_select %p182, %s177, 24
        %s184 = smul.addr %s183, 8
        %s185 = scalar_lea.vmem %s0, %s184
        %s186 = smul.u32 13, %s17
        %s187 = ssub.s32 25, %s186
        %p188 = scmp.lt.s32.totalorder %s187, 13
        %s189 = scalar_select %p188, %s187, 13
        %s190 = smul.u32 128, %s189
        %s191 = smul.u32 13, %s17
        %s192 = ssub.s32 25, %s191
        %p193 = scmp.lt.s32.totalorder %s192, 13
        %s194 = scalar_select %p193, %s192, 13
        %s195 = smul.u32 128, %s194
        %v196 = vld [vmem:[%s185] sm:$0xff]
        %v197 = vld [vmem:[%s185 + $0x8] sm:$0xff]
        %v198 = vld [vmem:[%s185 + $0x10] sm:$0xff]
        %v199 = vld [vmem:[%s185 + $0x18] sm:$0xff]
        %v200 = vld [vmem:[%s185 + $0x20] sm:$0xff]
        %v201 = vld [vmem:[%s185 + $0x28] sm:$0xff]
        %v202 = vld [vmem:[%s185 + $0x30] sm:$0xff]
        %v203 = vld [vmem:[%s185 + $0x38] sm:$0xff]
        %v204 = vld [vmem:[%s185 + $0x40] sm:$0xff]
        %v205 = vld [vmem:[%s185 + $0x48] sm:$0xff]
        %v206 = vld [vmem:[%s185 + $0x50] sm:$0xff]
        %v207 = vld [vmem:[%s185 + $0x58] sm:$0xff]
        %v208 = vld [vmem:[%s185 + $0x60] sm:$0xff]
        %v209 = vld [vmem:[%s1] sm:$0xff]
        %v210 = vld [vmem:[%s1 + $0x8] sm:$0xff]
        %v211 = vld [vmem:[%s2] sm:$0x1]
        %v213 = vlaneseq
        %v214 = vshrl.u32 %v213, 7
        %v215 = vsub.s32 0, %v214
        %v216 = vrot.slane %v211, %v215
        %vm218 = vcmask 130048
        %v220 = vsel %vm218, %v196, 0
        %v223 = vsel %vm218, %v197, 0
        %v226 = vsel %vm218, %v198, 0
        %v229 = vsel %vm218, %v199, 0
        %v232 = vsel %vm218, %v200, 0
        %v235 = vsel %vm218, %v201, 0
        %v238 = vsel %vm218, %v202, 0
        %v241 = vsel %vm218, %v203, 0
        %v244 = vsel %vm218, %v204, 0
        %v247 = vsel %vm218, %v205, 0
        %v250 = vsel %vm218, %v206, 0
        %v253 = vsel %vm218, %v207, 0
        %v256 = vsel %vm218, %v208, 0
        %258 = vmatprep.subr.mxu0 0.0
        %259 = vmatpush1.msra.mxu0 %v209
        %260 = vmatprep.subr.mxu0 0.0
        %261 = vmatpush1.msra.mxu0 %v210
        %262 = vmatprep.subr.mxu0 0.0
        %263 = vmatpush1.msra.mxu0 0.0
        %264 = vmatprep.subr.mxu0 0.0
        %265 = vmatpush1.msra.mxu0 0.0
        %266 = vmatprep.subr.mxu0 0.0
        %267 = vmatpush1.msra.mxu0 0.0
        %268 = vmatprep.subr.mxu0 0.0
        %269 = vmatpush1.msra.mxu0 0.0
        %270 = vmatprep.subr.mxu0 0.0
        %271 = vmatpush1.msra.mxu0 0.0
        %272 = vmatprep.subr.mxu0 0.0
        %273 = vmatpush1.msra.mxu0 0.0
        %274 = vmatprep.subr.mxu0 0.0
        %275 = vmatpush1.msra.mxu0 0.0
        %276 = vmatprep.subr.mxu0 0.0
        %277 = vmatpush1.msra.mxu0 0.0
        %278 = vmatprep.subr.mxu0 0.0
        %279 = vmatpush1.msra.mxu0 0.0
        %280 = vmatprep.subr.mxu0 0.0
        %281 = vmatpush1.msra.mxu0 0.0
        %282 = vmatprep.subr.mxu0 0.0
        %283 = vmatpush1.msra.mxu0 0.0
        %284 = vmatprep.subr.mxu0 0.0
        %285 = vmatpush1.msra.mxu0 0.0
        %286 = vmatprep.subr.mxu0 0.0
        %287 = vmatpush1.msra.mxu0 0.0
        %288 = vmatprep.subr.mxu0 0.0
        %289 = vmatpush1.msra.mxu0 0.0
        %290 = vmatprep.subr.mxu0 0.0
        %291 = vmatpush1.msra.mxu0 0.0
        %292 = vmatprep.subr.mxu0 0.0
        %293 = vmatpush1.msra.mxu0 0.0
        %294 = vmatprep.subr.mxu0 0.0
        %295 = vmatpush1.msra.mxu0 0.0
        %296 = vmatprep.subr.mxu0 0.0
        %297 = vmatpush1.msra.mxu0 0.0
        %298 = vmatprep.subr.mxu0 0.0
        %299 = vmatpush1.msra.mxu0 0.0
        %300 = vmatprep.subr.mxu0 0.0
        %301 = vmatpush1.msra.mxu0 0.0
        %302 = vmatprep.subr.mxu0 0.0
        %303 = vmatpush1.msra.mxu0 0.0
        %304 = vmatprep.subr.mxu0 0.0
        %305 = vmatpush1.msra.mxu0 0.0
        %306 = vmatprep.subr.mxu0 0.0
        %307 = vmatpush1.msra.mxu0 0.0
        %308 = vmatprep.subr.mxu0 0.0
        %309 = vmatpush1.msra.mxu0 0.0
        %310 = vmatprep.subr.mxu0 0.0
        %311 = vmatpush1.msra.mxu0 0.0
        %312 = vmatprep.subr.mxu0 0.0
        %313 = vmatpush1.msra.mxu0 0.0
        %314 = vmatprep.subr.mxu0 0.0
        %315 = vmatpush1.msra.mxu0 0.0
        %316 = vmatprep.subr.mxu0 0.0
        %317 = vmatpush1.msra.mxu0 0.0
        %318 = vmatprep.subr.mxu0 0.0
        %319 = vmatpush1.msra.mxu0 0.0
        %320 = vmatprep.subr.mxu0 0.0
        %321 = vmatpush1.msra.mxu0 0.0
        %322 = vmatprep.mubr.f32.mxu0 0.0
        %323 = vmatmul.mubr.f32.gmra.mrb[0].mxu0 %v220
        %v324 = vpop.f32.mrb[0].mxu0
        %v325 = vadd.f32 %v216, %v324
        %v326 = vpop.f32.mrb[0].mxu0
        %327 = vmatprep.mubr.f32.mxu0 0.0
        %328 = vmatmul.mubr.f32.gmra.mrb[0].mxu0 %v223
        %v329 = vpop.f32.mrb[0].mxu0
        %v330 = vadd.f32 %v216, %v329
        %v331 = vpop.f32.mrb[0].mxu0
        %332 = vmatprep.mubr.f32.mxu0 0.0
        %333 = vmatmul.mubr.f32.gmra.mrb[0].mxu0 %v226
        %v334 = vpop.f32.mrb[0].mxu0
        %v335 = vadd.f32 %v216, %v334
        %v336 = vpop.f32.mrb[0].mxu0
        %337 = vmatprep.mubr.f32.mxu0 0.0
        %338 = vmatmul.mubr.f32.gmra.mrb[0].mxu0 %v229
        %v339 = vpop.f32.mrb[0].mxu0
        %v340 = vadd.f32 %v216, %v339
        %v341 = vpop.f32.mrb[0].mxu0
        %342 = vmatprep.mubr.f32.mxu0 0.0
        %343 = vmatmul.mubr.f32.gmra.mrb[0].mxu0 %v232
        %v344 = vpop.f32.mrb[0].mxu0
        %v345 = vadd.f32 %v216, %v344
        %v346 = vpop.f32.mrb[0].mxu0
        %347 = vmatprep.mubr.f32.mxu0 0.0
        %348 = vmatmul.mubr.f32.gmra.mrb[0].mxu0 %v235
        %v349 = vpop.f32.mrb[0].mxu0
        %v350 = vadd.f32 %v216, %v349
        %v351 = vpop.f32.mrb[0].mxu0
        %352 = vmatprep.mubr.f32.mxu0 0.0
        %353 = vmatmul.mubr.f32.gmra.mrb[0].mxu0 %v238
        %v354 = vpop.f32.mrb[0].mxu0
        %v355 = vadd.f32 %v216, %v354
        %v356 = vpop.f32.mrb[0].mxu0
        %357 = vmatprep.mubr.f32.mxu0 0.0
        %358 = vmatmul.mubr.f32.gmra.mrb[0].mxu0 %v241
        %v359 = vpop.f32.mrb[0].mxu0
        %v360 = vadd.f32 %v216, %v359
        %v361 = vpop.f32.mrb[0].mxu0
        %362 = vmatprep.mubr.f32.mxu0 0.0
        %363 = vmatmul.mubr.f32.gmra.mrb[0].mxu0 %v244
        %v364 = vpop.f32.mrb[0].mxu0
        %v365 = vadd.f32 %v216, %v364
        %v366 = vpop.f32.mrb[0].mxu0
        %367 = vmatprep.mubr.f32.mxu0 0.0
        %368 = vmatmul.mubr.f32.gmra.mrb[0].mxu0 %v247
        %v369 = vpop.f32.mrb[0].mxu0
        %v370 = vadd.f32 %v216, %v369
        %v371 = vpop.f32.mrb[0].mxu0
        %372 = vmatprep.mubr.f32.mxu0 0.0
        %373 = vmatmul.mubr.f32.gmra.mrb[0].mxu0 %v250
        %v374 = vpop.f32.mrb[0].mxu0
        %v375 = vadd.f32 %v216, %v374
        %v376 = vpop.f32.mrb[0].mxu0
        %377 = vmatprep.mubr.f32.mxu0 0.0
        %378 = vmatmul.mubr.f32.gmra.mrb[0].mxu0 %v253
        %v379 = vpop.f32.mrb[0].mxu0
        %v380 = vadd.f32 %v216, %v379
        %v381 = vpop.f32.mrb[0].mxu0
        %382 = vmatprep.mubr.f32.mxu0 0.0
        %383 = vmatmul.mubr.f32.gmra.mrb[0].mxu0 %v256
        %v384 = vpop.f32.mrb[0].mxu0
        %v385 = vadd.f32 %v216, %v384
        %v386 = vpop.f32.mrb[0].mxu0
        %387 = vdwg.mxu0
        %v388 = vand.u32 2147483647, %v325
        %vm389 = vcmp.le.f32.partialorder %v388, 0.7853982
        %vm390 = vcmp.lt.s32.totalorder %v325, 0
        %v391 = vand.u32 %v325, 2139095040
        %v392 = vshrl.u32 %v391, 23
        %v393 = vsub.s32 %v392, 127
        %v394 = vand.u32 2147483647, %v325
        %v395 = vand.u32 %v394, 8388607
        %v396 = vor.u32 %v395, 8388608
        %v397 = vsub.s32 0, %v396
        %v398 = vadd.s32 %v393, 1
        %vm399 = vcmp.gt.s32.totalorder %v398, 0
        %v400 = vsel %vm399, %v398, 0
        %v401 = vshrl.u32 %v400, 5
        %v402 = vand.u32 %v400, 31
        %v403 = vsub.s32 32, %v402
        %v404 = vshrl.u32 683565275, %v403
        %v405 = vshll.u32 683565275, %v402
        %v406 = vshrl.u32 2475754826, %v403
        %v407 = vor.u32 %v405, %v406
        %v408 = vshll.u32 2475754826, %v402
        %v409 = vshrl.u32 2131351028, %v403
        %v410 = vor.u32 %v408, %v409
        %v411 = vshll.u32 2131351028, %v402
        %v412 = vshrl.u32 2102212464, %v403
        %v413 = vor.u32 %v411, %v412
        %v414 = vshll.u32 2102212464, %v402
        %v415 = vshrl.u32 920167782, %v403
        %v416 = vor.u32 %v414, %v415
        %v417 = vshll.u32 920167782, %v402
        %v418 = vshrl.u32 1326507024, %v403
        %v419 = vor.u32 %v417, %v418
        %vm420 = vcmp.lt.s32.totalorder %v401, 1
        %vm421 = vcmp.lt.s32.totalorder %v401, 2
        %vm422 = vcmp.lt.s32.totalorder %v401, 3
        %vm423 = vcmp.lt.s32.totalorder %v401, 4
        %v424 = vsel %vm420, %v404, %v407
        %v425 = vsel %vm423, %v413, 2102212464
        %v426 = vsel %vm422, %v410, %v425
        %v427 = vsel %vm421, %v424, %v426
        %v428 = vsel %vm420, %v407, %v410
        %v429 = vsel %vm423, %v416, 920167782
        %v430 = vsel %vm422, %v413, %v429
        %v431 = vsel %vm421, %v428, %v430
        %v432 = vsel %vm420, %v410, %v413
        %v433 = vsel %vm423, %v419, 1326507024
        %v434 = vsel %vm422, %v416, %v433
        %v435 = vsel %vm421, %v432, %v434
        %v436 = vshll.u32 %v396, 8
        %v437 = vmul.u32.u64.compose %v436, %v435
        %v438 = vextract.low.u32 %v437
        %v439 = vextract.high.u32 %v437
        %v440 = vmul.u32.u64.compose %v436, %v431
        %v441 = vextract.low.u32 %v440
        %v442 = vextract.high.u32 %v440
        %v443 = vmul.u32 %v436, %v427
        %v444 = vadd.s32 %v439, %v441
        %vm445 = vc.u32 %v439, %v441
        %v446 = vadd.s32 %v442, 1
        %v447 = vsel %vm445, %v446, %v442
        %v448 = vadd.s32 %v443, %v447
        %v449 = vadd.s32 %v448, 536870912
        %v450 = vshrl.u32 %v449, 30
        %v451 = vshll.u32 %v450, 30
        %v452 = vsub.s32 %v448, %v451
        %vm453 = vcmp.lt.s32.totalorder %v452, 0
        %v454 = vsub.s32 0, %v452
        %v455 = vsel %vm453, %v454, %v452
        %v456 = vclz %v455
        %v457 = vsub.s32 %v456, 2
        %vm458 = vcmp.gt.s32.totalorder 0, %v457
        %v459 = vsel %vm458, 0, %v457
        %v460 = vsub.s32 32, %v459
        %v461 = vshll.u32 %v452, %v459
        %v462 = vshrl.u32 %v444, %v460
        %v463 = vor.u32 %v461, %v462
        %v464 = vsub.s32 4294967266, %v459
        %v465 = vadd.s32 %v464, 127
        %v466 = vshll.u32 %v465, 23
        %v467 = vor.u32 4788187, %v466
        %v468 = vand.u32 2147483647, %v467
        %v470 = vcvt.s32.f32 %v463
        %v471 = vmul.f32 %v470, %v468
        %v472 = vxor.u32 %v471, 2147483648
        %v473 = vsel %vm390, %v472, %v471
        %v474 = vsub.s32 4, %v450
        %v475 = vsel %vm390, %v474, %v450
        %v476 = vsel %vm389, %v325, %v473
        %v477 = vsel %vm389, 0, %v475
        %v478 = vcosq.f32.pop %v476
        %v479 = vsinq.f32.pop %v476
        %vm480 = vweird.f32 %v325
        %v481 = vadd.s32 %v477, 3
        %v482 = vand.u32 %v481, 3
        %vm483 = vcmp.lt.s32.totalorder %v482, 2
        %vm484 = vcmp.eq.s32.totalorder %v482, 0
        %v485 = vxor.u32 %v479, 2147483648
        %v486 = vsel %vm484, %v478, %v485
        %vm487 = vcmp.eq.s32.totalorder %v482, 2
        %v488 = vxor.u32 %v478, 2147483648
        %v489 = vsel %vm487, %v488, %v479
        %v490 = vsel %vm483, %v486, %v489
        %v491 = vsel %vm480, nan, %v490
        %v492 = vand.u32 2147483647, %v330
        %vm493 = vcmp.le.f32.partialorder %v492, 0.7853982
        %vm494 = vcmp.lt.s32.totalorder %v330, 0
        %v495 = vand.u32 %v330, 2139095040
        %v496 = vshrl.u32 %v495, 23
        %v497 = vsub.s32 %v496, 127
        %v498 = vand.u32 2147483647, %v330
        %v499 = vand.u32 %v498, 8388607
        %v500 = vor.u32 %v499, 8388608
        %v501 = vsub.s32 0, %v500
        %v502 = vadd.s32 %v497, 1
        %vm503 = vcmp.gt.s32.totalorder %v502, 0
        %v504 = vsel %vm503, %v502, 0
        %v505 = vshrl.u32 %v504, 5
        %v506 = vand.u32 %v504, 31
        %v507 = vsub.s32 32, %v506
        %v508 = vshrl.u32 683565275, %v507
        %v509 = vshll.u32 683565275, %v506
        %v510 = vshrl.u32 2475754826, %v507
        %v511 = vor.u32 %v509, %v510
        %v512 = vshll.u32 2475754826, %v506
        %v513 = vshrl.u32 2131351028, %v507
        %v514 = vor.u32 %v512, %v513
        %v515 = vshll.u32 2131351028, %v506
        %v516 = vshrl.u32 2102212464, %v507
        %v517 = vor.u32 %v515, %v516
        %v518 = vshll.u32 2102212464, %v506
        %v519 = vshrl.u32 920167782, %v507
        %v520 = vor.u32 %v518, %v519
        %v521 = vshll.u32 920167782, %v506
        %v522 = vshrl.u32 1326507024, %v507
        %v523 = vor.u32 %v521, %v522
        %vm524 = vcmp.lt.s32.totalorder %v505, 1
        %vm525 = vcmp.lt.s32.totalorder %v505, 2
        %vm526 = vcmp.lt.s32.totalorder %v505, 3
        %vm527 = vcmp.lt.s32.totalorder %v505, 4
        %v528 = vsel %vm524, %v508, %v511
        %v529 = vsel %vm527, %v517, 2102212464
        %v530 = vsel %vm526, %v514, %v529
        %v531 = vsel %vm525, %v528, %v530
        %v532 = vsel %vm524, %v511, %v514
        %v533 = vsel %vm527, %v520, 920167782
        %v534 = vsel %vm526, %v517, %v533
        %v535 = vsel %vm525, %v532, %v534
        %v536 = vsel %vm524, %v514, %v517
        %v537 = vsel %vm527, %v523, 1326507024
        %v538 = vsel %vm526, %v520, %v537
        %v539 = vsel %vm525, %v536, %v538
        %v540 = vshll.u32 %v500, 8
        %v541 = vmul.u32.u64.compose %v540, %v539
        %v542 = vextract.low.u32 %v541
        %v543 = vextract.high.u32 %v541
        %v544 = vmul.u32.u64.compose %v540, %v535
        %v545 = vextract.low.u32 %v544
        %v546 = vextract.high.u32 %v544
        %v547 = vmul.u32 %v540, %v531
        %v548 = vadd.s32 %v543, %v545
        %vm549 = vc.u32 %v543, %v545
        %v550 = vadd.s32 %v546, 1
        %v551 = vsel %vm549, %v550, %v546
        %v552 = vadd.s32 %v547, %v551
        %v553 = vadd.s32 %v552, 536870912
        %v554 = vshrl.u32 %v553, 30
        %v555 = vshll.u32 %v554, 30
        %v556 = vsub.s32 %v552, %v555
        %vm557 = vcmp.lt.s32.totalorder %v556, 0
        %v558 = vsub.s32 0, %v556
        %v559 = vsel %vm557, %v558, %v556
        %v560 = vclz %v559
        %v561 = vsub.s32 %v560, 2
        %vm562 = vcmp.gt.s32.totalorder 0, %v561
        %v563 = vsel %vm562, 0, %v561
        %v564 = vsub.s32 32, %v563
        %v565 = vshll.u32 %v556, %v563
        %v566 = vshrl.u32 %v548, %v564
        %v567 = vor.u32 %v565, %v566
        %v568 = vsub.s32 4294967266, %v563
        %v569 = vadd.s32 %v568, 127
        %v570 = vshll.u32 %v569, 23
        %v571 = vor.u32 4788187, %v570
        %v572 = vand.u32 2147483647, %v571
        %v574 = vcvt.s32.f32 %v567
        %v575 = vmul.f32 %v574, %v572
        %v576 = vxor.u32 %v575, 2147483648
        %v577 = vsel %vm494, %v576, %v575
        %v578 = vsub.s32 4, %v554
        %v579 = vsel %vm494, %v578, %v554
        %v580 = vsel %vm493, %v330, %v577
        %v581 = vsel %vm493, 0, %v579
        %v582 = vcosq.f32.pop %v580
        %v583 = vsinq.f32.pop %v580
        %vm584 = vweird.f32 %v330
        %v585 = vadd.s32 %v581, 3
        %v586 = vand.u32 %v585, 3
        %vm587 = vcmp.lt.s32.totalorder %v586, 2
        %vm588 = vcmp.eq.s32.totalorder %v586, 0
        %v589 = vxor.u32 %v583, 2147483648
        %v590 = vsel %vm588, %v582, %v589
        %vm591 = vcmp.eq.s32.totalorder %v586, 2
        %v592 = vxor.u32 %v582, 2147483648
        %v593 = vsel %vm591, %v592, %v583
        %v594 = vsel %vm587, %v590, %v593
        %v595 = vsel %vm584, nan, %v594
        %v596 = vand.u32 2147483647, %v335
        %vm597 = vcmp.le.f32.partialorder %v596, 0.7853982
        %vm598 = vcmp.lt.s32.totalorder %v335, 0
        %v599 = vand.u32 %v335, 2139095040
        %v600 = vshrl.u32 %v599, 23
        %v601 = vsub.s32 %v600, 127
        %v602 = vand.u32 2147483647, %v335
        %v603 = vand.u32 %v602, 8388607
        %v604 = vor.u32 %v603, 8388608
        %v605 = vsub.s32 0, %v604
        %v606 = vadd.s32 %v601, 1
        %vm607 = vcmp.gt.s32.totalorder %v606, 0
        %v608 = vsel %vm607, %v606, 0
        %v609 = vshrl.u32 %v608, 5
        %v610 = vand.u32 %v608, 31
        %v611 = vsub.s32 32, %v610
        %v612 = vshrl.u32 683565275, %v611
        %v613 = vshll.u32 683565275, %v610
        %v614 = vshrl.u32 2475754826, %v611
        %v615 = vor.u32 %v613, %v614
        %v616 = vshll.u32 2475754826, %v610
        %v617 = vshrl.u32 2131351028, %v611
        %v618 = vor.u32 %v616, %v617
        %v619 = vshll.u32 2131351028, %v610
        %v620 = vshrl.u32 2102212464, %v611
        %v621 = vor.u32 %v619, %v620
        %v622 = vshll.u32 2102212464, %v610
        %v623 = vshrl.u32 920167782, %v611
        %v624 = vor.u32 %v622, %v623
        %v625 = vshll.u32 920167782, %v610
        %v626 = vshrl.u32 1326507024, %v611
        %v627 = vor.u32 %v625, %v626
        %vm628 = vcmp.lt.s32.totalorder %v609, 1
        %vm629 = vcmp.lt.s32.totalorder %v609, 2
        %vm630 = vcmp.lt.s32.totalorder %v609, 3
        %vm631 = vcmp.lt.s32.totalorder %v609, 4
        %v632 = vsel %vm628, %v612, %v615
        %v633 = vsel %vm631, %v621, 2102212464
        %v634 = vsel %vm630, %v618, %v633
        %v635 = vsel %vm629, %v632, %v634
        %v636 = vsel %vm628, %v615, %v618
        %v637 = vsel %vm631, %v624, 920167782
        %v638 = vsel %vm630, %v621, %v637
        %v639 = vsel %vm629, %v636, %v638
        %v640 = vsel %vm628, %v618, %v621
        %v641 = vsel %vm631, %v627, 1326507024
        %v642 = vsel %vm630, %v624, %v641
        %v643 = vsel %vm629, %v640, %v642
        %v644 = vshll.u32 %v604, 8
        %v645 = vmul.u32.u64.compose %v644, %v643
        %v646 = vextract.low.u32 %v645
        %v647 = vextract.high.u32 %v645
        %v648 = vmul.u32.u64.compose %v644, %v639
        %v649 = vextract.low.u32 %v648
        %v650 = vextract.high.u32 %v648
        %v651 = vmul.u32 %v644, %v635
        %v652 = vadd.s32 %v647, %v649
        %vm653 = vc.u32 %v647, %v649
        %v654 = vadd.s32 %v650, 1
        %v655 = vsel %vm653, %v654, %v650
        %v656 = vadd.s32 %v651, %v655
        %v657 = vadd.s32 %v656, 536870912
        %v658 = vshrl.u32 %v657, 30
        %v659 = vshll.u32 %v658, 30
        %v660 = vsub.s32 %v656, %v659
        %vm661 = vcmp.lt.s32.totalorder %v660, 0
        %v662 = vsub.s32 0, %v660
        %v663 = vsel %vm661, %v662, %v660
        %v664 = vclz %v663
        %v665 = vsub.s32 %v664, 2
        %vm666 = vcmp.gt.s32.totalorder 0, %v665
        %v667 = vsel %vm666, 0, %v665
        %v668 = vsub.s32 32, %v667
        %v669 = vshll.u32 %v660, %v667
        %v670 = vshrl.u32 %v652, %v668
        %v671 = vor.u32 %v669, %v670
        %v672 = vsub.s32 4294967266, %v667
        %v673 = vadd.s32 %v672, 127
        %v674 = vshll.u32 %v673, 23
        %v675 = vor.u32 4788187, %v674
        %v676 = vand.u32 2147483647, %v675
        %v678 = vcvt.s32.f32 %v671
        %v679 = vmul.f32 %v678, %v676
        %v680 = vxor.u32 %v679, 2147483648
        %v681 = vsel %vm598, %v680, %v679
        %v682 = vsub.s32 4, %v658
        %v683 = vsel %vm598, %v682, %v658
        %v684 = vsel %vm597, %v335, %v681
        %v685 = vsel %vm597, 0, %v683
        %v686 = vcosq.f32.pop %v684
        %v687 = vsinq.f32.pop %v684
        %vm688 = vweird.f32 %v335
        %v689 = vadd.s32 %v685, 3
        %v690 = vand.u32 %v689, 3
        %vm691 = vcmp.lt.s32.totalorder %v690, 2
        %vm692 = vcmp.eq.s32.totalorder %v690, 0
        %v693 = vxor.u32 %v687, 2147483648
        %v694 = vsel %vm692, %v686, %v693
        %vm695 = vcmp.eq.s32.totalorder %v690, 2
        %v696 = vxor.u32 %v686, 2147483648
        %v697 = vsel %vm695, %v696, %v687
        %v698 = vsel %vm691, %v694, %v697
        %v699 = vsel %vm688, nan, %v698
        %v700 = vand.u32 2147483647, %v340
        %vm701 = vcmp.le.f32.partialorder %v700, 0.7853982
        %vm702 = vcmp.lt.s32.totalorder %v340, 0
        %v703 = vand.u32 %v340, 2139095040
        %v704 = vshrl.u32 %v703, 23
        %v705 = vsub.s32 %v704, 127
        %v706 = vand.u32 2147483647, %v340
        %v707 = vand.u32 %v706, 8388607
        %v708 = vor.u32 %v707, 8388608
        %v709 = vsub.s32 0, %v708
        %v710 = vadd.s32 %v705, 1
        %vm711 = vcmp.gt.s32.totalorder %v710, 0
        %v712 = vsel %vm711, %v710, 0
        %v713 = vshrl.u32 %v712, 5
        %v714 = vand.u32 %v712, 31
        %v715 = vsub.s32 32, %v714
        %v716 = vshrl.u32 683565275, %v715
        %v717 = vshll.u32 683565275, %v714
        %v718 = vshrl.u32 2475754826, %v715
        %v719 = vor.u32 %v717, %v718
        %v720 = vshll.u32 2475754826, %v714
        %v721 = vshrl.u32 2131351028, %v715
        %v722 = vor.u32 %v720, %v721
        %v723 = vshll.u32 2131351028, %v714
        %v724 = vshrl.u32 2102212464, %v715
        %v725 = vor.u32 %v723, %v724
        %v726 = vshll.u32 2102212464, %v714
        %v727 = vshrl.u32 920167782, %v715
        %v728 = vor.u32 %v726, %v727
        %v729 = vshll.u32 920167782, %v714
        %v730 = vshrl.u32 1326507024, %v715
        %v731 = vor.u32 %v729, %v730
        %vm732 = vcmp.lt.s32.totalorder %v713, 1
        %vm733 = vcmp.lt.s32.totalorder %v713, 2
        %vm734 = vcmp.lt.s32.totalorder %v713, 3
        %vm735 = vcmp.lt.s32.totalorder %v713, 4
        %v736 = vsel %vm732, %v716, %v719
        %v737 = vsel %vm735, %v725, 2102212464
        %v738 = vsel %vm734, %v722, %v737
        %v739 = vsel %vm733, %v736, %v738
        %v740 = vsel %vm732, %v719, %v722
        %v741 = vsel %vm735, %v728, 920167782
        %v742 = vsel %vm734, %v725, %v741
        %v743 = vsel %vm733, %v740, %v742
        %v744 = vsel %vm732, %v722, %v725
        %v745 = vsel %vm735, %v731, 1326507024
        %v746 = vsel %vm734, %v728, %v745
        %v747 = vsel %vm733, %v744, %v746
        %v748 = vshll.u32 %v708, 8
        %v749 = vmul.u32.u64.compose %v748, %v747
        %v750 = vextract.low.u32 %v749
        %v751 = vextract.high.u32 %v749
        %v752 = vmul.u32.u64.compose %v748, %v743
        %v753 = vextract.low.u32 %v752
        %v754 = vextract.high.u32 %v752
        %v755 = vmul.u32 %v748, %v739
        %v756 = vadd.s32 %v751, %v753
        %vm757 = vc.u32 %v751, %v753
        %v758 = vadd.s32 %v754, 1
        %v759 = vsel %vm757, %v758, %v754
        %v760 = vadd.s32 %v755, %v759
        %v761 = vadd.s32 %v760, 536870912
        %v762 = vshrl.u32 %v761, 30
        %v763 = vshll.u32 %v762, 30
        %v764 = vsub.s32 %v760, %v763
        %vm765 = vcmp.lt.s32.totalorder %v764, 0
        %v766 = vsub.s32 0, %v764
        %v767 = vsel %vm765, %v766, %v764
        %v768 = vclz %v767
        %v769 = vsub.s32 %v768, 2
        %vm770 = vcmp.gt.s32.totalorder 0, %v769
        %v771 = vsel %vm770, 0, %v769
        %v772 = vsub.s32 32, %v771
        %v773 = vshll.u32 %v764, %v771
        %v774 = vshrl.u32 %v756, %v772
        %v775 = vor.u32 %v773, %v774
        %v776 = vsub.s32 4294967266, %v771
        %v777 = vadd.s32 %v776, 127
        %v778 = vshll.u32 %v777, 23
        %v779 = vor.u32 4788187, %v778
        %v780 = vand.u32 2147483647, %v779
        %v782 = vcvt.s32.f32 %v775
        %v783 = vmul.f32 %v782, %v780
        %v784 = vxor.u32 %v783, 2147483648
        %v785 = vsel %vm702, %v784, %v783
        %v786 = vsub.s32 4, %v762
        %v787 = vsel %vm702, %v786, %v762
        %v788 = vsel %vm701, %v340, %v785
        %v789 = vsel %vm701, 0, %v787
        %v790 = vcosq.f32.pop %v788
        %v791 = vsinq.f32.pop %v788
        %vm792 = vweird.f32 %v340
        %v793 = vadd.s32 %v789, 3
        %v794 = vand.u32 %v793, 3
        %vm795 = vcmp.lt.s32.totalorder %v794, 2
        %vm796 = vcmp.eq.s32.totalorder %v794, 0
        %v797 = vxor.u32 %v791, 2147483648
        %v798 = vsel %vm796, %v790, %v797
        %vm799 = vcmp.eq.s32.totalorder %v794, 2
        %v800 = vxor.u32 %v790, 2147483648
        %v801 = vsel %vm799, %v800, %v791
        %v802 = vsel %vm795, %v798, %v801
        %v803 = vsel %vm792, nan, %v802
        %v804 = vand.u32 2147483647, %v345
        %vm805 = vcmp.le.f32.partialorder %v804, 0.7853982
        %vm806 = vcmp.lt.s32.totalorder %v345, 0
        %v807 = vand.u32 %v345, 2139095040
        %v808 = vshrl.u32 %v807, 23
        %v809 = vsub.s32 %v808, 127
        %v810 = vand.u32 2147483647, %v345
        %v811 = vand.u32 %v810, 8388607
        %v812 = vor.u32 %v811, 8388608
        %v813 = vsub.s32 0, %v812
        %v814 = vadd.s32 %v809, 1
        %vm815 = vcmp.gt.s32.totalorder %v814, 0
        %v816 = vsel %vm815, %v814, 0
        %v817 = vshrl.u32 %v816, 5
        %v818 = vand.u32 %v816, 31
        %v819 = vsub.s32 32, %v818
        %v820 = vshrl.u32 683565275, %v819
        %v821 = vshll.u32 683565275, %v818
        %v822 = vshrl.u32 2475754826, %v819
        %v823 = vor.u32 %v821, %v822
        %v824 = vshll.u32 2475754826, %v818
        %v825 = vshrl.u32 2131351028, %v819
        %v826 = vor.u32 %v824, %v825
        %v827 = vshll.u32 2131351028, %v818
        %v828 = vshrl.u32 2102212464, %v819
        %v829 = vor.u32 %v827, %v828
        %v830 = vshll.u32 2102212464, %v818
        %v831 = vshrl.u32 920167782, %v819
        %v832 = vor.u32 %v830, %v831
        %v833 = vshll.u32 920167782, %v818
        %v834 = vshrl.u32 1326507024, %v819
        %v835 = vor.u32 %v833, %v834
        %vm836 = vcmp.lt.s32.totalorder %v817, 1
        %vm837 = vcmp.lt.s32.totalorder %v817, 2
        %vm838 = vcmp.lt.s32.totalorder %v817, 3
        %vm839 = vcmp.lt.s32.totalorder %v817, 4
        %v840 = vsel %vm836, %v820, %v823
        %v841 = vsel %vm839, %v829, 2102212464
        %v842 = vsel %vm838, %v826, %v841
        %v843 = vsel %vm837, %v840, %v842
        %v844 = vsel %vm836, %v823, %v826
        %v845 = vsel %vm839, %v832, 920167782
        %v846 = vsel %vm838, %v829, %v845
        %v847 = vsel %vm837, %v844, %v846
        %v848 = vsel %vm836, %v826, %v829
        %v849 = vsel %vm839, %v835, 1326507024
        %v850 = vsel %vm838, %v832, %v849
        %v851 = vsel %vm837, %v848, %v850
        %v852 = vshll.u32 %v812, 8
        %v853 = vmul.u32.u64.compose %v852, %v851
        %v854 = vextract.low.u32 %v853
        %v855 = vextract.high.u32 %v853
        %v856 = vmul.u32.u64.compose %v852, %v847
        %v857 = vextract.low.u32 %v856
        %v858 = vextract.high.u32 %v856
        %v859 = vmul.u32 %v852, %v843
        %v860 = vadd.s32 %v855, %v857
        %vm861 = vc.u32 %v855, %v857
        %v862 = vadd.s32 %v858, 1
        %v863 = vsel %vm861, %v862, %v858
        %v864 = vadd.s32 %v859, %v863
        %v865 = vadd.s32 %v864, 536870912
        %v866 = vshrl.u32 %v865, 30
        %v867 = vshll.u32 %v866, 30
        %v868 = vsub.s32 %v864, %v867
        %vm869 = vcmp.lt.s32.totalorder %v868, 0
        %v870 = vsub.s32 0, %v868
        %v871 = vsel %vm869, %v870, %v868
        %v872 = vclz %v871
        %v873 = vsub.s32 %v872, 2
        %vm874 = vcmp.gt.s32.totalorder 0, %v873
        %v875 = vsel %vm874, 0, %v873
        %v876 = vsub.s32 32, %v875
        %v877 = vshll.u32 %v868, %v875
        %v878 = vshrl.u32 %v860, %v876
        %v879 = vor.u32 %v877, %v878
        %v880 = vsub.s32 4294967266, %v875
        %v881 = vadd.s32 %v880, 127
        %v882 = vshll.u32 %v881, 23
        %v883 = vor.u32 4788187, %v882
        %v884 = vand.u32 2147483647, %v883
        %v886 = vcvt.s32.f32 %v879
        %v887 = vmul.f32 %v886, %v884
        %v888 = vxor.u32 %v887, 2147483648
        %v889 = vsel %vm806, %v888, %v887
        %v890 = vsub.s32 4, %v866
        %v891 = vsel %vm806, %v890, %v866
        %v892 = vsel %vm805, %v345, %v889
        %v893 = vsel %vm805, 0, %v891
        %v894 = vcosq.f32.pop %v892
        %v895 = vsinq.f32.pop %v892
        %vm896 = vweird.f32 %v345
        %v897 = vadd.s32 %v893, 3
        %v898 = vand.u32 %v897, 3
        %vm899 = vcmp.lt.s32.totalorder %v898, 2
        %vm900 = vcmp.eq.s32.totalorder %v898, 0
        %v901 = vxor.u32 %v895, 2147483648
        %v902 = vsel %vm900, %v894, %v901
        %vm903 = vcmp.eq.s32.totalorder %v898, 2
        %v904 = vxor.u32 %v894, 2147483648
        %v905 = vsel %vm903, %v904, %v895
        %v906 = vsel %vm899, %v902, %v905
        %v907 = vsel %vm896, nan, %v906
        %v908 = vand.u32 2147483647, %v350
        %vm909 = vcmp.le.f32.partialorder %v908, 0.7853982
        %vm910 = vcmp.lt.s32.totalorder %v350, 0
        %v911 = vand.u32 %v350, 2139095040
        %v912 = vshrl.u32 %v911, 23
        %v913 = vsub.s32 %v912, 127
        %v914 = vand.u32 2147483647, %v350
        %v915 = vand.u32 %v914, 8388607
        %v916 = vor.u32 %v915, 8388608
        %v917 = vsub.s32 0, %v916
        %v918 = vadd.s32 %v913, 1
        %vm919 = vcmp.gt.s32.totalorder %v918, 0
        %v920 = vsel %vm919, %v918, 0
        %v921 = vshrl.u32 %v920, 5
        %v922 = vand.u32 %v920, 31
        %v923 = vsub.s32 32, %v922
        %v924 = vshrl.u32 683565275, %v923
        %v925 = vshll.u32 683565275, %v922
        %v926 = vshrl.u32 2475754826, %v923
        %v927 = vor.u32 %v925, %v926
        %v928 = vshll.u32 2475754826, %v922
        %v929 = vshrl.u32 2131351028, %v923
        %v930 = vor.u32 %v928, %v929
        %v931 = vshll.u32 2131351028, %v922
        %v932 = vshrl.u32 2102212464, %v923
        %v933 = vor.u32 %v931, %v932
        %v934 = vshll.u32 2102212464, %v922
        %v935 = vshrl.u32 920167782, %v923
        %v936 = vor.u32 %v934, %v935
        %v937 = vshll.u32 920167782, %v922
        %v938 = vshrl.u32 1326507024, %v923
        %v939 = vor.u32 %v937, %v938
        %vm940 = vcmp.lt.s32.totalorder %v921, 1
        %vm941 = vcmp.lt.s32.totalorder %v921, 2
        %vm942 = vcmp.lt.s32.totalorder %v921, 3
        %vm943 = vcmp.lt.s32.totalorder %v921, 4
        %v944 = vsel %vm940, %v924, %v927
        %v945 = vsel %vm943, %v933, 2102212464
        %v946 = vsel %vm942, %v930, %v945
        %v947 = vsel %vm941, %v944, %v946
        %v948 = vsel %vm940, %v927, %v930
        %v949 = vsel %vm943, %v936, 920167782
        %v950 = vsel %vm942, %v933, %v949
        %v951 = vsel %vm941, %v948, %v950
        %v952 = vsel %vm940, %v930, %v933
        %v953 = vsel %vm943, %v939, 1326507024
        %v954 = vsel %vm942, %v936, %v953
        %v955 = vsel %vm941, %v952, %v954
        %v956 = vshll.u32 %v916, 8
        %v957 = vmul.u32.u64.compose %v956, %v955
        %v958 = vextract.low.u32 %v957
        %v959 = vextract.high.u32 %v957
        %v960 = vmul.u32.u64.compose %v956, %v951
        %v961 = vextract.low.u32 %v960
        %v962 = vextract.high.u32 %v960
        %v963 = vmul.u32 %v956, %v947
        %v964 = vadd.s32 %v959, %v961
        %vm965 = vc.u32 %v959, %v961
        %v966 = vadd.s32 %v962, 1
        %v967 = vsel %vm965, %v966, %v962
        %v968 = vadd.s32 %v963, %v967
        %v969 = vadd.s32 %v968, 536870912
        %v970 = vshrl.u32 %v969, 30
        %v971 = vshll.u32 %v970, 30
        %v972 = vsub.s32 %v968, %v971
        %vm973 = vcmp.lt.s32.totalorder %v972, 0
        %v974 = vsub.s32 0, %v972
        %v975 = vsel %vm973, %v974, %v972
        %v976 = vclz %v975
        %v977 = vsub.s32 %v976, 2
        %vm978 = vcmp.gt.s32.totalorder 0, %v977
        %v979 = vsel %vm978, 0, %v977
        %v980 = vsub.s32 32, %v979
        %v981 = vshll.u32 %v972, %v979
        %v982 = vshrl.u32 %v964, %v980
        %v983 = vor.u32 %v981, %v982
        %v984 = vsub.s32 4294967266, %v979
        %v985 = vadd.s32 %v984, 127
        %v986 = vshll.u32 %v985, 23
        %v987 = vor.u32 4788187, %v986
        %v988 = vand.u32 2147483647, %v987
        %v990 = vcvt.s32.f32 %v983
        %v991 = vmul.f32 %v990, %v988
        %v992 = vxor.u32 %v991, 2147483648
        %v993 = vsel %vm910, %v992, %v991
        %v994 = vsub.s32 4, %v970
        %v995 = vsel %vm910, %v994, %v970
        %v996 = vsel %vm909, %v350, %v993
        %v997 = vsel %vm909, 0, %v995
        %v998 = vcosq.f32.pop %v996
        %v999 = vsinq.f32.pop %v996
        %vm1000 = vweird.f32 %v350
        %v1001 = vadd.s32 %v997, 3
        %v1002 = vand.u32 %v1001, 3
        %vm1003 = vcmp.lt.s32.totalorder %v1002, 2
        %vm1004 = vcmp.eq.s32.totalorder %v1002, 0
        %v1005 = vxor.u32 %v999, 2147483648
        %v1006 = vsel %vm1004, %v998, %v1005
        %vm1007 = vcmp.eq.s32.totalorder %v1002, 2
        %v1008 = vxor.u32 %v998, 2147483648
        %v1009 = vsel %vm1007, %v1008, %v999
        %v1010 = vsel %vm1003, %v1006, %v1009
        %v1011 = vsel %vm1000, nan, %v1010
        %v1012 = vand.u32 2147483647, %v355
        %vm1013 = vcmp.le.f32.partialorder %v1012, 0.7853982
        %vm1014 = vcmp.lt.s32.totalorder %v355, 0
        %v1015 = vand.u32 %v355, 2139095040
        %v1016 = vshrl.u32 %v1015, 23
        %v1017 = vsub.s32 %v1016, 127
        %v1018 = vand.u32 2147483647, %v355
        %v1019 = vand.u32 %v1018, 8388607
        %v1020 = vor.u32 %v1019, 8388608
        %v1021 = vsub.s32 0, %v1020
        %v1022 = vadd.s32 %v1017, 1
        %vm1023 = vcmp.gt.s32.totalorder %v1022, 0
        %v1024 = vsel %vm1023, %v1022, 0
        %v1025 = vshrl.u32 %v1024, 5
        %v1026 = vand.u32 %v1024, 31
        %v1027 = vsub.s32 32, %v1026
        %v1028 = vshrl.u32 683565275, %v1027
        %v1029 = vshll.u32 683565275, %v1026
        %v1030 = vshrl.u32 2475754826, %v1027
        %v1031 = vor.u32 %v1029, %v1030
        %v1032 = vshll.u32 2475754826, %v1026
        %v1033 = vshrl.u32 2131351028, %v1027
        %v1034 = vor.u32 %v1032, %v1033
        %v1035 = vshll.u32 2131351028, %v1026
        %v1036 = vshrl.u32 2102212464, %v1027
        %v1037 = vor.u32 %v1035, %v1036
        %v1038 = vshll.u32 2102212464, %v1026
        %v1039 = vshrl.u32 920167782, %v1027
        %v1040 = vor.u32 %v1038, %v1039
        %v1041 = vshll.u32 920167782, %v1026
        %v1042 = vshrl.u32 1326507024, %v1027
        %v1043 = vor.u32 %v1041, %v1042
        %vm1044 = vcmp.lt.s32.totalorder %v1025, 1
        %vm1045 = vcmp.lt.s32.totalorder %v1025, 2
        %vm1046 = vcmp.lt.s32.totalorder %v1025, 3
        %vm1047 = vcmp.lt.s32.totalorder %v1025, 4
        %v1048 = vsel %vm1044, %v1028, %v1031
        %v1049 = vsel %vm1047, %v1037, 2102212464
        %v1050 = vsel %vm1046, %v1034, %v1049
        %v1051 = vsel %vm1045, %v1048, %v1050
        %v1052 = vsel %vm1044, %v1031, %v1034
        %v1053 = vsel %vm1047, %v1040, 920167782
        %v1054 = vsel %vm1046, %v1037, %v1053
        %v1055 = vsel %vm1045, %v1052, %v1054
        %v1056 = vsel %vm1044, %v1034, %v1037
        %v1057 = vsel %vm1047, %v1043, 1326507024
        %v1058 = vsel %vm1046, %v1040, %v1057
        %v1059 = vsel %vm1045, %v1056, %v1058
        %v1060 = vshll.u32 %v1020, 8
        %v1061 = vmul.u32.u64.compose %v1060, %v1059
        %v1062 = vextract.low.u32 %v1061
        %v1063 = vextract.high.u32 %v1061
        %v1064 = vmul.u32.u64.compose %v1060, %v1055
        %v1065 = vextract.low.u32 %v1064
        %v1066 = vextract.high.u32 %v1064
        %v1067 = vmul.u32 %v1060, %v1051
        %v1068 = vadd.s32 %v1063, %v1065
        %vm1069 = vc.u32 %v1063, %v1065
        %v1070 = vadd.s32 %v1066, 1
        %v1071 = vsel %vm1069, %v1070, %v1066
        %v1072 = vadd.s32 %v1067, %v1071
        %v1073 = vadd.s32 %v1072, 536870912
        %v1074 = vshrl.u32 %v1073, 30
        %v1075 = vshll.u32 %v1074, 30
        %v1076 = vsub.s32 %v1072, %v1075
        %vm1077 = vcmp.lt.s32.totalorder %v1076, 0
        %v1078 = vsub.s32 0, %v1076
        %v1079 = vsel %vm1077, %v1078, %v1076
        %v1080 = vclz %v1079
        %v1081 = vsub.s32 %v1080, 2
        %vm1082 = vcmp.gt.s32.totalorder 0, %v1081
        %v1083 = vsel %vm1082, 0, %v1081
        %v1084 = vsub.s32 32, %v1083
        %v1085 = vshll.u32 %v1076, %v1083
        %v1086 = vshrl.u32 %v1068, %v1084
        %v1087 = vor.u32 %v1085, %v1086
        %v1088 = vsub.s32 4294967266, %v1083
        %v1089 = vadd.s32 %v1088, 127
        %v1090 = vshll.u32 %v1089, 23
        %v1091 = vor.u32 4788187, %v1090
        %v1092 = vand.u32 2147483647, %v1091
        %v1094 = vcvt.s32.f32 %v1087
        %v1095 = vmul.f32 %v1094, %v1092
        %v1096 = vxor.u32 %v1095, 2147483648
        %v1097 = vsel %vm1014, %v1096, %v1095
        %v1098 = vsub.s32 4, %v1074
        %v1099 = vsel %vm1014, %v1098, %v1074
        %v1100 = vsel %vm1013, %v355, %v1097
        %v1101 = vsel %vm1013, 0, %v1099
        %v1102 = vcosq.f32.pop %v1100
        %v1103 = vsinq.f32.pop %v1100
        %vm1104 = vweird.f32 %v355
        %v1105 = vadd.s32 %v1101, 3
        %v1106 = vand.u32 %v1105, 3
        %vm1107 = vcmp.lt.s32.totalorder %v1106, 2
        %vm1108 = vcmp.eq.s32.totalorder %v1106, 0
        %v1109 = vxor.u32 %v1103, 2147483648
        %v1110 = vsel %vm1108, %v1102, %v1109
        %vm1111 = vcmp.eq.s32.totalorder %v1106, 2
        %v1112 = vxor.u32 %v1102, 2147483648
        %v1113 = vsel %vm1111, %v1112, %v1103
        %v1114 = vsel %vm1107, %v1110, %v1113
        %v1115 = vsel %vm1104, nan, %v1114
        %v1116 = vand.u32 2147483647, %v360
        %vm1117 = vcmp.le.f32.partialorder %v1116, 0.7853982
        %vm1118 = vcmp.lt.s32.totalorder %v360, 0
        %v1119 = vand.u32 %v360, 2139095040
        %v1120 = vshrl.u32 %v1119, 23
        %v1121 = vsub.s32 %v1120, 127
        %v1122 = vand.u32 2147483647, %v360
        %v1123 = vand.u32 %v1122, 8388607
        %v1124 = vor.u32 %v1123, 8388608
        %v1125 = vsub.s32 0, %v1124
        %v1126 = vadd.s32 %v1121, 1
        %vm1127 = vcmp.gt.s32.totalorder %v1126, 0
        %v1128 = vsel %vm1127, %v1126, 0
        %v1129 = vshrl.u32 %v1128, 5
        %v1130 = vand.u32 %v1128, 31
        %v1131 = vsub.s32 32, %v1130
        %v1132 = vshrl.u32 683565275, %v1131
        %v1133 = vshll.u32 683565275, %v1130
        %v1134 = vshrl.u32 2475754826, %v1131
        %v1135 = vor.u32 %v1133, %v1134
        %v1136 = vshll.u32 2475754826, %v1130
        %v1137 = vshrl.u32 2131351028, %v1131
        %v1138 = vor.u32 %v1136, %v1137
        %v1139 = vshll.u32 2131351028, %v1130
        %v1140 = vshrl.u32 2102212464, %v1131
        %v1141 = vor.u32 %v1139, %v1140
        %v1142 = vshll.u32 2102212464, %v1130
        %v1143 = vshrl.u32 920167782, %v1131
        %v1144 = vor.u32 %v1142, %v1143
        %v1145 = vshll.u32 920167782, %v1130
        %v1146 = vshrl.u32 1326507024, %v1131
        %v1147 = vor.u32 %v1145, %v1146
        %vm1148 = vcmp.lt.s32.totalorder %v1129, 1
        %vm1149 = vcmp.lt.s32.totalorder %v1129, 2
        %vm1150 = vcmp.lt.s32.totalorder %v1129, 3
        %vm1151 = vcmp.lt.s32.totalorder %v1129, 4
        %v1152 = vsel %vm1148, %v1132, %v1135
        %v1153 = vsel %vm1151, %v1141, 2102212464
        %v1154 = vsel %vm1150, %v1138, %v1153
        %v1155 = vsel %vm1149, %v1152, %v1154
        %v1156 = vsel %vm1148, %v1135, %v1138
        %v1157 = vsel %vm1151, %v1144, 920167782
        %v1158 = vsel %vm1150, %v1141, %v1157
        %v1159 = vsel %vm1149, %v1156, %v1158
        %v1160 = vsel %vm1148, %v1138, %v1141
        %v1161 = vsel %vm1151, %v1147, 1326507024
        %v1162 = vsel %vm1150, %v1144, %v1161
        %v1163 = vsel %vm1149, %v1160, %v1162
        %v1164 = vshll.u32 %v1124, 8
        %v1165 = vmul.u32.u64.compose %v1164, %v1163
        %v1166 = vextract.low.u32 %v1165
        %v1167 = vextract.high.u32 %v1165
        %v1168 = vmul.u32.u64.compose %v1164, %v1159
        %v1169 = vextract.low.u32 %v1168
        %v1170 = vextract.high.u32 %v1168
        %v1171 = vmul.u32 %v1164, %v1155
        %v1172 = vadd.s32 %v1167, %v1169
        %vm1173 = vc.u32 %v1167, %v1169
        %v1174 = vadd.s32 %v1170, 1
        %v1175 = vsel %vm1173, %v1174, %v1170
        %v1176 = vadd.s32 %v1171, %v1175
        %v1177 = vadd.s32 %v1176, 536870912
        %v1178 = vshrl.u32 %v1177, 30
        %v1179 = vshll.u32 %v1178, 30
        %v1180 = vsub.s32 %v1176, %v1179
        %vm1181 = vcmp.lt.s32.totalorder %v1180, 0
        %v1182 = vsub.s32 0, %v1180
        %v1183 = vsel %vm1181, %v1182, %v1180
        %v1184 = vclz %v1183
        %v1185 = vsub.s32 %v1184, 2
        %vm1186 = vcmp.gt.s32.totalorder 0, %v1185
        %v1187 = vsel %vm1186, 0, %v1185
        %v1188 = vsub.s32 32, %v1187
        %v1189 = vshll.u32 %v1180, %v1187
        %v1190 = vshrl.u32 %v1172, %v1188
        %v1191 = vor.u32 %v1189, %v1190
        %v1192 = vsub.s32 4294967266, %v1187
        %v1193 = vadd.s32 %v1192, 127
        %v1194 = vshll.u32 %v1193, 23
        %v1195 = vor.u32 4788187, %v1194
        %v1196 = vand.u32 2147483647, %v1195
        %v1198 = vcvt.s32.f32 %v1191
        %v1199 = vmul.f32 %v1198, %v1196
        %v1200 = vxor.u32 %v1199, 2147483648
        %v1201 = vsel %vm1118, %v1200, %v1199
        %v1202 = vsub.s32 4, %v1178
        %v1203 = vsel %vm1118, %v1202, %v1178
        %v1204 = vsel %vm1117, %v360, %v1201
        %v1205 = vsel %vm1117, 0, %v1203
        %v1206 = vcosq.f32.pop %v1204
        %v1207 = vsinq.f32.pop %v1204
        %vm1208 = vweird.f32 %v360
        %v1209 = vadd.s32 %v1205, 3
        %v1210 = vand.u32 %v1209, 3
        %vm1211 = vcmp.lt.s32.totalorder %v1210, 2
        %vm1212 = vcmp.eq.s32.totalorder %v1210, 0
        %v1213 = vxor.u32 %v1207, 2147483648
        %v1214 = vsel %vm1212, %v1206, %v1213
        %vm1215 = vcmp.eq.s32.totalorder %v1210, 2
        %v1216 = vxor.u32 %v1206, 2147483648
        %v1217 = vsel %vm1215, %v1216, %v1207
        %v1218 = vsel %vm1211, %v1214, %v1217
        %v1219 = vsel %vm1208, nan, %v1218
        %v1220 = vand.u32 2147483647, %v365
        %vm1221 = vcmp.le.f32.partialorder %v1220, 0.7853982
        %vm1222 = vcmp.lt.s32.totalorder %v365, 0
        %v1223 = vand.u32 %v365, 2139095040
        %v1224 = vshrl.u32 %v1223, 23
        %v1225 = vsub.s32 %v1224, 127
        %v1226 = vand.u32 2147483647, %v365
        %v1227 = vand.u32 %v1226, 8388607
        %v1228 = vor.u32 %v1227, 8388608
        %v1229 = vsub.s32 0, %v1228
        %v1230 = vadd.s32 %v1225, 1
        %vm1231 = vcmp.gt.s32.totalorder %v1230, 0
        %v1232 = vsel %vm1231, %v1230, 0
        %v1233 = vshrl.u32 %v1232, 5
        %v1234 = vand.u32 %v1232, 31
        %v1235 = vsub.s32 32, %v1234
        %v1236 = vshrl.u32 683565275, %v1235
        %v1237 = vshll.u32 683565275, %v1234
        %v1238 = vshrl.u32 2475754826, %v1235
        %v1239 = vor.u32 %v1237, %v1238
        %v1240 = vshll.u32 2475754826, %v1234
        %v1241 = vshrl.u32 2131351028, %v1235
        %v1242 = vor.u32 %v1240, %v1241
        %v1243 = vshll.u32 2131351028, %v1234
        %v1244 = vshrl.u32 2102212464, %v1235
        %v1245 = vor.u32 %v1243, %v1244
        %v1246 = vshll.u32 2102212464, %v1234
        %v1247 = vshrl.u32 920167782, %v1235
        %v1248 = vor.u32 %v1246, %v1247
        %v1249 = vshll.u32 920167782, %v1234
        %v1250 = vshrl.u32 1326507024, %v1235
        %v1251 = vor.u32 %v1249, %v1250
        %vm1252 = vcmp.lt.s32.totalorder %v1233, 1
        %vm1253 = vcmp.lt.s32.totalorder %v1233, 2
        %vm1254 = vcmp.lt.s32.totalorder %v1233, 3
        %vm1255 = vcmp.lt.s32.totalorder %v1233, 4
        %v1256 = vsel %vm1252, %v1236, %v1239
        %v1257 = vsel %vm1255, %v1245, 2102212464
        %v1258 = vsel %vm1254, %v1242, %v1257
        %v1259 = vsel %vm1253, %v1256, %v1258
        %v1260 = vsel %vm1252, %v1239, %v1242
        %v1261 = vsel %vm1255, %v1248, 920167782
        %v1262 = vsel %vm1254, %v1245, %v1261
        %v1263 = vsel %vm1253, %v1260, %v1262
        %v1264 = vsel %vm1252, %v1242, %v1245
        %v1265 = vsel %vm1255, %v1251, 1326507024
        %v1266 = vsel %vm1254, %v1248, %v1265
        %v1267 = vsel %vm1253, %v1264, %v1266
        %v1268 = vshll.u32 %v1228, 8
        %v1269 = vmul.u32.u64.compose %v1268, %v1267
        %v1270 = vextract.low.u32 %v1269
        %v1271 = vextract.high.u32 %v1269
        %v1272 = vmul.u32.u64.compose %v1268, %v1263
        %v1273 = vextract.low.u32 %v1272
        %v1274 = vextract.high.u32 %v1272
        %v1275 = vmul.u32 %v1268, %v1259
        %v1276 = vadd.s32 %v1271, %v1273
        %vm1277 = vc.u32 %v1271, %v1273
        %v1278 = vadd.s32 %v1274, 1
        %v1279 = vsel %vm1277, %v1278, %v1274
        %v1280 = vadd.s32 %v1275, %v1279
        %v1281 = vadd.s32 %v1280, 536870912
        %v1282 = vshrl.u32 %v1281, 30
        %v1283 = vshll.u32 %v1282, 30
        %v1284 = vsub.s32 %v1280, %v1283
        %vm1285 = vcmp.lt.s32.totalorder %v1284, 0
        %v1286 = vsub.s32 0, %v1284
        %v1287 = vsel %vm1285, %v1286, %v1284
        %v1288 = vclz %v1287
        %v1289 = vsub.s32 %v1288, 2
        %vm1290 = vcmp.gt.s32.totalorder 0, %v1289
        %v1291 = vsel %vm1290, 0, %v1289
        %v1292 = vsub.s32 32, %v1291
        %v1293 = vshll.u32 %v1284, %v1291
        %v1294 = vshrl.u32 %v1276, %v1292
        %v1295 = vor.u32 %v1293, %v1294
        %v1296 = vsub.s32 4294967266, %v1291
        %v1297 = vadd.s32 %v1296, 127
        %v1298 = vshll.u32 %v1297, 23
        %v1299 = vor.u32 4788187, %v1298
        %v1300 = vand.u32 2147483647, %v1299
        %v1302 = vcvt.s32.f32 %v1295
        %v1303 = vmul.f32 %v1302, %v1300
        %v1304 = vxor.u32 %v1303, 2147483648
        %v1305 = vsel %vm1222, %v1304, %v1303
        %v1306 = vsub.s32 4, %v1282
        %v1307 = vsel %vm1222, %v1306, %v1282
        %v1308 = vsel %vm1221, %v365, %v1305
        %v1309 = vsel %vm1221, 0, %v1307
        %v1310 = vcosq.f32.pop %v1308
        %v1311 = vsinq.f32.pop %v1308
        %vm1312 = vweird.f32 %v365
        %v1313 = vadd.s32 %v1309, 3
        %v1314 = vand.u32 %v1313, 3
        %vm1315 = vcmp.lt.s32.totalorder %v1314, 2
        %vm1316 = vcmp.eq.s32.totalorder %v1314, 0
        %v1317 = vxor.u32 %v1311, 2147483648
        %v1318 = vsel %vm1316, %v1310, %v1317
        %vm1319 = vcmp.eq.s32.totalorder %v1314, 2
        %v1320 = vxor.u32 %v1310, 2147483648
        %v1321 = vsel %vm1319, %v1320, %v1311
        %v1322 = vsel %vm1315, %v1318, %v1321
        %v1323 = vsel %vm1312, nan, %v1322
        %v1324 = vand.u32 2147483647, %v370
        %vm1325 = vcmp.le.f32.partialorder %v1324, 0.7853982
        %vm1326 = vcmp.lt.s32.totalorder %v370, 0
        %v1327 = vand.u32 %v370, 2139095040
        %v1328 = vshrl.u32 %v1327, 23
        %v1329 = vsub.s32 %v1328, 127
        %v1330 = vand.u32 2147483647, %v370
        %v1331 = vand.u32 %v1330, 8388607
        %v1332 = vor.u32 %v1331, 8388608
        %v1333 = vsub.s32 0, %v1332
        %v1334 = vadd.s32 %v1329, 1
        %vm1335 = vcmp.gt.s32.totalorder %v1334, 0
        %v1336 = vsel %vm1335, %v1334, 0
        %v1337 = vshrl.u32 %v1336, 5
        %v1338 = vand.u32 %v1336, 31
        %v1339 = vsub.s32 32, %v1338
        %v1340 = vshrl.u32 683565275, %v1339
        %v1341 = vshll.u32 683565275, %v1338
        %v1342 = vshrl.u32 2475754826, %v1339
        %v1343 = vor.u32 %v1341, %v1342
        %v1344 = vshll.u32 2475754826, %v1338
        %v1345 = vshrl.u32 2131351028, %v1339
        %v1346 = vor.u32 %v1344, %v1345
        %v1347 = vshll.u32 2131351028, %v1338
        %v1348 = vshrl.u32 2102212464, %v1339
        %v1349 = vor.u32 %v1347, %v1348
        %v1350 = vshll.u32 2102212464, %v1338
        %v1351 = vshrl.u32 920167782, %v1339
        %v1352 = vor.u32 %v1350, %v1351
        %v1353 = vshll.u32 920167782, %v1338
        %v1354 = vshrl.u32 1326507024, %v1339
        %v1355 = vor.u32 %v1353, %v1354
        %vm1356 = vcmp.lt.s32.totalorder %v1337, 1
        %vm1357 = vcmp.lt.s32.totalorder %v1337, 2
        %vm1358 = vcmp.lt.s32.totalorder %v1337, 3
        %vm1359 = vcmp.lt.s32.totalorder %v1337, 4
        %v1360 = vsel %vm1356, %v1340, %v1343
        %v1361 = vsel %vm1359, %v1349, 2102212464
        %v1362 = vsel %vm1358, %v1346, %v1361
        %v1363 = vsel %vm1357, %v1360, %v1362
        %v1364 = vsel %vm1356, %v1343, %v1346
        %v1365 = vsel %vm1359, %v1352, 920167782
        %v1366 = vsel %vm1358, %v1349, %v1365
        %v1367 = vsel %vm1357, %v1364, %v1366
        %v1368 = vsel %vm1356, %v1346, %v1349
        %v1369 = vsel %vm1359, %v1355, 1326507024
        %v1370 = vsel %vm1358, %v1352, %v1369
        %v1371 = vsel %vm1357, %v1368, %v1370
        %v1372 = vshll.u32 %v1332, 8
        %v1373 = vmul.u32.u64.compose %v1372, %v1371
        %v1374 = vextract.low.u32 %v1373
        %v1375 = vextract.high.u32 %v1373
        %v1376 = vmul.u32.u64.compose %v1372, %v1367
        %v1377 = vextract.low.u32 %v1376
        %v1378 = vextract.high.u32 %v1376
        %v1379 = vmul.u32 %v1372, %v1363
        %v1380 = vadd.s32 %v1375, %v1377
        %vm1381 = vc.u32 %v1375, %v1377
        %v1382 = vadd.s32 %v1378, 1
        %v1383 = vsel %vm1381, %v1382, %v1378
        %v1384 = vadd.s32 %v1379, %v1383
        %v1385 = vadd.s32 %v1384, 536870912
        %v1386 = vshrl.u32 %v1385, 30
        %v1387 = vshll.u32 %v1386, 30
        %v1388 = vsub.s32 %v1384, %v1387
        %vm1389 = vcmp.lt.s32.totalorder %v1388, 0
        %v1390 = vsub.s32 0, %v1388
        %v1391 = vsel %vm1389, %v1390, %v1388
        %v1392 = vclz %v1391
        %v1393 = vsub.s32 %v1392, 2
        %vm1394 = vcmp.gt.s32.totalorder 0, %v1393
        %v1395 = vsel %vm1394, 0, %v1393
        %v1396 = vsub.s32 32, %v1395
        %v1397 = vshll.u32 %v1388, %v1395
        %v1398 = vshrl.u32 %v1380, %v1396
        %v1399 = vor.u32 %v1397, %v1398
        %v1400 = vsub.s32 4294967266, %v1395
        %v1401 = vadd.s32 %v1400, 127
        %v1402 = vshll.u32 %v1401, 23
        %v1403 = vor.u32 4788187, %v1402
        %v1404 = vand.u32 2147483647, %v1403
        %v1406 = vcvt.s32.f32 %v1399
        %v1407 = vmul.f32 %v1406, %v1404
        %v1408 = vxor.u32 %v1407, 2147483648
        %v1409 = vsel %vm1326, %v1408, %v1407
        %v1410 = vsub.s32 4, %v1386
        %v1411 = vsel %vm1326, %v1410, %v1386
        %v1412 = vsel %vm1325, %v370, %v1409
        %v1413 = vsel %vm1325, 0, %v1411
        %v1414 = vcosq.f32.pop %v1412
        %v1415 = vsinq.f32.pop %v1412
        %vm1416 = vweird.f32 %v370
        %v1417 = vadd.s32 %v1413, 3
        %v1418 = vand.u32 %v1417, 3
        %vm1419 = vcmp.lt.s32.totalorder %v1418, 2
        %vm1420 = vcmp.eq.s32.totalorder %v1418, 0
        %v1421 = vxor.u32 %v1415, 2147483648
        %v1422 = vsel %vm1420, %v1414, %v1421
        %vm1423 = vcmp.eq.s32.totalorder %v1418, 2
        %v1424 = vxor.u32 %v1414, 2147483648
        %v1425 = vsel %vm1423, %v1424, %v1415
        %v1426 = vsel %vm1419, %v1422, %v1425
        %v1427 = vsel %vm1416, nan, %v1426
        %v1428 = vand.u32 2147483647, %v375
        %vm1429 = vcmp.le.f32.partialorder %v1428, 0.7853982
        %vm1430 = vcmp.lt.s32.totalorder %v375, 0
        %v1431 = vand.u32 %v375, 2139095040
        %v1432 = vshrl.u32 %v1431, 23
        %v1433 = vsub.s32 %v1432, 127
        %v1434 = vand.u32 2147483647, %v375
        %v1435 = vand.u32 %v1434, 8388607
        %v1436 = vor.u32 %v1435, 8388608
        %v1437 = vsub.s32 0, %v1436
        %v1438 = vadd.s32 %v1433, 1
        %vm1439 = vcmp.gt.s32.totalorder %v1438, 0
        %v1440 = vsel %vm1439, %v1438, 0
        %v1441 = vshrl.u32 %v1440, 5
        %v1442 = vand.u32 %v1440, 31
        %v1443 = vsub.s32 32, %v1442
        %v1444 = vshrl.u32 683565275, %v1443
        %v1445 = vshll.u32 683565275, %v1442
        %v1446 = vshrl.u32 2475754826, %v1443
        %v1447 = vor.u32 %v1445, %v1446
        %v1448 = vshll.u32 2475754826, %v1442
        %v1449 = vshrl.u32 2131351028, %v1443
        %v1450 = vor.u32 %v1448, %v1449
        %v1451 = vshll.u32 2131351028, %v1442
        %v1452 = vshrl.u32 2102212464, %v1443
        %v1453 = vor.u32 %v1451, %v1452
        %v1454 = vshll.u32 2102212464, %v1442
        %v1455 = vshrl.u32 920167782, %v1443
        %v1456 = vor.u32 %v1454, %v1455
        %v1457 = vshll.u32 920167782, %v1442
        %v1458 = vshrl.u32 1326507024, %v1443
        %v1459 = vor.u32 %v1457, %v1458
        %vm1460 = vcmp.lt.s32.totalorder %v1441, 1
        %vm1461 = vcmp.lt.s32.totalorder %v1441, 2
        %vm1462 = vcmp.lt.s32.totalorder %v1441, 3
        %vm1463 = vcmp.lt.s32.totalorder %v1441, 4
        %v1464 = vsel %vm1460, %v1444, %v1447
        %v1465 = vsel %vm1463, %v1453, 2102212464
        %v1466 = vsel %vm1462, %v1450, %v1465
        %v1467 = vsel %vm1461, %v1464, %v1466
        %v1468 = vsel %vm1460, %v1447, %v1450
        %v1469 = vsel %vm1463, %v1456, 920167782
        %v1470 = vsel %vm1462, %v1453, %v1469
        %v1471 = vsel %vm1461, %v1468, %v1470
        %v1472 = vsel %vm1460, %v1450, %v1453
        %v1473 = vsel %vm1463, %v1459, 1326507024
        %v1474 = vsel %vm1462, %v1456, %v1473
        %v1475 = vsel %vm1461, %v1472, %v1474
        %v1476 = vshll.u32 %v1436, 8
        %v1477 = vmul.u32.u64.compose %v1476, %v1475
        %v1478 = vextract.low.u32 %v1477
        %v1479 = vextract.high.u32 %v1477
        %v1480 = vmul.u32.u64.compose %v1476, %v1471
        %v1481 = vextract.low.u32 %v1480
        %v1482 = vextract.high.u32 %v1480
        %v1483 = vmul.u32 %v1476, %v1467
        %v1484 = vadd.s32 %v1479, %v1481
        %vm1485 = vc.u32 %v1479, %v1481
        %v1486 = vadd.s32 %v1482, 1
        %v1487 = vsel %vm1485, %v1486, %v1482
        %v1488 = vadd.s32 %v1483, %v1487
        %v1489 = vadd.s32 %v1488, 536870912
        %v1490 = vshrl.u32 %v1489, 30
        %v1491 = vshll.u32 %v1490, 30
        %v1492 = vsub.s32 %v1488, %v1491
        %vm1493 = vcmp.lt.s32.totalorder %v1492, 0
        %v1494 = vsub.s32 0, %v1492
        %v1495 = vsel %vm1493, %v1494, %v1492
        %v1496 = vclz %v1495
        %v1497 = vsub.s32 %v1496, 2
        %vm1498 = vcmp.gt.s32.totalorder 0, %v1497
        %v1499 = vsel %vm1498, 0, %v1497
        %v1500 = vsub.s32 32, %v1499
        %v1501 = vshll.u32 %v1492, %v1499
        %v1502 = vshrl.u32 %v1484, %v1500
        %v1503 = vor.u32 %v1501, %v1502
        %v1504 = vsub.s32 4294967266, %v1499
        %v1505 = vadd.s32 %v1504, 127
        %v1506 = vshll.u32 %v1505, 23
        %v1507 = vor.u32 4788187, %v1506
        %v1508 = vand.u32 2147483647, %v1507
        %v1510 = vcvt.s32.f32 %v1503
        %v1511 = vmul.f32 %v1510, %v1508
        %v1512 = vxor.u32 %v1511, 2147483648
        %v1513 = vsel %vm1430, %v1512, %v1511
        %v1514 = vsub.s32 4, %v1490
        %v1515 = vsel %vm1430, %v1514, %v1490
        %v1516 = vsel %vm1429, %v375, %v1513
        %v1517 = vsel %vm1429, 0, %v1515
        %v1518 = vcosq.f32.pop %v1516
        %v1519 = vsinq.f32.pop %v1516
        %vm1520 = vweird.f32 %v375
        %v1521 = vadd.s32 %v1517, 3
        %v1522 = vand.u32 %v1521, 3
        %vm1523 = vcmp.lt.s32.totalorder %v1522, 2
        %vm1524 = vcmp.eq.s32.totalorder %v1522, 0
        %v1525 = vxor.u32 %v1519, 2147483648
        %v1526 = vsel %vm1524, %v1518, %v1525
        %vm1527 = vcmp.eq.s32.totalorder %v1522, 2
        %v1528 = vxor.u32 %v1518, 2147483648
        %v1529 = vsel %vm1527, %v1528, %v1519
        %v1530 = vsel %vm1523, %v1526, %v1529
        %v1531 = vsel %vm1520, nan, %v1530
        %v1532 = vand.u32 2147483647, %v380
        %vm1533 = vcmp.le.f32.partialorder %v1532, 0.7853982
        %vm1534 = vcmp.lt.s32.totalorder %v380, 0
        %v1535 = vand.u32 %v380, 2139095040
        %v1536 = vshrl.u32 %v1535, 23
        %v1537 = vsub.s32 %v1536, 127
        %v1538 = vand.u32 2147483647, %v380
        %v1539 = vand.u32 %v1538, 8388607
        %v1540 = vor.u32 %v1539, 8388608
        %v1541 = vsub.s32 0, %v1540
        %v1542 = vadd.s32 %v1537, 1
        %vm1543 = vcmp.gt.s32.totalorder %v1542, 0
        %v1544 = vsel %vm1543, %v1542, 0
        %v1545 = vshrl.u32 %v1544, 5
        %v1546 = vand.u32 %v1544, 31
        %v1547 = vsub.s32 32, %v1546
        %v1548 = vshrl.u32 683565275, %v1547
        %v1549 = vshll.u32 683565275, %v1546
        %v1550 = vshrl.u32 2475754826, %v1547
        %v1551 = vor.u32 %v1549, %v1550
        %v1552 = vshll.u32 2475754826, %v1546
        %v1553 = vshrl.u32 2131351028, %v1547
        %v1554 = vor.u32 %v1552, %v1553
        %v1555 = vshll.u32 2131351028, %v1546
        %v1556 = vshrl.u32 2102212464, %v1547
        %v1557 = vor.u32 %v1555, %v1556
        %v1558 = vshll.u32 2102212464, %v1546
        %v1559 = vshrl.u32 920167782, %v1547
        %v1560 = vor.u32 %v1558, %v1559
        %v1561 = vshll.u32 920167782, %v1546
        %v1562 = vshrl.u32 1326507024, %v1547
        %v1563 = vor.u32 %v1561, %v1562
        %vm1564 = vcmp.lt.s32.totalorder %v1545, 1
        %vm1565 = vcmp.lt.s32.totalorder %v1545, 2
        %vm1566 = vcmp.lt.s32.totalorder %v1545, 3
        %vm1567 = vcmp.lt.s32.totalorder %v1545, 4
        %v1568 = vsel %vm1564, %v1548, %v1551
        %v1569 = vsel %vm1567, %v1557, 2102212464
        %v1570 = vsel %vm1566, %v1554, %v1569
        %v1571 = vsel %vm1565, %v1568, %v1570
        %v1572 = vsel %vm1564, %v1551, %v1554
        %v1573 = vsel %vm1567, %v1560, 920167782
        %v1574 = vsel %vm1566, %v1557, %v1573
        %v1575 = vsel %vm1565, %v1572, %v1574
        %v1576 = vsel %vm1564, %v1554, %v1557
        %v1577 = vsel %vm1567, %v1563, 1326507024
        %v1578 = vsel %vm1566, %v1560, %v1577
        %v1579 = vsel %vm1565, %v1576, %v1578
        %v1580 = vshll.u32 %v1540, 8
        %v1581 = vmul.u32.u64.compose %v1580, %v1579
        %v1582 = vextract.low.u32 %v1581
        %v1583 = vextract.high.u32 %v1581
        %v1584 = vmul.u32.u64.compose %v1580, %v1575
        %v1585 = vextract.low.u32 %v1584
        %v1586 = vextract.high.u32 %v1584
        %v1587 = vmul.u32 %v1580, %v1571
        %v1588 = vadd.s32 %v1583, %v1585
        %vm1589 = vc.u32 %v1583, %v1585
        %v1590 = vadd.s32 %v1586, 1
        %v1591 = vsel %vm1589, %v1590, %v1586
        %v1592 = vadd.s32 %v1587, %v1591
        %v1593 = vadd.s32 %v1592, 536870912
        %v1594 = vshrl.u32 %v1593, 30
        %v1595 = vshll.u32 %v1594, 30
        %v1596 = vsub.s32 %v1592, %v1595
        %vm1597 = vcmp.lt.s32.totalorder %v1596, 0
        %v1598 = vsub.s32 0, %v1596
        %v1599 = vsel %vm1597, %v1598, %v1596
        %v1600 = vclz %v1599
        %v1601 = vsub.s32 %v1600, 2
        %vm1602 = vcmp.gt.s32.totalorder 0, %v1601
        %v1603 = vsel %vm1602, 0, %v1601
        %v1604 = vsub.s32 32, %v1603
        %v1605 = vshll.u32 %v1596, %v1603
        %v1606 = vshrl.u32 %v1588, %v1604
        %v1607 = vor.u32 %v1605, %v1606
        %v1608 = vsub.s32 4294967266, %v1603
        %v1609 = vadd.s32 %v1608, 127
        %v1610 = vshll.u32 %v1609, 23
        %v1611 = vor.u32 4788187, %v1610
        %v1612 = vand.u32 2147483647, %v1611
        %v1614 = vcvt.s32.f32 %v1607
        %v1615 = vmul.f32 %v1614, %v1612
        %v1616 = vxor.u32 %v1615, 2147483648
        %v1617 = vsel %vm1534, %v1616, %v1615
        %v1618 = vsub.s32 4, %v1594
        %v1619 = vsel %vm1534, %v1618, %v1594
        %v1620 = vsel %vm1533, %v380, %v1617
        %v1621 = vsel %vm1533, 0, %v1619
        %v1622 = vcosq.f32.pop %v1620
        %v1623 = vsinq.f32.pop %v1620
        %vm1624 = vweird.f32 %v380
        %v1625 = vadd.s32 %v1621, 3
        %v1626 = vand.u32 %v1625, 3
        %vm1627 = vcmp.lt.s32.totalorder %v1626, 2
        %vm1628 = vcmp.eq.s32.totalorder %v1626, 0
        %v1629 = vxor.u32 %v1623, 2147483648
        %v1630 = vsel %vm1628, %v1622, %v1629
        %vm1631 = vcmp.eq.s32.totalorder %v1626, 2
        %v1632 = vxor.u32 %v1622, 2147483648
        %v1633 = vsel %vm1631, %v1632, %v1623
        %v1634 = vsel %vm1627, %v1630, %v1633
        %v1635 = vsel %vm1624, nan, %v1634
        %v1636 = vand.u32 2147483647, %v385
        %vm1637 = vcmp.le.f32.partialorder %v1636, 0.7853982
        %vm1638 = vcmp.lt.s32.totalorder %v385, 0
        %v1639 = vand.u32 %v385, 2139095040
        %v1640 = vshrl.u32 %v1639, 23
        %v1641 = vsub.s32 %v1640, 127
        %v1642 = vand.u32 2147483647, %v385
        %v1643 = vand.u32 %v1642, 8388607
        %v1644 = vor.u32 %v1643, 8388608
        %v1645 = vsub.s32 0, %v1644
        %v1646 = vadd.s32 %v1641, 1
        %vm1647 = vcmp.gt.s32.totalorder %v1646, 0
        %v1648 = vsel %vm1647, %v1646, 0
        %v1649 = vshrl.u32 %v1648, 5
        %v1650 = vand.u32 %v1648, 31
        %v1651 = vsub.s32 32, %v1650
        %v1652 = vshrl.u32 683565275, %v1651
        %v1653 = vshll.u32 683565275, %v1650
        %v1654 = vshrl.u32 2475754826, %v1651
        %v1655 = vor.u32 %v1653, %v1654
        %v1656 = vshll.u32 2475754826, %v1650
        %v1657 = vshrl.u32 2131351028, %v1651
        %v1658 = vor.u32 %v1656, %v1657
        %v1659 = vshll.u32 2131351028, %v1650
        %v1660 = vshrl.u32 2102212464, %v1651
        %v1661 = vor.u32 %v1659, %v1660
        %v1662 = vshll.u32 2102212464, %v1650
        %v1663 = vshrl.u32 920167782, %v1651
        %v1664 = vor.u32 %v1662, %v1663
        %v1665 = vshll.u32 920167782, %v1650
        %v1666 = vshrl.u32 1326507024, %v1651
        %v1667 = vor.u32 %v1665, %v1666
        %vm1668 = vcmp.lt.s32.totalorder %v1649, 1
        %vm1669 = vcmp.lt.s32.totalorder %v1649, 2
        %vm1670 = vcmp.lt.s32.totalorder %v1649, 3
        %vm1671 = vcmp.lt.s32.totalorder %v1649, 4
        %v1672 = vsel %vm1668, %v1652, %v1655
        %v1673 = vsel %vm1671, %v1661, 2102212464
        %v1674 = vsel %vm1670, %v1658, %v1673
        %v1675 = vsel %vm1669, %v1672, %v1674
        %v1676 = vsel %vm1668, %v1655, %v1658
        %v1677 = vsel %vm1671, %v1664, 920167782
        %v1678 = vsel %vm1670, %v1661, %v1677
        %v1679 = vsel %vm1669, %v1676, %v1678
        %v1680 = vsel %vm1668, %v1658, %v1661
        %v1681 = vsel %vm1671, %v1667, 1326507024
        %v1682 = vsel %vm1670, %v1664, %v1681
        %v1683 = vsel %vm1669, %v1680, %v1682
        %v1684 = vshll.u32 %v1644, 8
        %v1685 = vmul.u32.u64.compose %v1684, %v1683
        %v1686 = vextract.low.u32 %v1685
        %v1687 = vextract.high.u32 %v1685
        %v1688 = vmul.u32.u64.compose %v1684, %v1679
        %v1689 = vextract.low.u32 %v1688
        %v1690 = vextract.high.u32 %v1688
        %v1691 = vmul.u32 %v1684, %v1675
        %v1692 = vadd.s32 %v1687, %v1689
        %vm1693 = vc.u32 %v1687, %v1689
        %v1694 = vadd.s32 %v1690, 1
        %v1695 = vsel %vm1693, %v1694, %v1690
        %v1696 = vadd.s32 %v1691, %v1695
        %v1697 = vadd.s32 %v1696, 536870912
        %v1698 = vshrl.u32 %v1697, 30
        %v1699 = vshll.u32 %v1698, 30
        %v1700 = vsub.s32 %v1696, %v1699
        %vm1701 = vcmp.lt.s32.totalorder %v1700, 0
        %v1702 = vsub.s32 0, %v1700
        %v1703 = vsel %vm1701, %v1702, %v1700
        %v1704 = vclz %v1703
        %v1705 = vsub.s32 %v1704, 2
        %vm1706 = vcmp.gt.s32.totalorder 0, %v1705
        %v1707 = vsel %vm1706, 0, %v1705
        %v1708 = vsub.s32 32, %v1707
        %v1709 = vshll.u32 %v1700, %v1707
        %v1710 = vshrl.u32 %v1692, %v1708
        %v1711 = vor.u32 %v1709, %v1710
        %v1712 = vsub.s32 4294967266, %v1707
        %v1713 = vadd.s32 %v1712, 127
        %v1714 = vshll.u32 %v1713, 23
        %v1715 = vor.u32 4788187, %v1714
        %v1716 = vand.u32 2147483647, %v1715
        %v1718 = vcvt.s32.f32 %v1711
        %v1719 = vmul.f32 %v1718, %v1716
        %v1720 = vxor.u32 %v1719, 2147483648
        %v1721 = vsel %vm1638, %v1720, %v1719
        %v1722 = vsub.s32 4, %v1698
        %v1723 = vsel %vm1638, %v1722, %v1698
        %v1724 = vsel %vm1637, %v385, %v1721
        %v1725 = vsel %vm1637, 0, %v1723
        %v1726 = vcosq.f32.pop %v1724
        %v1727 = vsinq.f32.pop %v1724
        %vm1728 = vweird.f32 %v385
        %v1729 = vadd.s32 %v1725, 3
        %v1730 = vand.u32 %v1729, 3
        %vm1731 = vcmp.lt.s32.totalorder %v1730, 2
        %vm1732 = vcmp.eq.s32.totalorder %v1730, 0
        %v1733 = vxor.u32 %v1727, 2147483648
        %v1734 = vsel %vm1732, %v1726, %v1733
        %vm1735 = vcmp.eq.s32.totalorder %v1730, 2
        %v1736 = vxor.u32 %v1726, 2147483648
        %v1737 = vsel %vm1735, %v1736, %v1727
        %v1738 = vsel %vm1731, %v1734, %v1737
        %v1739 = vsel %vm1728, nan, %v1738
        %1740 = vst [vmem:[%s176] sm:$0xff] %v491
        %1741 = vst [vmem:[%s176 + $0x8] sm:$0xff] %v595
        %1742 = vst [vmem:[%s176 + $0x10] sm:$0xff] %v699
        %1743 = vst [vmem:[%s176 + $0x18] sm:$0xff] %v803
        %1744 = vst [vmem:[%s176 + $0x20] sm:$0xff] %v907
        %1745 = vst [vmem:[%s176 + $0x28] sm:$0xff] %v1011
        %1746 = vst [vmem:[%s176 + $0x30] sm:$0xff] %v1115
        %1747 = vst [vmem:[%s176 + $0x38] sm:$0xff] %v1219
        %1748 = vst [vmem:[%s176 + $0x40] sm:$0xff] %v1323
        %1749 = vst [vmem:[%s176 + $0x48] sm:$0xff] %v1427
        %1750 = vst [vmem:[%s176 + $0x50] sm:$0xff] %v1531
        %1751 = vst [vmem:[%s176 + $0x58] sm:$0xff] %v1635
        %1752 = vst [vmem:[%s176 + $0x60] sm:$0xff] %v1739
        %s1753 = sand.u32 %s93, 1
        %s1754 = scalar_lea.sflag [#allocation3], %s1753
        %s1755 = sand.u32 %s93, 1
        %s1756 = smul.addr %s1755, 104
        %s1757 = scalar_lea.vmem [#allocation2], %s1756
        // Predicated region
        $region33: #{tpu_custom_call.1} parent=31 // pred_check
          %p1758 = pneg %p103
        $region34: #{tpu_custom_call.1} parent=31 // pred_check_branch
          %1760 = sbr.rel (%p1758) target = $region36
        $region35: #{tpu_custom_call.1} parent=31 // pred_region
          %s1761 = smul.u32 13, %s17
          %s1762 = ssub.s32 25, %s1761
          %p1763 = scmp.lt.s32.totalorder %s1762, 13
          %s1764 = scalar_select %p1763, %s1762, 13
          %s1765 = smul.u32 128, %s1764
          %s1767 = ssub.s32 1664, %s1765
          %1768 = vsyncadd %s1754, %s1767
          %p1769 = scmp.ne.s32.totalorder 0, %s1765
          %s1770 = smul.addr %s1761, 128
          %s1771 = scalar_lea.hbm %s3, %s1770
          %s1772 = smul.u32 8, %s1764
          %s1773 = sshll.u32 %s1757, 4
          %s1774 = int_to_ptr.vmem [resolvable:$true] %s1773
          %s1775 = sshll.u32 %s1772, 4
          %1779 = dma.vmem_to_hbm [thread:$0]  (%p1769), %s1774, %s1775, %s1771, %s1754, 128, 128, 8
        $region36: #{tpu_custom_call.1} parent=31 // pred_fallthru
          _
      $region32: #{tpu_custom_call.1} parent=5 // pred_fallthru
        _
      %p1780 = scmp.le.s32.totalorder 2, %s12
      // Predicated region
      $region37: #{tpu_custom_call.1} parent=5 // pred_check
        %p1781 = pneg %p1780
      $region38: #{tpu_custom_call.1} parent=5 // pred_check_branch
        %1783 = sbr.rel (%p1781) target = $region40
      $region39: #{tpu_custom_call.1} parent=5 // pred_region
        %s1784 = ssub.s32 %s12, 2
        // Predicated region
        $region41: #{tpu_custom_call.1} parent=39 // pred_check
          %p1785 = pneg %p109
        $region42: #{tpu_custom_call.1} parent=39 // pred_check_branch
          %1787 = sbr.rel (%p1785) target = $region44
        $region43: #{tpu_custom_call.1} parent=39 // pred_region
          %s1788 = sand.u32 %s94, 1
          %s1789 = scalar_lea.sflag [#allocation3], %s1788
          %s1790 = sand.u32 %s94, 1
          %s1791 = smul.addr %s1790, 104
          %s1792 = scalar_lea.vmem [#allocation2], %s1791
          %1793 = dma.done %s1789, 1664
        $region44: #{tpu_custom_call.1} parent=39 // pred_fallthru
          _
      $region40: #{tpu_custom_call.1} parent=5 // pred_fallthru
        _
    $region6: #{tpu_custom_call.1} parent=1 // loop_footer
      %s16 = sadd.s32 1, %s12
    $region7: #{tpu_custom_call.1} parent=1 // loop_footer_branch
      %11 = sbr.rel target = $region3
    $region8: #{tpu_custom_call.1} parent=1 // loop_exit
      _
    %1794 = vsyncpa [#allocation3], 1
    %s1795 = scalar_lea.sflag [#allocation3], 1
    %1796 = vsyncpa %s1795, 1

// kernel: tpu_custom_call.1
$region0: #{tpu_custom_call.1}
  #allocation0 [shape = 'u32[]', space=smem, size = 0x4, offset = 0x4, fixed_abs, tag = 'smem constant byte address 0x4 - core index']
  #allocation1 [shape = 'u32[144,128]{1,0:T(1,128)}', space=vmem, size = 0x12000, scoped, tag = 'internal scratch']
  %s0 = inlined_call_operand.vmem [shape: f32[200,16], index: 0, kind: input, shape index: {}]
  %s1 = inlined_call_operand.vmem [shape: f32[16,128], index: 1, kind: input, shape index: {}]
  %s2 = inlined_call_operand.vmem [shape: f32[1,128], index: 2, kind: input, shape index: {}]
  %s3 = inlined_call_operand.hbm [shape: f32[200,128], index: 3, kind: output, shape index: {}]
  %s4 = sld [smem:[#allocation0]]
  $region45: #{tpu_custom_call.1} parent=0
    _
  %s6 = ssub.s32 1, %s4
  %s7 = scalar_select 0, %s6, %s4
  $region1: #{tpu_custom_call.1} parent=0
    #allocation2 [shape = 'u8[106496]{0}', space=vmem, size = 0x1a000, scoped, tag = 'output window, operand 0']
    #allocation3 [shape = 's32[2]{0}', space=sflag, size = 0x8, scoped, tag = 'scoped memory for tpu_custom_call.1']
    %8 = vsyncpa [#allocation3], 0
    %s9 = scalar_lea.sflag [#allocation3], 1
    %10 = vsyncpa %s9, 0
    loop: start=0, step=1, limit=4
    $region2: #{tpu_custom_call.1} parent=1 // loop_pre_header
      _
    $region3: #{tpu_custom_call.1} parent=1 // loop_header
      %s12 = sphi 0, %s16
      %p13 = scmp.ge.s32.totalorder %s12, 4
      %s22 = sphi 0, %s24
      %s25 = sphi 0, %s22
      %s26 = sphi 0, %s25
      %s42 = sphi 0, %s26
      %s46 = sphi 0, %s46
      %s48 = sphi 0, %s46
      %s49 = sphi 0, %s48
      %s63 = sphi 0, %s49
      %s67 = sphi 0, %s67
      %s69 = sphi 0, %s67
      %s70 = sphi 0, %s69
      %s84 = sphi 0, %s70
      %s90 = sphi 0, %s92
      %s93 = sphi 0, %s90
      %s94 = sphi 0, %s93
      %s110 = sphi 0, %s94
    $region4: #{tpu_custom_call.1} parent=1 // loop_header_branch
      %15 = sbr.rel (%p13) target = $region8
    $region5: #{tpu_custom_call.1} parent=1 // loop_body
      %s17 = ssub.s32 %s12, 1
      %s18 = ssub.s32 %s12, 2
      %s19 = sadd.s32 %s12, 1
      %s20 = ssub.s32 %s12, %s19
      %p21 = scmp.eq.s32.totalorder %s20, 0
      %s23 = sadd.s32 %s22, 1
      %s24 = scalar_select %p21, %s22, %s23
      %p27 = pneg %p21
      %p28 = scmp.eq.s32.totalorder %s12, 1
      %p29 = por %p27, %p28
      %p30 = scmp.ne.s32.totalorder %s22, %s25
      %p31 = scmp.eq.s32.totalorder %s12, 0
      %p32 = por %p30, %p31
      %p33 = scmp.ne.s32.totalorder %s22, %s25
      %p34 = scmp.eq.s32.totalorder %s17, 1
      %p35 = por %p33, %p34
      %p36 = scmp.ne.s32.totalorder %s25, %s26
      %p37 = scmp.eq.s32.totalorder %s17, 0
      %p38 = por %p36, %p37
      %p39 = scmp.ne.s32.totalorder %s25, %s26
      %p40 = scmp.eq.s32.totalorder %s18, 1
      %p41 = por %p39, %p40
      %p43 = scmp.ne.s32.totalorder %s26, %s42
      %p44 = scmp.eq.s32.totalorder %s18, 0
      %p45 = por %p43, %p44
      %s47 = sadd.s32 %s46, 1
      %p50 = scmp.eq.s32.totalorder %s12, 1
      %p51 = scmp.ne.s32.totalorder %s46, %s48
      %p52 = scmp.eq.s32.totalorder %s12, 0
      %p53 = por %p51, %p52
      %p54 = scmp.ne.s32.totalorder %s46, %s48
      %p55 = scmp.eq.s32.totalorder %s17, 1
      %p56 = por %p54, %p55
      %p57 = scmp.ne.s32.totalorder %s48, %s49
      %p58 = scmp.eq.s32.totalorder %s17, 0
      %p59 = por %p57, %p58
      %p60 = scmp.ne.s32.totalorder %s48, %s49
      %p61 = scmp.eq.s32.totalorder %s18, 1
      %p62 = por %p60, %p61
      %p64 = scmp.ne.s32.totalorder %s49, %s63
      %p65 = scmp.eq.s32.totalorder %s18, 0
      %p66 = por %p64, %p65
      %s68 = sadd.s32 %s67, 1
      %p71 = scmp.eq.s32.totalorder %s12, 1
      %p72 = scmp.ne.s32.totalorder %s67, %s69
      %p73 = scmp.eq.s32.totalorder %s12, 0
      %p74 = por %p72, %p73
      %p75 = scmp.ne.s32.totalorder %s67, %s69
      %p76 = scmp.eq.s32.totalorder %s17, 1
      %p77 = por %p75, %p76
      %p78 = scmp.ne.s32.totalorder %s69, %s70
      %p79 = scmp.eq.s32.totalorder %s17, 0
      %p80 = por %p78, %p79
      %p81 = scmp.ne.s32.totalorder %s69, %s70
      %p82 = scmp.eq.s32.totalorder %s18, 1
      %p83 = por %p81, %p82
      %p85 = scmp.ne.s32.totalorder %s70, %s84
      %p86 = scmp.eq.s32.totalorder %s18, 0
      %p87 = por %p85, %p86
      %s88 = ssub.s32 %s12, %s19
      %p89 = scmp.eq.s32.totalorder %s88, 0
      %s91 = sadd.s32 %s90, 1
      %s92 = scalar_select %p89, %s90, %s91
      %p95 = pneg %p89
      %p96 = scmp.eq.s32.totalorder %s12, 1
      %p97 = por %p95, %p96
      %p98 = scmp.ne.s32.totalorder %s90, %s93
      %p99 = scmp.eq.s32.totalorder %s12, 0
      %p100 = por %p98, %p99
      %p101 = scmp.ne.s32.totalorder %s90, %s93
      %p102 = scmp.eq.s32.totalorder %s17, 1
      %p103 = por %p101, %p102
      %p104 = scmp.ne.s32.totalorder %s93, %s94
      %p105 = scmp.eq.s32.totalorder %s17, 0
      %p106 = por %p104, %p105
      %p107 = scmp.ne.s32.totalorder %s93, %s94
      %p108 = scmp.eq.s32.totalorder %s18, 1
      %p109 = por %p107, %p108
      %p111 = scmp.ne.s32.totalorder %s94, %s110
      %p112 = scmp.eq.s32.totalorder %s18, 0
      %p113 = por %p111, %p112
      %p114 = scmp.le.s32.totalorder 1, %s12
      %p115 = scmp.lt.s32.totalorder %s12, 3
      %p116 = pnand %p114, %p115
      %p117 = pneg %p116
      // Predicated region
      $region9: #{tpu_custom_call.1} parent=5 // pred_check
        _
      $region10: #{tpu_custom_call.1} parent=5 // pred_check_branch
        %119 = sbr.rel (%p116) target = $region12
      $region11: #{tpu_custom_call.1} parent=5 // pred_region
        %s120 = ssub.s32 %s12, 1
        // Predicated region
        $region13: #{tpu_custom_call.1} parent=11 // pred_check
          %p121 = pneg %p59
        $region14: #{tpu_custom_call.1} parent=11 // pred_check_branch
          %123 = sbr.rel (%p121) target = $region16
        $region15: #{tpu_custom_call.1} parent=11 // pred_region
          _
        $region16: #{tpu_custom_call.1} parent=11 // pred_fallthru
          _
        // Predicated region
        $region17: #{tpu_custom_call.1} parent=11 // pred_check
          %p124 = pneg %p80
        $region18: #{tpu_custom_call.1} parent=11 // pred_check_branch
          %126 = sbr.rel (%p124) target = $region20
        $region19: #{tpu_custom_call.1} parent=11 // pred_region
          _
        $region20: #{tpu_custom_call.1} parent=11 // pred_fallthru
          _
      $region12: #{tpu_custom_call.1} parent=5 // pred_fallthru
        _
      %p127 = scmp.lt.s32.totalorder %s12, 2
      // Predicated region
      $region21: #{tpu_custom_call.1} parent=5 // pred_check
        %p128 = pneg %p127
      $region22: #{tpu_custom_call.1} parent=5 // pred_check_branch
        %130 = sbr.rel (%p128) target = $region24
      $region23: #{tpu_custom_call.1} parent=5 // pred_region
        // Predicated region
        $region25: #{tpu_custom_call.1} parent=23 // pred_check
          %p131 = pneg %p32
        $region26: #{tpu_custom_call.1} parent=23 // pred_check_branch
          %133 = sbr.rel (%p131) target = $region28
        $region27: #{tpu_custom_call.1} parent=23 // pred_region
          %s134 = smul.u32 13, %s12
          %s135 = ssub.s32 25, %s134
          %p136 = scmp.lt.s32.totalorder %s135, 13
          %s137 = scalar_select %p136, %s135, 13
          %s138 = smul.u32 128, %s137
          %p139 = scmp.lt.s32.totalorder %s134, 24
          %s140 = scalar_select %p139, %s134, 24
          %s141 = smul.addr %s140, 8
          %s142 = scalar_lea.vmem %s0, %s141
          %s143 = smul.u32 13, %s12
          %s144 = ssub.s32 25, %s143
          %p145 = scmp.lt.s32.totalorder %s144, 13
          %s146 = scalar_select %p145, %s144, 13
          %s147 = smul.u32 128, %s146
        $region28: #{tpu_custom_call.1} parent=23 // pred_fallthru
          _
      $region24: #{tpu_custom_call.1} parent=5 // pred_fallthru
        _
      %p148 = scmp.le.s32.totalorder 1, %s12
      %p149 = scmp.lt.s32.totalorder %s12, 3
      %p150 = pnand %p148, %p149
      %p151 = pneg %p150
      // Predicated region
      $region29: #{tpu_custom_call.1} parent=5 // pred_check
        _
      $region30: #{tpu_custom_call.1} parent=5 // pred_check_branch
        %153 = sbr.rel (%p150) target = $region32
      $region31: #{tpu_custom_call.1} parent=5 // pred_region
        %s154 = ssub.s32 %s12, 1
        %s155 = smul.u32 13, %s17
        %s156 = ssub.s32 25, %s155
        %p157 = scmp.lt.s32.totalorder %s156, 13
        %s158 = scalar_select %p157, %s156, 13
        %s159 = smul.u32 128, %s158
        %p160 = scmp.lt.s32.totalorder %s155, 24
        %s161 = scalar_select %p160, %s155, 24
        %s162 = smul.addr %s161, 8
        %s163 = scalar_lea.vmem %s0, %s162
        %p164 = pneg %p38
        %p165 = pneg %p35
        %p166 = pneg %p59
        %p167 = pneg %p56
        %p168 = pneg %p80
        %p169 = pneg %p77
        %p170 = pneg %p106
        %p171 = pneg %p103
        %s172 = sand.u32 %s93, 1
        %s173 = scalar_lea.sflag [#allocation3], %s172
        %s174 = sand.u32 %s93, 1
        %s175 = smul.addr %s174, 104
        %s176 = scalar_lea.vmem [#allocation2], %s175
        %s177 = smul.u32 13, %s17
        %s178 = ssub.s32 25, %s177
        %p179 = scmp.lt.s32.totalorder %s178, 13
        %s180 = scalar_select %p179, %s178, 13
        %s181 = smul.u32 128, %s180
        %p182 = scmp.lt.s32.totalorder %s177, 24
        %s183 = scalar_select %p182, %s177, 24
        %s184 = smul.addr %s183, 8
        %s185 = scalar_lea.vmem %s0, %s184
        %s186 = smul.u32 13, %s17
        %s187 = ssub.s32 25, %s186
        %p188 = scmp.lt.s32.totalorder %s187, 13
        %s189 = scalar_select %p188, %s187, 13
        %s190 = smul.u32 128, %s189
        %s191 = smul.u32 13, %s17
        %s192 = ssub.s32 25, %s191
        %p193 = scmp.lt.s32.totalorder %s192, 13
        %s194 = scalar_select %p193, %s192, 13
        %s195 = smul.u32 128, %s194
        %v196 = vld [vmem:[%s185] sm:$0xff]
        %v197 = vld [vmem:[%s185 + $0x8] sm:$0xff]
        %v198 = vld [vmem:[%s185 + $0x10] sm:$0xff]
        %v199 = vld [vmem:[%s185 + $0x18] sm:$0xff]
        %v200 = vld [vmem:[%s185 + $0x20] sm:$0xff]
        %v201 = vld [vmem:[%s185 + $0x28] sm:$0xff]
        %v202 = vld [vmem:[%s185 + $0x30] sm:$0xff]
        %v203 = vld [vmem:[%s185 + $0x38] sm:$0xff]
        %v204 = vld [vmem:[%s185 + $0x40] sm:$0xff]
        %v205 = vld [vmem:[%s185 + $0x48] sm:$0xff]
        %v206 = vld [vmem:[%s185 + $0x50] sm:$0xff]
        %v207 = vld [vmem:[%s185 + $0x58] sm:$0xff]
        %v208 = vld [vmem:[%s185 + $0x60] sm:$0xff]
        %v209 = vld [vmem:[%s1] sm:$0xff]
        %v210 = vld [vmem:[%s1 + $0x8] sm:$0xff]
        %v211 = vld [vmem:[%s2] sm:$0x1]
        %v213 = vlaneseq
        %v214 = vshrl.u32 %v213, 7
        %v215 = vsub.s32 0, %v214
        %v216 = vrot.slane %v211, %v215
        %vm218 = vcmask 130048
        %v220 = vsel %vm218, %v196, 0
        %v223 = vsel %vm218, %v197, 0
        %v226 = vsel %vm218, %v198, 0
        %v229 = vsel %vm218, %v199, 0
        %v232 = vsel %vm218, %v200, 0
        %v235 = vsel %vm218, %v201, 0
        %v238 = vsel %vm218, %v202, 0
        %v241 = vsel %vm218, %v203, 0
        %v244 = vsel %vm218, %v204, 0
        %v247 = vsel %vm218, %v205, 0
        %v250 = vsel %vm218, %v206, 0
        %v253 = vsel %vm218, %v207, 0
        %v256 = vsel %vm218, %v208, 0
        %258 = vmatprep.subr.mxu0 0.0
        %259 = vmatpush1.msra.mxu0 %v209
        %260 = vmatprep.subr.mxu0 0.0
        %261 = vmatpush1.msra.mxu0 %v210
        %262 = vmatprep.subr.mxu0 0.0
        %263 = vmatpush1.msra.mxu0 0.0
        %264 = vmatprep.subr.mxu0 0.0
        %265 = vmatpush1.msra.mxu0 0.0
        %266 = vmatprep.subr.mxu0 0.0
        %267 = vmatpush1.msra.mxu0 0.0
        %268 = vmatprep.subr.mxu0 0.0
        %269 = vmatpush1.msra.mxu0 0.0
        %270 = vmatprep.subr.mxu0 0.0
        %271 = vmatpush1.msra.mxu0 0.0
        %272 = vmatprep.subr.mxu0 0.0
        %273 = vmatpush1.msra.mxu0 0.0
        %274 = vmatprep.subr.mxu0 0.0
        %275 = vmatpush1.msra.mxu0 0.0
        %276 = vmatprep.subr.mxu0 0.0
        %277 = vmatpush1.msra.mxu0 0.0
        %278 = vmatprep.subr.mxu0 0.0
        %279 = vmatpush1.msra.mxu0 0.0
        %280 = vmatprep.subr.mxu0 0.0
        %281 = vmatpush1.msra.mxu0 0.0
        %282 = vmatprep.subr.mxu0 0.0
        %283 = vmatpush1.msra.mxu0 0.0
        %284 = vmatprep.subr.mxu0 0.0
        %285 = vmatpush1.msra.mxu0 0.0
        %286 = vmatprep.subr.mxu0 0.0
        %287 = vmatpush1.msra.mxu0 0.0
        %288 = vmatprep.subr.mxu0 0.0
        %289 = vmatpush1.msra.mxu0 0.0
        %290 = vmatprep.subr.mxu0 0.0
        %291 = vmatpush1.msra.mxu0 0.0
        %292 = vmatprep.subr.mxu0 0.0
        %293 = vmatpush1.msra.mxu0 0.0
        %294 = vmatprep.subr.mxu0 0.0
        %295 = vmatpush1.msra.mxu0 0.0
        %296 = vmatprep.subr.mxu0 0.0
        %297 = vmatpush1.msra.mxu0 0.0
        %298 = vmatprep.subr.mxu0 0.0
        %299 = vmatpush1.msra.mxu0 0.0
        %300 = vmatprep.subr.mxu0 0.0
        %301 = vmatpush1.msra.mxu0 0.0
        %302 = vmatprep.subr.mxu0 0.0
        %303 = vmatpush1.msra.mxu0 0.0
        %304 = vmatprep.subr.mxu0 0.0
        %305 = vmatpush1.msra.mxu0 0.0
        %306 = vmatprep.subr.mxu0 0.0
        %307 = vmatpush1.msra.mxu0 0.0
        %308 = vmatprep.subr.mxu0 0.0
        %309 = vmatpush1.msra.mxu0 0.0
        %310 = vmatprep.subr.mxu0 0.0
        %311 = vmatpush1.msra.mxu0 0.0
        %312 = vmatprep.subr.mxu0 0.0
        %313 = vmatpush1.msra.mxu0 0.0
        %314 = vmatprep.subr.mxu0 0.0
        %315 = vmatpush1.msra.mxu0 0.0
        %316 = vmatprep.subr.mxu0 0.0
        %317 = vmatpush1.msra.mxu0 0.0
        %318 = vmatprep.subr.mxu0 0.0
        %319 = vmatpush1.msra.mxu0 0.0
        %320 = vmatprep.subr.mxu0 0.0
        %321 = vmatpush1.msra.mxu0 0.0
        %322 = vmatprep.mubr.f32.mxu0 0.0
        %323 = vmatmul.mubr.f32.gmra.mrb[0].mxu0 %v220
        %v324 = vpop.f32.mrb[0].mxu0
        %v325 = vadd.f32 %v216, %v324
        %v326 = vpop.f32.mrb[0].mxu0
        %327 = vmatprep.mubr.f32.mxu0 0.0
        %328 = vmatmul.mubr.f32.gmra.mrb[0].mxu0 %v223
        %v329 = vpop.f32.mrb[0].mxu0
        %v330 = vadd.f32 %v216, %v329
        %v331 = vpop.f32.mrb[0].mxu0
        %332 = vmatprep.mubr.f32.mxu0 0.0
        %333 = vmatmul.mubr.f32.gmra.mrb[0].mxu0 %v226
        %v334 = vpop.f32.mrb[0].mxu0
        %v335 = vadd.f32 %v216, %v334
        %v336 = vpop.f32.mrb[0].mxu0
        %337 = vmatprep.mubr.f32.mxu0 0.0
        %338 = vmatmul.mubr.f32.gmra.mrb[0].mxu0 %v229
        %v339 = vpop.f32.mrb[0].mxu0
        %v340 = vadd.f32 %v216, %v339
        %v341 = vpop.f32.mrb[0].mxu0
        %342 = vmatprep.mubr.f32.mxu0 0.0
        %343 = vmatmul.mubr.f32.gmra.mrb[0].mxu0 %v232
        %v344 = vpop.f32.mrb[0].mxu0
        %v345 = vadd.f32 %v216, %v344
        %v346 = vpop.f32.mrb[0].mxu0
        %347 = vmatprep.mubr.f32.mxu0 0.0
        %348 = vmatmul.mubr.f32.gmra.mrb[0].mxu0 %v235
        %v349 = vpop.f32.mrb[0].mxu0
        %v350 = vadd.f32 %v216, %v349
        %v351 = vpop.f32.mrb[0].mxu0
        %352 = vmatprep.mubr.f32.mxu0 0.0
        %353 = vmatmul.mubr.f32.gmra.mrb[0].mxu0 %v238
        %v354 = vpop.f32.mrb[0].mxu0
        %v355 = vadd.f32 %v216, %v354
        %v356 = vpop.f32.mrb[0].mxu0
        %357 = vmatprep.mubr.f32.mxu0 0.0
        %358 = vmatmul.mubr.f32.gmra.mrb[0].mxu0 %v241
        %v359 = vpop.f32.mrb[0].mxu0
        %v360 = vadd.f32 %v216, %v359
        %v361 = vpop.f32.mrb[0].mxu0
        %362 = vmatprep.mubr.f32.mxu0 0.0
        %363 = vmatmul.mubr.f32.gmra.mrb[0].mxu0 %v244
        %v364 = vpop.f32.mrb[0].mxu0
        %v365 = vadd.f32 %v216, %v364
        %v366 = vpop.f32.mrb[0].mxu0
        %367 = vmatprep.mubr.f32.mxu0 0.0
        %368 = vmatmul.mubr.f32.gmra.mrb[0].mxu0 %v247
        %v369 = vpop.f32.mrb[0].mxu0
        %v370 = vadd.f32 %v216, %v369
        %v371 = vpop.f32.mrb[0].mxu0
        %372 = vmatprep.mubr.f32.mxu0 0.0
        %373 = vmatmul.mubr.f32.gmra.mrb[0].mxu0 %v250
        %v374 = vpop.f32.mrb[0].mxu0
        %v375 = vadd.f32 %v216, %v374
        %v376 = vpop.f32.mrb[0].mxu0
        %377 = vmatprep.mubr.f32.mxu0 0.0
        %378 = vmatmul.mubr.f32.gmra.mrb[0].mxu0 %v253
        %v379 = vpop.f32.mrb[0].mxu0
        %v380 = vadd.f32 %v216, %v379
        %v381 = vpop.f32.mrb[0].mxu0
        %382 = vmatprep.mubr.f32.mxu0 0.0
        %383 = vmatmul.mubr.f32.gmra.mrb[0].mxu0 %v256
        %v384 = vpop.f32.mrb[0].mxu0
        %v385 = vadd.f32 %v216, %v384
        %v386 = vpop.f32.mrb[0].mxu0
        %387 = vdwg.mxu0
        %v388 = vand.u32 2147483647, %v325
        %vm389 = vcmp.le.f32.partialorder %v388, 0.7853982
        %vm390 = vcmp.lt.s32.totalorder %v325, 0
        %v391 = vand.u32 %v325, 2139095040
        %v392 = vshrl.u32 %v391, 23
        %v393 = vsub.s32 %v392, 127
        %v394 = vand.u32 2147483647, %v325
        %v395 = vand.u32 %v394, 8388607
        %v396 = vor.u32 %v395, 8388608
        %v397 = vsub.s32 0, %v396
        %v398 = vadd.s32 %v393, 1
        %vm399 = vcmp.gt.s32.totalorder %v398, 0
        %v400 = vsel %vm399, %v398, 0
        %v401 = vshrl.u32 %v400, 5
        %v402 = vand.u32 %v400, 31
        %v403 = vsub.s32 32, %v402
        %v404 = vshrl.u32 683565275, %v403
        %v405 = vshll.u32 683565275, %v402
        %v406 = vshrl.u32 2475754826, %v403
        %v407 = vor.u32 %v405, %v406
        %v408 = vshll.u32 2475754826, %v402
        %v409 = vshrl.u32 2131351028, %v403
        %v410 = vor.u32 %v408, %v409
        %v411 = vshll.u32 2131351028, %v402
        %v412 = vshrl.u32 2102212464, %v403
        %v413 = vor.u32 %v411, %v412
        %v414 = vshll.u32 2102212464, %v402
        %v415 = vshrl.u32 920167782, %v403
        %v416 = vor.u32 %v414, %v415
        %v417 = vshll.u32 920167782, %v402
        %v418 = vshrl.u32 1326507024, %v403
        %v419 = vor.u32 %v417, %v418
        %vm420 = vcmp.lt.s32.totalorder %v401, 1
        %vm421 = vcmp.lt.s32.totalorder %v401, 2
        %vm422 = vcmp.lt.s32.totalorder %v401, 3
        %vm423 = vcmp.lt.s32.totalorder %v401, 4
        %v424 = vsel %vm420, %v404, %v407
        %v425 = vsel %vm423, %v413, 2102212464
        %v426 = vsel %vm422, %v410, %v425
        %v427 = vsel %vm421, %v424, %v426
        %v428 = vsel %vm420, %v407, %v410
        %v429 = vsel %vm423, %v416, 920167782
        %v430 = vsel %vm422, %v413, %v429
        %v431 = vsel %vm421, %v428, %v430
        %v432 = vsel %vm420, %v410, %v413
        %v433 = vsel %vm423, %v419, 1326507024
        %v434 = vsel %vm422, %v416, %v433
        %v435 = vsel %vm421, %v432, %v434
        %v436 = vshll.u32 %v396, 8
        %v437 = vmul.u32.u64.compose %v436, %v435
        %v438 = vextract.low.u32 %v437
        %v439 = vextract.high.u32 %v437
        %v440 = vmul.u32.u64.compose %v436, %v431
        %v441 = vextract.low.u32 %v440
        %v442 = vextract.high.u32 %v440
        %v443 = vmul.u32 %v436, %v427
        %v444 = vadd.s32 %v439, %v441
        %vm445 = vc.u32 %v439, %v441
        %v446 = vadd.s32 %v442, 1
        %v447 = vsel %vm445, %v446, %v442
        %v448 = vadd.s32 %v443, %v447
        %v449 = vadd.s32 %v448, 536870912
        %v450 = vshrl.u32 %v449, 30
        %v451 = vshll.u32 %v450, 30
        %v452 = vsub.s32 %v448, %v451
        %vm453 = vcmp.lt.s32.totalorder %v452, 0
        %v454 = vsub.s32 0, %v452
        %v455 = vsel %vm453, %v454, %v452
        %v456 = vclz %v455
        %v457 = vsub.s32 %v456, 2
        %vm458 = vcmp.gt.s32.totalorder 0, %v457
        %v459 = vsel %vm458, 0, %v457
        %v460 = vsub.s32 32, %v459
        %v461 = vshll.u32 %v452, %v459
        %v462 = vshrl.u32 %v444, %v460
        %v463 = vor.u32 %v461, %v462
        %v464 = vsub.s32 4294967266, %v459
        %v465 = vadd.s32 %v464, 127
        %v466 = vshll.u32 %v465, 23
        %v467 = vor.u32 4788187, %v466
        %v468 = vand.u32 2147483647, %v467
        %v470 = vcvt.s32.f32 %v463
        %v471 = vmul.f32 %v470, %v468
        %v472 = vxor.u32 %v471, 2147483648
        %v473 = vsel %vm390, %v472, %v471
        %v474 = vsub.s32 4, %v450
        %v475 = vsel %vm390, %v474, %v450
        %v476 = vsel %vm389, %v325, %v473
        %v477 = vsel %vm389, 0, %v475
        %v478 = vcosq.f32.pop %v476
        %v479 = vsinq.f32.pop %v476
        %vm480 = vweird.f32 %v325
        %v481 = vadd.s32 %v477, 3
        %v482 = vand.u32 %v481, 3
        %vm483 = vcmp.lt.s32.totalorder %v482, 2
        %vm484 = vcmp.eq.s32.totalorder %v482, 0
        %v485 = vxor.u32 %v479, 2147483648
        %v486 = vsel %vm484, %v478, %v485
        %vm487 = vcmp.eq.s32.totalorder %v482, 2
        %v488 = vxor.u32 %v478, 2147483648
        %v489 = vsel %vm487, %v488, %v479
        %v490 = vsel %vm483, %v486, %v489
        %v491 = vsel %vm480, nan, %v490
        %v492 = vand.u32 2147483647, %v330
        %vm493 = vcmp.le.f32.partialorder %v492, 0.7853982
        %vm494 = vcmp.lt.s32.totalorder %v330, 0
        %v495 = vand.u32 %v330, 2139095040
        %v496 = vshrl.u32 %v495, 23
        %v497 = vsub.s32 %v496, 127
        %v498 = vand.u32 2147483647, %v330
        %v499 = vand.u32 %v498, 8388607
        %v500 = vor.u32 %v499, 8388608
        %v501 = vsub.s32 0, %v500
        %v502 = vadd.s32 %v497, 1
        %vm503 = vcmp.gt.s32.totalorder %v502, 0
        %v504 = vsel %vm503, %v502, 0
        %v505 = vshrl.u32 %v504, 5
        %v506 = vand.u32 %v504, 31
        %v507 = vsub.s32 32, %v506
        %v508 = vshrl.u32 683565275, %v507
        %v509 = vshll.u32 683565275, %v506
        %v510 = vshrl.u32 2475754826, %v507
        %v511 = vor.u32 %v509, %v510
        %v512 = vshll.u32 2475754826, %v506
        %v513 = vshrl.u32 2131351028, %v507
        %v514 = vor.u32 %v512, %v513
        %v515 = vshll.u32 2131351028, %v506
        %v516 = vshrl.u32 2102212464, %v507
        %v517 = vor.u32 %v515, %v516
        %v518 = vshll.u32 2102212464, %v506
        %v519 = vshrl.u32 920167782, %v507
        %v520 = vor.u32 %v518, %v519
        %v521 = vshll.u32 920167782, %v506
        %v522 = vshrl.u32 1326507024, %v507
        %v523 = vor.u32 %v521, %v522
        %vm524 = vcmp.lt.s32.totalorder %v505, 1
        %vm525 = vcmp.lt.s32.totalorder %v505, 2
        %vm526 = vcmp.lt.s32.totalorder %v505, 3
        %vm527 = vcmp.lt.s32.totalorder %v505, 4
        %v528 = vsel %vm524, %v508, %v511
        %v529 = vsel %vm527, %v517, 2102212464
        %v530 = vsel %vm526, %v514, %v529
        %v531 = vsel %vm525, %v528, %v530
        %v532 = vsel %vm524, %v511, %v514
        %v533 = vsel %vm527, %v520, 920167782
        %v534 = vsel %vm526, %v517, %v533
        %v535 = vsel %vm525, %v532, %v534
        %v536 = vsel %vm524, %v514, %v517
        %v537 = vsel %vm527, %v523, 1326507024
        %v538 = vsel %vm526, %v520, %v537
        %v539 = vsel %vm525, %v536, %v538
        %v540 = vshll.u32 %v500, 8
        %v541 = vmul.u32.u64.compose %v540, %v539
        %v542 = vextract.low.u32 %v541
        %v543 = vextract.high.u32 %v541
        %v544 = vmul.u32.u64.compose %v540, %v535
        %v545 = vextract.low.u32 %v544
        %v546 = vextract.high.u32 %v544
        %v547 = vmul.u32 %v540, %v531
        %v548 = vadd.s32 %v543, %v545
        %vm549 = vc.u32 %v543, %v545
        %v550 = vadd.s32 %v546, 1
        %v551 = vsel %vm549, %v550, %v546
        %v552 = vadd.s32 %v547, %v551
        %v553 = vadd.s32 %v552, 536870912
        %v554 = vshrl.u32 %v553, 30
        %v555 = vshll.u32 %v554, 30
        %v556 = vsub.s32 %v552, %v555
        %vm557 = vcmp.lt.s32.totalorder %v556, 0
        %v558 = vsub.s32 0, %v556
        %v559 = vsel %vm557, %v558, %v556
        %v560 = vclz %v559
        %v561 = vsub.s32 %v560, 2
        %vm562 = vcmp.gt.s32.totalorder 0, %v561
        %v563 = vsel %vm562, 0, %v561
        %v564 = vsub.s32 32, %v563
        %v565 = vshll.u32 %v556, %v563
        %v566 = vshrl.u32 %v548, %v564
        %v567 = vor.u32 %v565, %v566
        %v568 = vsub.s32 4294967266, %v563
        %v569 = vadd.s32 %v568, 127
        %v570 = vshll.u32 %v569, 23
        %v571 = vor.u32 4788187, %v570
        %v572 = vand.u32 2147483647, %v571
        %v574 = vcvt.s32.f32 %v567
        %v575 = vmul.f32 %v574, %v572
        %v576 = vxor.u32 %v575, 2147483648
        %v577 = vsel %vm494, %v576, %v575
        %v578 = vsub.s32 4, %v554
        %v579 = vsel %vm494, %v578, %v554
        %v580 = vsel %vm493, %v330, %v577
        %v581 = vsel %vm493, 0, %v579
        %v582 = vcosq.f32.pop %v580
        %v583 = vsinq.f32.pop %v580
        %vm584 = vweird.f32 %v330
        %v585 = vadd.s32 %v581, 3
        %v586 = vand.u32 %v585, 3
        %vm587 = vcmp.lt.s32.totalorder %v586, 2
        %vm588 = vcmp.eq.s32.totalorder %v586, 0
        %v589 = vxor.u32 %v583, 2147483648
        %v590 = vsel %vm588, %v582, %v589
        %vm591 = vcmp.eq.s32.totalorder %v586, 2
        %v592 = vxor.u32 %v582, 2147483648
        %v593 = vsel %vm591, %v592, %v583
        %v594 = vsel %vm587, %v590, %v593
        %v595 = vsel %vm584, nan, %v594
        %v596 = vand.u32 2147483647, %v335
        %vm597 = vcmp.le.f32.partialorder %v596, 0.7853982
        %vm598 = vcmp.lt.s32.totalorder %v335, 0
        %v599 = vand.u32 %v335, 2139095040
        %v600 = vshrl.u32 %v599, 23
        %v601 = vsub.s32 %v600, 127
        %v602 = vand.u32 2147483647, %v335
        %v603 = vand.u32 %v602, 8388607
        %v604 = vor.u32 %v603, 8388608
        %v605 = vsub.s32 0, %v604
        %v606 = vadd.s32 %v601, 1
        %vm607 = vcmp.gt.s32.totalorder %v606, 0
        %v608 = vsel %vm607, %v606, 0
        %v609 = vshrl.u32 %v608, 5
        %v610 = vand.u32 %v608, 31
        %v611 = vsub.s32 32, %v610
        %v612 = vshrl.u32 683565275, %v611
        %v613 = vshll.u32 683565275, %v610
        %v614 = vshrl.u32 2475754826, %v611
        %v615 = vor.u32 %v613, %v614
        %v616 = vshll.u32 2475754826, %v610
        %v617 = vshrl.u32 2131351028, %v611
        %v618 = vor.u32 %v616, %v617
        %v619 = vshll.u32 2131351028, %v610
        %v620 = vshrl.u32 2102212464, %v611
        %v621 = vor.u32 %v619, %v620
        %v622 = vshll.u32 2102212464, %v610
        %v623 = vshrl.u32 920167782, %v611
        %v624 = vor.u32 %v622, %v623
        %v625 = vshll.u32 920167782, %v610
        %v626 = vshrl.u32 1326507024, %v611
        %v627 = vor.u32 %v625, %v626
        %vm628 = vcmp.lt.s32.totalorder %v609, 1
        %vm629 = vcmp.lt.s32.totalorder %v609, 2
        %vm630 = vcmp.lt.s32.totalorder %v609, 3
        %vm631 = vcmp.lt.s32.totalorder %v609, 4
        %v632 = vsel %vm628, %v612, %v615
        %v633 = vsel %vm631, %v621, 2102212464
        %v634 = vsel %vm630, %v618, %v633
        %v635 = vsel %vm629, %v632, %v634
        %v636 = vsel %vm628, %v615, %v618
        %v637 = vsel %vm631, %v624, 920167782
        %v638 = vsel %vm630, %v621, %v637
        %v639 = vsel %vm629, %v636, %v638
        %v640 = vsel %vm628, %v618, %v621
        %v641 = vsel %vm631, %v627, 1326507024
        %v642 = vsel %vm630, %v624, %v641
        %v643 = vsel %vm629, %v640, %v642
        %v644 = vshll.u32 %v604, 8
        %v645 = vmul.u32.u64.compose %v644, %v643
        %v646 = vextract.low.u32 %v645
        %v647 = vextract.high.u32 %v645
        %v648 = vmul.u32.u64.compose %v644, %v639
        %v649 = vextract.low.u32 %v648
        %v650 = vextract.high.u32 %v648
        %v651 = vmul.u32 %v644, %v635
        %v652 = vadd.s32 %v647, %v649
        %vm653 = vc.u32 %v647, %v649
        %v654 = vadd.s32 %v650, 1
        %v655 = vsel %vm653, %v654, %v650
        %v656 = vadd.s32 %v651, %v655
        %v657 = vadd.s32 %v656, 536870912
        %v658 = vshrl.u32 %v657, 30
        %v659 = vshll.u32 %v658, 30
        %v660 = vsub.s32 %v656, %v659
        %vm661 = vcmp.lt.s32.totalorder %v660, 0
        %v662 = vsub.s32 0, %v660
        %v663 = vsel %vm661, %v662, %v660
        %v664 = vclz %v663
        %v665 = vsub.s32 %v664, 2
        %vm666 = vcmp.gt.s32.totalorder 0, %v665
        %v667 = vsel %vm666, 0, %v665
        %v668 = vsub.s32 32, %v667
        %v669 = vshll.u32 %v660, %v667
        %v670 = vshrl.u32 %v652, %v668
        %v671 = vor.u32 %v669, %v670
        %v672 = vsub.s32 4294967266, %v667
        %v673 = vadd.s32 %v672, 127
        %v674 = vshll.u32 %v673, 23
        %v675 = vor.u32 4788187, %v674
        %v676 = vand.u32 2147483647, %v675
        %v678 = vcvt.s32.f32 %v671
        %v679 = vmul.f32 %v678, %v676
        %v680 = vxor.u32 %v679, 2147483648
        %v681 = vsel %vm598, %v680, %v679
        %v682 = vsub.s32 4, %v658
        %v683 = vsel %vm598, %v682, %v658
        %v684 = vsel %vm597, %v335, %v681
        %v685 = vsel %vm597, 0, %v683
        %v686 = vcosq.f32.pop %v684
        %v687 = vsinq.f32.pop %v684
        %vm688 = vweird.f32 %v335
        %v689 = vadd.s32 %v685, 3
        %v690 = vand.u32 %v689, 3
        %vm691 = vcmp.lt.s32.totalorder %v690, 2
        %vm692 = vcmp.eq.s32.totalorder %v690, 0
        %v693 = vxor.u32 %v687, 2147483648
        %v694 = vsel %vm692, %v686, %v693
        %vm695 = vcmp.eq.s32.totalorder %v690, 2
        %v696 = vxor.u32 %v686, 2147483648
        %v697 = vsel %vm695, %v696, %v687
        %v698 = vsel %vm691, %v694, %v697
        %v699 = vsel %vm688, nan, %v698
        %v700 = vand.u32 2147483647, %v340
        %vm701 = vcmp.le.f32.partialorder %v700, 0.7853982
        %vm702 = vcmp.lt.s32.totalorder %v340, 0
        %v703 = vand.u32 %v340, 2139095040
        %v704 = vshrl.u32 %v703, 23
        %v705 = vsub.s32 %v704, 127
        %v706 = vand.u32 2147483647, %v340
        %v707 = vand.u32 %v706, 8388607
        %v708 = vor.u32 %v707, 8388608
        %v709 = vsub.s32 0, %v708
        %v710 = vadd.s32 %v705, 1
        %vm711 = vcmp.gt.s32.totalorder %v710, 0
        %v712 = vsel %vm711, %v710, 0
        %v713 = vshrl.u32 %v712, 5
        %v714 = vand.u32 %v712, 31
        %v715 = vsub.s32 32, %v714
        %v716 = vshrl.u32 683565275, %v715
        %v717 = vshll.u32 683565275, %v714
        %v718 = vshrl.u32 2475754826, %v715
        %v719 = vor.u32 %v717, %v718
        %v720 = vshll.u32 2475754826, %v714
        %v721 = vshrl.u32 2131351028, %v715
        %v722 = vor.u32 %v720, %v721
        %v723 = vshll.u32 2131351028, %v714
        %v724 = vshrl.u32 2102212464, %v715
        %v725 = vor.u32 %v723, %v724
        %v726 = vshll.u32 2102212464, %v714
        %v727 = vshrl.u32 920167782, %v715
        %v728 = vor.u32 %v726, %v727
        %v729 = vshll.u32 920167782, %v714
        %v730 = vshrl.u32 1326507024, %v715
        %v731 = vor.u32 %v729, %v730
        %vm732 = vcmp.lt.s32.totalorder %v713, 1
        %vm733 = vcmp.lt.s32.totalorder %v713, 2
        %vm734 = vcmp.lt.s32.totalorder %v713, 3
        %vm735 = vcmp.lt.s32.totalorder %v713, 4
        %v736 = vsel %vm732, %v716, %v719
        %v737 = vsel %vm735, %v725, 2102212464
        %v738 = vsel %vm734, %v722, %v737
        %v739 = vsel %vm733, %v736, %v738
        %v740 = vsel %vm732, %v719, %v722
        %v741 = vsel %vm735, %v728, 920167782
        %v742 = vsel %vm734, %v725, %v741
        %v743 = vsel %vm733, %v740, %v742
        %v744 = vsel %vm732, %v722, %v725
        %v745 = vsel %vm735, %v731, 1326507024
        %v746 = vsel %vm734, %v728, %v745
        %v747 = vsel %vm733, %v744, %v746
        %v748 = vshll.u32 %v708, 8
        %v749 = vmul.u32.u64.compose %v748, %v747
        %v750 = vextract.low.u32 %v749
        %v751 = vextract.high.u32 %v749
        %v752 = vmul.u32.u64.compose %v748, %v743
        %v753 = vextract.low.u32 %v752
        %v754 = vextract.high.u32 %v752
        %v755 = vmul.u32 %v748, %v739
        %v756 = vadd.s32 %v751, %v753
        %vm757 = vc.u32 %v751, %v753
        %v758 = vadd.s32 %v754, 1
        %v759 = vsel %vm757, %v758, %v754
        %v760 = vadd.s32 %v755, %v759
        %v761 = vadd.s32 %v760, 536870912
        %v762 = vshrl.u32 %v761, 30
        %v763 = vshll.u32 %v762, 30
        %v764 = vsub.s32 %v760, %v763
        %vm765 = vcmp.lt.s32.totalorder %v764, 0
        %v766 = vsub.s32 0, %v764
        %v767 = vsel %vm765, %v766, %v764
        %v768 = vclz %v767
        %v769 = vsub.s32 %v768, 2
        %vm770 = vcmp.gt.s32.totalorder 0, %v769
        %v771 = vsel %vm770, 0, %v769
        %v772 = vsub.s32 32, %v771
        %v773 = vshll.u32 %v764, %v771
        %v774 = vshrl.u32 %v756, %v772
        %v775 = vor.u32 %v773, %v774
        %v776 = vsub.s32 4294967266, %v771
        %v777 = vadd.s32 %v776, 127
        %v778 = vshll.u32 %v777, 23
        %v779 = vor.u32 4788187, %v778
        %v780 = vand.u32 2147483647, %v779
        %v782 = vcvt.s32.f32 %v775
        %v783 = vmul.f32 %v782, %v780
        %v784 = vxor.u32 %v783, 2147483648
        %v785 = vsel %vm702, %v784, %v783
        %v786 = vsub.s32 4, %v762
        %v787 = vsel %vm702, %v786, %v762
        %v788 = vsel %vm701, %v340, %v785
        %v789 = vsel %vm701, 0, %v787
        %v790 = vcosq.f32.pop %v788
        %v791 = vsinq.f32.pop %v788
        %vm792 = vweird.f32 %v340
        %v793 = vadd.s32 %v789, 3
        %v794 = vand.u32 %v793, 3
        %vm795 = vcmp.lt.s32.totalorder %v794, 2
        %vm796 = vcmp.eq.s32.totalorder %v794, 0
        %v797 = vxor.u32 %v791, 2147483648
        %v798 = vsel %vm796, %v790, %v797
        %vm799 = vcmp.eq.s32.totalorder %v794, 2
        %v800 = vxor.u32 %v790, 2147483648
        %v801 = vsel %vm799, %v800, %v791
        %v802 = vsel %vm795, %v798, %v801
        %v803 = vsel %vm792, nan, %v802
        %v804 = vand.u32 2147483647, %v345
        %vm805 = vcmp.le.f32.partialorder %v804, 0.7853982
        %vm806 = vcmp.lt.s32.totalorder %v345, 0
        %v807 = vand.u32 %v345, 2139095040
        %v808 = vshrl.u32 %v807, 23
        %v809 = vsub.s32 %v808, 127
        %v810 = vand.u32 2147483647, %v345
        %v811 = vand.u32 %v810, 8388607
        %v812 = vor.u32 %v811, 8388608
        %v813 = vsub.s32 0, %v812
        %v814 = vadd.s32 %v809, 1
        %vm815 = vcmp.gt.s32.totalorder %v814, 0
        %v816 = vsel %vm815, %v814, 0
        %v817 = vshrl.u32 %v816, 5
        %v818 = vand.u32 %v816, 31
        %v819 = vsub.s32 32, %v818
        %v820 = vshrl.u32 683565275, %v819
        %v821 = vshll.u32 683565275, %v818
        %v822 = vshrl.u32 2475754826, %v819
        %v823 = vor.u32 %v821, %v822
        %v824 = vshll.u32 2475754826, %v818
        %v825 = vshrl.u32 2131351028, %v819
        %v826 = vor.u32 %v824, %v825
        %v827 = vshll.u32 2131351028, %v818
        %v828 = vshrl.u32 2102212464, %v819
        %v829 = vor.u32 %v827, %v828
        %v830 = vshll.u32 2102212464, %v818
        %v831 = vshrl.u32 920167782, %v819
        %v832 = vor.u32 %v830, %v831
        %v833 = vshll.u32 920167782, %v818
        %v834 = vshrl.u32 1326507024, %v819
        %v835 = vor.u32 %v833, %v834
        %vm836 = vcmp.lt.s32.totalorder %v817, 1
        %vm837 = vcmp.lt.s32.totalorder %v817, 2
        %vm838 = vcmp.lt.s32.totalorder %v817, 3
        %vm839 = vcmp.lt.s32.totalorder %v817, 4
        %v840 = vsel %vm836, %v820, %v823
        %v841 = vsel %vm839, %v829, 2102212464
        %v842 = vsel %vm838, %v826, %v841
        %v843 = vsel %vm837, %v840, %v842
        %v844 = vsel %vm836, %v823, %v826
        %v845 = vsel %vm839, %v832, 920167782
        %v846 = vsel %vm838, %v829, %v845
        %v847 = vsel %vm837, %v844, %v846
        %v848 = vsel %vm836, %v826, %v829
        %v849 = vsel %vm839, %v835, 1326507024
        %v850 = vsel %vm838, %v832, %v849
        %v851 = vsel %vm837, %v848, %v850
        %v852 = vshll.u32 %v812, 8
        %v853 = vmul.u32.u64.compose %v852, %v851
        %v854 = vextract.low.u32 %v853
        %v855 = vextract.high.u32 %v853
        %v856 = vmul.u32.u64.compose %v852, %v847
        %v857 = vextract.low.u32 %v856
        %v858 = vextract.high.u32 %v856
        %v859 = vmul.u32 %v852, %v843
        %v860 = vadd.s32 %v855, %v857
        %vm861 = vc.u32 %v855, %v857
        %v862 = vadd.s32 %v858, 1
        %v863 = vsel %vm861, %v862, %v858
        %v864 = vadd.s32 %v859, %v863
        %v865 = vadd.s32 %v864, 536870912
        %v866 = vshrl.u32 %v865, 30
        %v867 = vshll.u32 %v866, 30
        %v868 = vsub.s32 %v864, %v867
        %vm869 = vcmp.lt.s32.totalorder %v868, 0
        %v870 = vsub.s32 0, %v868
        %v871 = vsel %vm869, %v870, %v868
        %v872 = vclz %v871
        %v873 = vsub.s32 %v872, 2
        %vm874 = vcmp.gt.s32.totalorder 0, %v873
        %v875 = vsel %vm874, 0, %v873
        %v876 = vsub.s32 32, %v875
        %v877 = vshll.u32 %v868, %v875
        %v878 = vshrl.u32 %v860, %v876
        %v879 = vor.u32 %v877, %v878
        %v880 = vsub.s32 4294967266, %v875
        %v881 = vadd.s32 %v880, 127
        %v882 = vshll.u32 %v881, 23
        %v883 = vor.u32 4788187, %v882
        %v884 = vand.u32 2147483647, %v883
        %v886 = vcvt.s32.f32 %v879
        %v887 = vmul.f32 %v886, %v884
        %v888 = vxor.u32 %v887, 2147483648
        %v889 = vsel %vm806, %v888, %v887
        %v890 = vsub.s32 4, %v866
        %v891 = vsel %vm806, %v890, %v866
        %v892 = vsel %vm805, %v345, %v889
        %v893 = vsel %vm805, 0, %v891
        %v894 = vcosq.f32.pop %v892
        %v895 = vsinq.f32.pop %v892
        %vm896 = vweird.f32 %v345
        %v897 = vadd.s32 %v893, 3
        %v898 = vand.u32 %v897, 3
        %vm899 = vcmp.lt.s32.totalorder %v898, 2
        %vm900 = vcmp.eq.s32.totalorder %v898, 0
        %v901 = vxor.u32 %v895, 2147483648
        %v902 = vsel %vm900, %v894, %v901
        %vm903 = vcmp.eq.s32.totalorder %v898, 2
        %v904 = vxor.u32 %v894, 2147483648
        %v905 = vsel %vm903, %v904, %v895
        %v906 = vsel %vm899, %v902, %v905
        %v907 = vsel %vm896, nan, %v906
        %v908 = vand.u32 2147483647, %v350
        %vm909 = vcmp.le.f32.partialorder %v908, 0.7853982
        %vm910 = vcmp.lt.s32.totalorder %v350, 0
        %v911 = vand.u32 %v350, 2139095040
        %v912 = vshrl.u32 %v911, 23
        %v913 = vsub.s32 %v912, 127
        %v914 = vand.u32 2147483647, %v350
        %v915 = vand.u32 %v914, 8388607
        %v916 = vor.u32 %v915, 8388608
        %v917 = vsub.s32 0, %v916
        %v918 = vadd.s32 %v913, 1
        %vm919 = vcmp.gt.s32.totalorder %v918, 0
        %v920 = vsel %vm919, %v918, 0
        %v921 = vshrl.u32 %v920, 5
        %v922 = vand.u32 %v920, 31
        %v923 = vsub.s32 32, %v922
        %v924 = vshrl.u32 683565275, %v923
        %v925 = vshll.u32 683565275, %v922
        %v926 = vshrl.u32 2475754826, %v923
        %v927 = vor.u32 %v925, %v926
        %v928 = vshll.u32 2475754826, %v922
        %v929 = vshrl.u32 2131351028, %v923
        %v930 = vor.u32 %v928, %v929
        %v931 = vshll.u32 2131351028, %v922
        %v932 = vshrl.u32 2102212464, %v923
        %v933 = vor.u32 %v931, %v932
        %v934 = vshll.u32 2102212464, %v922
        %v935 = vshrl.u32 920167782, %v923
        %v936 = vor.u32 %v934, %v935
        %v937 = vshll.u32 920167782, %v922
        %v938 = vshrl.u32 1326507024, %v923
        %v939 = vor.u32 %v937, %v938
        %vm940 = vcmp.lt.s32.totalorder %v921, 1
        %vm941 = vcmp.lt.s32.totalorder %v921, 2
        %vm942 = vcmp.lt.s32.totalorder %v921, 3
        %vm943 = vcmp.lt.s32.totalorder %v921, 4
        %v944 = vsel %vm940, %v924, %v927
        %v945 = vsel %vm943, %v933, 2102212464
        %v946 = vsel %vm942, %v930, %v945
        %v947 = vsel %vm941, %v944, %v946
        %v948 = vsel %vm940, %v927, %v930
        %v949 = vsel %vm943, %v936, 920167782
        %v950 = vsel %vm942, %v933, %v949
        %v951 = vsel %vm941, %v948, %v950
        %v952 = vsel %vm940, %v930, %v933
        %v953 = vsel %vm943, %v939, 1326507024
        %v954 = vsel %vm942, %v936, %v953
        %v955 = vsel %vm941, %v952, %v954
        %v956 = vshll.u32 %v916, 8
        %v957 = vmul.u32.u64.compose %v956, %v955
        %v958 = vextract.low.u32 %v957
        %v959 = vextract.high.u32 %v957
        %v960 = vmul.u32.u64.compose %v956, %v951
        %v961 = vextract.low.u32 %v960
        %v962 = vextract.high.u32 %v960
        %v963 = vmul.u32 %v956, %v947
        %v964 = vadd.s32 %v959, %v961
        %vm965 = vc.u32 %v959, %v961
        %v966 = vadd.s32 %v962, 1
        %v967 = vsel %vm965, %v966, %v962
        %v968 = vadd.s32 %v963, %v967
        %v969 = vadd.s32 %v968, 536870912
        %v970 = vshrl.u32 %v969, 30
        %v971 = vshll.u32 %v970, 30
        %v972 = vsub.s32 %v968, %v971
        %vm973 = vcmp.lt.s32.totalorder %v972, 0
        %v974 = vsub.s32 0, %v972
        %v975 = vsel %vm973, %v974, %v972
        %v976 = vclz %v975
        %v977 = vsub.s32 %v976, 2
        %vm978 = vcmp.gt.s32.totalorder 0, %v977
        %v979 = vsel %vm978, 0, %v977
        %v980 = vsub.s32 32, %v979
        %v981 = vshll.u32 %v972, %v979
        %v982 = vshrl.u32 %v964, %v980
        %v983 = vor.u32 %v981, %v982
        %v984 = vsub.s32 4294967266, %v979
        %v985 = vadd.s32 %v984, 127
        %v986 = vshll.u32 %v985, 23
        %v987 = vor.u32 4788187, %v986
        %v988 = vand.u32 2147483647, %v987
        %v990 = vcvt.s32.f32 %v983
        %v991 = vmul.f32 %v990, %v988
        %v992 = vxor.u32 %v991, 2147483648
        %v993 = vsel %vm910, %v992, %v991
        %v994 = vsub.s32 4, %v970
        %v995 = vsel %vm910, %v994, %v970
        %v996 = vsel %vm909, %v350, %v993
        %v997 = vsel %vm909, 0, %v995
        %v998 = vcosq.f32.pop %v996
        %v999 = vsinq.f32.pop %v996
        %vm1000 = vweird.f32 %v350
        %v1001 = vadd.s32 %v997, 3
        %v1002 = vand.u32 %v1001, 3
        %vm1003 = vcmp.lt.s32.totalorder %v1002, 2
        %vm1004 = vcmp.eq.s32.totalorder %v1002, 0
        %v1005 = vxor.u32 %v999, 2147483648
        %v1006 = vsel %vm1004, %v998, %v1005
        %vm1007 = vcmp.eq.s32.totalorder %v1002, 2
        %v1008 = vxor.u32 %v998, 2147483648
        %v1009 = vsel %vm1007, %v1008, %v999
        %v1010 = vsel %vm1003, %v1006, %v1009
        %v1011 = vsel %vm1000, nan, %v1010
        %v1012 = vand.u32 2147483647, %v355
        %vm1013 = vcmp.le.f32.partialorder %v1012, 0.7853982
        %vm1014 = vcmp.lt.s32.totalorder %v355, 0
        %v1015 = vand.u32 %v355, 2139095040
        %v1016 = vshrl.u32 %v1015, 23
        %v1017 = vsub.s32 %v1016, 127
        %v1018 = vand.u32 2147483647, %v355
        %v1019 = vand.u32 %v1018, 8388607
        %v1020 = vor.u32 %v1019, 8388608
        %v1021 = vsub.s32 0, %v1020
        %v1022 = vadd.s32 %v1017, 1
        %vm1023 = vcmp.gt.s32.totalorder %v1022, 0
        %v1024 = vsel %vm1023, %v1022, 0
        %v1025 = vshrl.u32 %v1024, 5
        %v1026 = vand.u32 %v1024, 31
        %v1027 = vsub.s32 32, %v1026
        %v1028 = vshrl.u32 683565275, %v1027
        %v1029 = vshll.u32 683565275, %v1026
        %v1030 = vshrl.u32 2475754826, %v1027
        %v1031 = vor.u32 %v1029, %v1030
        %v1032 = vshll.u32 2475754826, %v1026
        %v1033 = vshrl.u32 2131351028, %v1027
        %v1034 = vor.u32 %v1032, %v1033
        %v1035 = vshll.u32 2131351028, %v1026
        %v1036 = vshrl.u32 2102212464, %v1027
        %v1037 = vor.u32 %v1035, %v1036
        %v1038 = vshll.u32 2102212464, %v1026
        %v1039 = vshrl.u32 920167782, %v1027
        %v1040 = vor.u32 %v1038, %v1039
        %v1041 = vshll.u32 920167782, %v1026
        %v1042 = vshrl.u32 1326507024, %v1027
        %v1043 = vor.u32 %v1041, %v1042
        %vm1044 = vcmp.lt.s32.totalorder %v1025, 1
        %vm1045 = vcmp.lt.s32.totalorder %v1025, 2
        %vm1046 = vcmp.lt.s32.totalorder %v1025, 3
        %vm1047 = vcmp.lt.s32.totalorder %v1025, 4
        %v1048 = vsel %vm1044, %v1028, %v1031
        %v1049 = vsel %vm1047, %v1037, 2102212464
        %v1050 = vsel %vm1046, %v1034, %v1049
        %v1051 = vsel %vm1045, %v1048, %v1050
        %v1052 = vsel %vm1044, %v1031, %v1034
        %v1053 = vsel %vm1047, %v1040, 920167782
        %v1054 = vsel %vm1046, %v1037, %v1053
        %v1055 = vsel %vm1045, %v1052, %v1054
        %v1056 = vsel %vm1044, %v1034, %v1037
        %v1057 = vsel %vm1047, %v1043, 1326507024
        %v1058 = vsel %vm1046, %v1040, %v1057
        %v1059 = vsel %vm1045, %v1056, %v1058
        %v1060 = vshll.u32 %v1020, 8
        %v1061 = vmul.u32.u64.compose %v1060, %v1059
        %v1062 = vextract.low.u32 %v1061
        %v1063 = vextract.high.u32 %v1061
        %v1064 = vmul.u32.u64.compose %v1060, %v1055
        %v1065 = vextract.low.u32 %v1064
        %v1066 = vextract.high.u32 %v1064
        %v1067 = vmul.u32 %v1060, %v1051
        %v1068 = vadd.s32 %v1063, %v1065
        %vm1069 = vc.u32 %v1063, %v1065
        %v1070 = vadd.s32 %v1066, 1
        %v1071 = vsel %vm1069, %v1070, %v1066
        %v1072 = vadd.s32 %v1067, %v1071
        %v1073 = vadd.s32 %v1072, 536870912
        %v1074 = vshrl.u32 %v1073, 30
        %v1075 = vshll.u32 %v1074, 30
        %v1076 = vsub.s32 %v1072, %v1075
        %vm1077 = vcmp.lt.s32.totalorder %v1076, 0
        %v1078 = vsub.s32 0, %v1076
        %v1079 = vsel %vm1077, %v1078, %v1076
        %v1080 = vclz %v1079
        %v1081 = vsub.s32 %v1080, 2
        %vm1082 = vcmp.gt.s32.totalorder 0, %v1081
        %v1083 = vsel %vm1082, 0, %v1081
        %v1084 = vsub.s32 32, %v1083
        %v1085 = vshll.u32 %v1076, %v1083
        %v1086 = vshrl.u32 %v1068, %v1084
        %v1087 = vor.u32 %v1085, %v1086
        %v1088 = vsub.s32 4294967266, %v1083
        %v1089 = vadd.s32 %v1088, 127
        %v1090 = vshll.u32 %v1089, 23
        %v1091 = vor.u32 4788187, %v1090
        %v1092 = vand.u32 2147483647, %v1091
        %v1094 = vcvt.s32.f32 %v1087
        %v1095 = vmul.f32 %v1094, %v1092
        %v1096 = vxor.u32 %v1095, 2147483648
        %v1097 = vsel %vm1014, %v1096, %v1095
        %v1098 = vsub.s32 4, %v1074
        %v1099 = vsel %vm1014, %v1098, %v1074
        %v1100 = vsel %vm1013, %v355, %v1097
        %v1101 = vsel %vm1013, 0, %v1099
        %v1102 = vcosq.f32.pop %v1100
        %v1103 = vsinq.f32.pop %v1100
        %vm1104 = vweird.f32 %v355
        %v1105 = vadd.s32 %v1101, 3
        %v1106 = vand.u32 %v1105, 3
        %vm1107 = vcmp.lt.s32.totalorder %v1106, 2
        %vm1108 = vcmp.eq.s32.totalorder %v1106, 0
        %v1109 = vxor.u32 %v1103, 2147483648
        %v1110 = vsel %vm1108, %v1102, %v1109
        %vm1111 = vcmp.eq.s32.totalorder %v1106, 2
        %v1112 = vxor.u32 %v1102, 2147483648
        %v1113 = vsel %vm1111, %v1112, %v1103
        %v1114 = vsel %vm1107, %v1110, %v1113
        %v1115 = vsel %vm1104, nan, %v1114
        %v1116 = vand.u32 2147483647, %v360
        %vm1117 = vcmp.le.f32.partialorder %v1116, 0.7853982
        %vm1118 = vcmp.lt.s32.totalorder %v360, 0
        %v1119 = vand.u32 %v360, 2139095040
        %v1120 = vshrl.u32 %v1119, 23
        %v1121 = vsub.s32 %v1120, 127
        %v1122 = vand.u32 2147483647, %v360
        %v1123 = vand.u32 %v1122, 8388607
        %v1124 = vor.u32 %v1123, 8388608
        %v1125 = vsub.s32 0, %v1124
        %v1126 = vadd.s32 %v1121, 1
        %vm1127 = vcmp.gt.s32.totalorder %v1126, 0
        %v1128 = vsel %vm1127, %v1126, 0
        %v1129 = vshrl.u32 %v1128, 5
        %v1130 = vand.u32 %v1128, 31
        %v1131 = vsub.s32 32, %v1130
        %v1132 = vshrl.u32 683565275, %v1131
        %v1133 = vshll.u32 683565275, %v1130
        %v1134 = vshrl.u32 2475754826, %v1131
        %v1135 = vor.u32 %v1133, %v1134
        %v1136 = vshll.u32 2475754826, %v1130
        %v1137 = vshrl.u32 2131351028, %v1131
        %v1138 = vor.u32 %v1136, %v1137
        %v1139 = vshll.u32 2131351028, %v1130
        %v1140 = vshrl.u32 2102212464, %v1131
        %v1141 = vor.u32 %v1139, %v1140
        %v1142 = vshll.u32 2102212464, %v1130
        %v1143 = vshrl.u32 920167782, %v1131
        %v1144 = vor.u32 %v1142, %v1143
        %v1145 = vshll.u32 920167782, %v1130
        %v1146 = vshrl.u32 1326507024, %v1131
        %v1147 = vor.u32 %v1145, %v1146
        %vm1148 = vcmp.lt.s32.totalorder %v1129, 1
        %vm1149 = vcmp.lt.s32.totalorder %v1129, 2
        %vm1150 = vcmp.lt.s32.totalorder %v1129, 3
        %vm1151 = vcmp.lt.s32.totalorder %v1129, 4
        %v1152 = vsel %vm1148, %v1132, %v1135
        %v1153 = vsel %vm1151, %v1141, 2102212464
        %v1154 = vsel %vm1150, %v1138, %v1153
        %v1155 = vsel %vm1149, %v1152, %v1154
        %v1156 = vsel %vm1148, %v1135, %v1138
        %v1157 = vsel %vm1151, %v1144, 920167782
        %v1158 = vsel %vm1150, %v1141, %v1157
        %v1159 = vsel %vm1149, %v1156, %v1158
        %v1160 = vsel %vm1148, %v1138, %v1141
        %v1161 = vsel %vm1151, %v1147, 1326507024
        %v1162 = vsel %vm1150, %v1144, %v1161
        %v1163 = vsel %vm1149, %v1160, %v1162
        %v1164 = vshll.u32 %v1124, 8
        %v1165 = vmul.u32.u64.compose %v1164, %v1163
        %v1166 = vextract.low.u32 %v1165
        %v1167 = vextract.high.u32 %v1165
        %v1168 = vmul.u32.u64.compose %v1164, %v1159
        %v1169 = vextract.low.u32 %v1168
        %v1170 = vextract.high.u32 %v1168
        %v1171 = vmul.u32 %v1164, %v1155
        %v1172 = vadd.s32 %v1167, %v1169
        %vm1173 = vc.u32 %v1167, %v1169
        %v1174 = vadd.s32 %v1170, 1
        %v1175 = vsel %vm1173, %v1174, %v1170
        %v1176 = vadd.s32 %v1171, %v1175
        %v1177 = vadd.s32 %v1176, 536870912
        %v1178 = vshrl.u32 %v1177, 30
        %v1179 = vshll.u32 %v1178, 30
        %v1180 = vsub.s32 %v1176, %v1179
        %vm1181 = vcmp.lt.s32.totalorder %v1180, 0
        %v1182 = vsub.s32 0, %v1180
        %v1183 = vsel %vm1181, %v1182, %v1180
        %v1184 = vclz %v1183
        %v1185 = vsub.s32 %v1184, 2
        %vm1186 = vcmp.gt.s32.totalorder 0, %v1185
        %v1187 = vsel %vm1186, 0, %v1185
        %v1188 = vsub.s32 32, %v1187
        %v1189 = vshll.u32 %v1180, %v1187
        %v1190 = vshrl.u32 %v1172, %v1188
        %v1191 = vor.u32 %v1189, %v1190
        %v1192 = vsub.s32 4294967266, %v1187
        %v1193 = vadd.s32 %v1192, 127
        %v1194 = vshll.u32 %v1193, 23
        %v1195 = vor.u32 4788187, %v1194
        %v1196 = vand.u32 2147483647, %v1195
        %v1198 = vcvt.s32.f32 %v1191
        %v1199 = vmul.f32 %v1198, %v1196
        %v1200 = vxor.u32 %v1199, 2147483648
        %v1201 = vsel %vm1118, %v1200, %v1199
        %v1202 = vsub.s32 4, %v1178
        %v1203 = vsel %vm1118, %v1202, %v1178
        %v1204 = vsel %vm1117, %v360, %v1201
        %v1205 = vsel %vm1117, 0, %v1203
        %v1206 = vcosq.f32.pop %v1204
        %v1207 = vsinq.f32.pop %v1204
        %vm1208 = vweird.f32 %v360
        %v1209 = vadd.s32 %v1205, 3
        %v1210 = vand.u32 %v1209, 3
        %vm1211 = vcmp.lt.s32.totalorder %v1210, 2
        %vm1212 = vcmp.eq.s32.totalorder %v1210, 0
        %v1213 = vxor.u32 %v1207, 2147483648
        %v1214 = vsel %vm1212, %v1206, %v1213
        %vm1215 = vcmp.eq.s32.totalorder %v1210, 2
        %v1216 = vxor.u32 %v1206, 2147483648
        %v1217 = vsel %vm1215, %v1216, %v1207
        %v1218 = vsel %vm1211, %v1214, %v1217
        %v1219 = vsel %vm1208, nan, %v1218
        %v1220 = vand.u32 2147483647, %v365
        %vm1221 = vcmp.le.f32.partialorder %v1220, 0.7853982
        %vm1222 = vcmp.lt.s32.totalorder %v365, 0
        %v1223 = vand.u32 %v365, 2139095040
        %v1224 = vshrl.u32 %v1223, 23
        %v1225 = vsub.s32 %v1224, 127
        %v1226 = vand.u32 2147483647, %v365
        %v1227 = vand.u32 %v1226, 8388607
        %v1228 = vor.u32 %v1227, 8388608
        %v1229 = vsub.s32 0, %v1228
        %v1230 = vadd.s32 %v1225, 1
        %vm1231 = vcmp.gt.s32.totalorder %v1230, 0
        %v1232 = vsel %vm1231, %v1230, 0
        %v1233 = vshrl.u32 %v1232, 5
        %v1234 = vand.u32 %v1232, 31
        %v1235 = vsub.s32 32, %v1234
        %v1236 = vshrl.u32 683565275, %v1235
        %v1237 = vshll.u32 683565275, %v1234
        %v1238 = vshrl.u32 2475754826, %v1235
        %v1239 = vor.u32 %v1237, %v1238
        %v1240 = vshll.u32 2475754826, %v1234
        %v1241 = vshrl.u32 2131351028, %v1235
        %v1242 = vor.u32 %v1240, %v1241
        %v1243 = vshll.u32 2131351028, %v1234
        %v1244 = vshrl.u32 2102212464, %v1235
        %v1245 = vor.u32 %v1243, %v1244
        %v1246 = vshll.u32 2102212464, %v1234
        %v1247 = vshrl.u32 920167782, %v1235
        %v1248 = vor.u32 %v1246, %v1247
        %v1249 = vshll.u32 920167782, %v1234
        %v1250 = vshrl.u32 1326507024, %v1235
        %v1251 = vor.u32 %v1249, %v1250
        %vm1252 = vcmp.lt.s32.totalorder %v1233, 1
        %vm1253 = vcmp.lt.s32.totalorder %v1233, 2
        %vm1254 = vcmp.lt.s32.totalorder %v1233, 3
        %vm1255 = vcmp.lt.s32.totalorder %v1233, 4
        %v1256 = vsel %vm1252, %v1236, %v1239
        %v1257 = vsel %vm1255, %v1245, 2102212464
        %v1258 = vsel %vm1254, %v1242, %v1257
        %v1259 = vsel %vm1253, %v1256, %v1258
        %v1260 = vsel %vm1252, %v1239, %v1242
        %v1261 = vsel %vm1255, %v1248, 920167782
        %v1262 = vsel %vm1254, %v1245, %v1261
        %v1263 = vsel %vm1253, %v1260, %v1262
        %v1264 = vsel %vm1252, %v1242, %v1245
        %v1265 = vsel %vm1255, %v1251, 1326507024
        %v1266 = vsel %vm1254, %v1248, %v1265
        %v1267 = vsel %vm1253, %v1264, %v1266
        %v1268 = vshll.u32 %v1228, 8
        %v1269 = vmul.u32.u64.compose %v1268, %v1267
        %v1270 = vextract.low.u32 %v1269
        %v1271 = vextract.high.u32 %v1269
        %v1272 = vmul.u32.u64.compose %v1268, %v1263
        %v1273 = vextract.low.u32 %v1272
        %v1274 = vextract.high.u32 %v1272
        %v1275 = vmul.u32 %v1268, %v1259
        %v1276 = vadd.s32 %v1271, %v1273
        %vm1277 = vc.u32 %v1271, %v1273
        %v1278 = vadd.s32 %v1274, 1
        %v1279 = vsel %vm1277, %v1278, %v1274
        %v1280 = vadd.s32 %v1275, %v1279
        %v1281 = vadd.s32 %v1280, 536870912
        %v1282 = vshrl.u32 %v1281, 30
        %v1283 = vshll.u32 %v1282, 30
        %v1284 = vsub.s32 %v1280, %v1283
        %vm1285 = vcmp.lt.s32.totalorder %v1284, 0
        %v1286 = vsub.s32 0, %v1284
        %v1287 = vsel %vm1285, %v1286, %v1284
        %v1288 = vclz %v1287
        %v1289 = vsub.s32 %v1288, 2
        %vm1290 = vcmp.gt.s32.totalorder 0, %v1289
        %v1291 = vsel %vm1290, 0, %v1289
        %v1292 = vsub.s32 32, %v1291
        %v1293 = vshll.u32 %v1284, %v1291
        %v1294 = vshrl.u32 %v1276, %v1292
        %v1295 = vor.u32 %v1293, %v1294
        %v1296 = vsub.s32 4294967266, %v1291
        %v1297 = vadd.s32 %v1296, 127
        %v1298 = vshll.u32 %v1297, 23
        %v1299 = vor.u32 4788187, %v1298
        %v1300 = vand.u32 2147483647, %v1299
        %v1302 = vcvt.s32.f32 %v1295
        %v1303 = vmul.f32 %v1302, %v1300
        %v1304 = vxor.u32 %v1303, 2147483648
        %v1305 = vsel %vm1222, %v1304, %v1303
        %v1306 = vsub.s32 4, %v1282
        %v1307 = vsel %vm1222, %v1306, %v1282
        %v1308 = vsel %vm1221, %v365, %v1305
        %v1309 = vsel %vm1221, 0, %v1307
        %v1310 = vcosq.f32.pop %v1308
        %v1311 = vsinq.f32.pop %v1308
        %vm1312 = vweird.f32 %v365
        %v1313 = vadd.s32 %v1309, 3
        %v1314 = vand.u32 %v1313, 3
        %vm1315 = vcmp.lt.s32.totalorder %v1314, 2
        %vm1316 = vcmp.eq.s32.totalorder %v1314, 0
        %v1317 = vxor.u32 %v1311, 2147483648
        %v1318 = vsel %vm1316, %v1310, %v1317
        %vm1319 = vcmp.eq.s32.totalorder %v1314, 2
        %v1320 = vxor.u32 %v1310, 2147483648
        %v1321 = vsel %vm1319, %v1320, %v1311
        %v1322 = vsel %vm1315, %v1318, %v1321
        %v1323 = vsel %vm1312, nan, %v1322
        %v1324 = vand.u32 2147483647, %v370
        %vm1325 = vcmp.le.f32.partialorder %v1324, 0.7853982
        %vm1326 = vcmp.lt.s32.totalorder %v370, 0
        %v1327 = vand.u32 %v370, 2139095040
        %v1328 = vshrl.u32 %v1327, 23
        %v1329 = vsub.s32 %v1328, 127
        %v1330 = vand.u32 2147483647, %v370
        %v1331 = vand.u32 %v1330, 8388607
        %v1332 = vor.u32 %v1331, 8388608
        %v1333 = vsub.s32 0, %v1332
        %v1334 = vadd.s32 %v1329, 1
        %vm1335 = vcmp.gt.s32.totalorder %v1334, 0
        %v1336 = vsel %vm1335, %v1334, 0
        %v1337 = vshrl.u32 %v1336, 5
        %v1338 = vand.u32 %v1336, 31
        %v1339 = vsub.s32 32, %v1338
        %v1340 = vshrl.u32 683565275, %v1339
        %v1341 = vshll.u32 683565275, %v1338
        %v1342 = vshrl.u32 2475754826, %v1339
        %v1343 = vor.u32 %v1341, %v1342
        %v1344 = vshll.u32 2475754826, %v1338
        %v1345 = vshrl.u32 2131351028, %v1339
        %v1346 = vor.u32 %v1344, %v1345
        %v1347 = vshll.u32 2131351028, %v1338
        %v1348 = vshrl.u32 2102212464, %v1339
        %v1349 = vor.u32 %v1347, %v1348
        %v1350 = vshll.u32 2102212464, %v1338
        %v1351 = vshrl.u32 920167782, %v1339
        %v1352 = vor.u32 %v1350, %v1351
        %v1353 = vshll.u32 920167782, %v1338
        %v1354 = vshrl.u32 1326507024, %v1339
        %v1355 = vor.u32 %v1353, %v1354
        %vm1356 = vcmp.lt.s32.totalorder %v1337, 1
        %vm1357 = vcmp.lt.s32.totalorder %v1337, 2
        %vm1358 = vcmp.lt.s32.totalorder %v1337, 3
        %vm1359 = vcmp.lt.s32.totalorder %v1337, 4
        %v1360 = vsel %vm1356, %v1340, %v1343
        %v1361 = vsel %vm1359, %v1349, 2102212464
        %v1362 = vsel %vm1358, %v1346, %v1361
        %v1363 = vsel %vm1357, %v1360, %v1362
        %v1364 = vsel %vm1356, %v1343, %v1346
        %v1365 = vsel %vm1359, %v1352, 920167782
        %v1366 = vsel %vm1358, %v1349, %v1365
        %v1367 = vsel %vm1357, %v1364, %v1366
        %v1368 = vsel %vm1356, %v1346, %v1349
        %v1369 = vsel %vm1359, %v1355, 1326507024
        %v1370 = vsel %vm1358, %v1352, %v1369
        %v1371 = vsel %vm1357, %v1368, %v1370
        %v1372 = vshll.u32 %v1332, 8
        %v1373 = vmul.u32.u64.compose %v1372, %v1371
        %v1374 = vextract.low.u32 %v1373
        %v1375 = vextract.high.u32 %v1373
        %v1376 = vmul.u32.u64.compose %v1372, %v1367
        %v1377 = vextract.low.u32 %v1376
        %v1378 = vextract.high.u32 %v1376
        %v1379 = vmul.u32 %v1372, %v1363
        %v1380 = vadd.s32 %v1375, %v1377
        %vm1381 = vc.u32 %v1375, %v1377
        %v1382 = vadd.s32 %v1378, 1
        %v1383 = vsel %vm1381, %v1382, %v1378
        %v1384 = vadd.s32 %v1379, %v1383
        %v1385 = vadd.s32 %v1384, 536870912
        %v1386 = vshrl.u32 %v1385, 30
        %v1387 = vshll.u32 %v1386, 30
        %v1388 = vsub.s32 %v1384, %v1387
        %vm1389 = vcmp.lt.s32.totalorder %v1388, 0
        %v1390 = vsub.s32 0, %v1388
        %v1391 = vsel %vm1389, %v1390, %v1388
        %v1392 = vclz %v1391
        %v1393 = vsub.s32 %v1392, 2
        %vm1394 = vcmp.gt.s32.totalorder 0, %v1393
        %v1395 = vsel %vm1394, 0, %v1393
        %v1396 = vsub.s32 32, %v1395
        %v1397 = vshll.u32 %v1388, %v1395
        %v1398 = vshrl.u32 %v1380, %v1396
        %v1399 = vor.u32 %v1397, %v1398
        %v1400 = vsub.s32 4294967266, %v1395
        %v1401 = vadd.s32 %v1400, 127
        %v1402 = vshll.u32 %v1401, 23
        %v1403 = vor.u32 4788187, %v1402
        %v1404 = vand.u32 2147483647, %v1403
        %v1406 = vcvt.s32.f32 %v1399
        %v1407 = vmul.f32 %v1406, %v1404
        %v1408 = vxor.u32 %v1407, 2147483648
        %v1409 = vsel %vm1326, %v1408, %v1407
        %v1410 = vsub.s32 4, %v1386
        %v1411 = vsel %vm1326, %v1410, %v1386
        %v1412 = vsel %vm1325, %v370, %v1409
        %v1413 = vsel %vm1325, 0, %v1411
        %v1414 = vcosq.f32.pop %v1412
        %v1415 = vsinq.f32.pop %v1412
        %vm1416 = vweird.f32 %v370
        %v1417 = vadd.s32 %v1413, 3
        %v1418 = vand.u32 %v1417, 3
        %vm1419 = vcmp.lt.s32.totalorder %v1418, 2
        %vm1420 = vcmp.eq.s32.totalorder %v1418, 0
        %v1421 = vxor.u32 %v1415, 2147483648
        %v1422 = vsel %vm1420, %v1414, %v1421
        %vm1423 = vcmp.eq.s32.totalorder %v1418, 2
        %v1424 = vxor.u32 %v1414, 2147483648
        %v1425 = vsel %vm1423, %v1424, %v1415
        %v1426 = vsel %vm1419, %v1422, %v1425
        %v1427 = vsel %vm1416, nan, %v1426
        %v1428 = vand.u32 2147483647, %v375
        %vm1429 = vcmp.le.f32.partialorder %v1428, 0.7853982
        %vm1430 = vcmp.lt.s32.totalorder %v375, 0
        %v1431 = vand.u32 %v375, 2139095040
        %v1432 = vshrl.u32 %v1431, 23
        %v1433 = vsub.s32 %v1432, 127
        %v1434 = vand.u32 2147483647, %v375
        %v1435 = vand.u32 %v1434, 8388607
        %v1436 = vor.u32 %v1435, 8388608
        %v1437 = vsub.s32 0, %v1436
        %v1438 = vadd.s32 %v1433, 1
        %vm1439 = vcmp.gt.s32.totalorder %v1438, 0
        %v1440 = vsel %vm1439, %v1438, 0
        %v1441 = vshrl.u32 %v1440, 5
        %v1442 = vand.u32 %v1440, 31
        %v1443 = vsub.s32 32, %v1442
        %v1444 = vshrl.u32 683565275, %v1443
        %v1445 = vshll.u32 683565275, %v1442
        %v1446 = vshrl.u32 2475754826, %v1443
        %v1447 = vor.u32 %v1445, %v1446
        %v1448 = vshll.u32 2475754826, %v1442
        %v1449 = vshrl.u32 2131351028, %v1443
        %v1450 = vor.u32 %v1448, %v1449
        %v1451 = vshll.u32 2131351028, %v1442
        %v1452 = vshrl.u32 2102212464, %v1443
        %v1453 = vor.u32 %v1451, %v1452
        %v1454 = vshll.u32 2102212464, %v1442
        %v1455 = vshrl.u32 920167782, %v1443
        %v1456 = vor.u32 %v1454, %v1455
        %v1457 = vshll.u32 920167782, %v1442
        %v1458 = vshrl.u32 1326507024, %v1443
        %v1459 = vor.u32 %v1457, %v1458
        %vm1460 = vcmp.lt.s32.totalorder %v1441, 1
        %vm1461 = vcmp.lt.s32.totalorder %v1441, 2
        %vm1462 = vcmp.lt.s32.totalorder %v1441, 3
        %vm1463 = vcmp.lt.s32.totalorder %v1441, 4
        %v1464 = vsel %vm1460, %v1444, %v1447
        %v1465 = vsel %vm1463, %v1453, 2102212464
        %v1466 = vsel %vm1462, %v1450, %v1465
        %v1467 = vsel %vm1461, %v1464, %v1466
        %v1468 = vsel %vm1460, %v1447, %v1450
        %v1469 = vsel %vm1463, %v1456, 920167782
        %v1470 = vsel %vm1462, %v1453, %v1469
        %v1471 = vsel %vm1461, %v1468, %v1470
        %v1472 = vsel %vm1460, %v1450, %v1453
        %v1473 = vsel %vm1463, %v1459, 1326507024
        %v1474 = vsel %vm1462, %v1456, %v1473
        %v1475 = vsel %vm1461, %v1472, %v1474
        %v1476 = vshll.u32 %v1436, 8
        %v1477 = vmul.u32.u64.compose %v1476, %v1475
        %v1478 = vextract.low.u32 %v1477
        %v1479 = vextract.high.u32 %v1477
        %v1480 = vmul.u32.u64.compose %v1476, %v1471
        %v1481 = vextract.low.u32 %v1480
        %v1482 = vextract.high.u32 %v1480
        %v1483 = vmul.u32 %v1476, %v1467
        %v1484 = vadd.s32 %v1479, %v1481
        %vm1485 = vc.u32 %v1479, %v1481
        %v1486 = vadd.s32 %v1482, 1
        %v1487 = vsel %vm1485, %v1486, %v1482
        %v1488 = vadd.s32 %v1483, %v1487
        %v1489 = vadd.s32 %v1488, 536870912
        %v1490 = vshrl.u32 %v1489, 30
        %v1491 = vshll.u32 %v1490, 30
        %v1492 = vsub.s32 %v1488, %v1491
        %vm1493 = vcmp.lt.s32.totalorder %v1492, 0
        %v1494 = vsub.s32 0, %v1492
        %v1495 = vsel %vm1493, %v1494, %v1492
        %v1496 = vclz %v1495
        %v1497 = vsub.s32 %v1496, 2
        %vm1498 = vcmp.gt.s32.totalorder 0, %v1497
        %v1499 = vsel %vm1498, 0, %v1497
        %v1500 = vsub.s32 32, %v1499
        %v1501 = vshll.u32 %v1492, %v1499
        %v1502 = vshrl.u32 %v1484, %v1500
        %v1503 = vor.u32 %v1501, %v1502
        %v1504 = vsub.s32 4294967266, %v1499
        %v1505 = vadd.s32 %v1504, 127
        %v1506 = vshll.u32 %v1505, 23
        %v1507 = vor.u32 4788187, %v1506
        %v1508 = vand.u32 2147483647, %v1507
        %v1510 = vcvt.s32.f32 %v1503
        %v1511 = vmul.f32 %v1510, %v1508
        %v1512 = vxor.u32 %v1511, 2147483648
        %v1513 = vsel %vm1430, %v1512, %v1511
        %v1514 = vsub.s32 4, %v1490
        %v1515 = vsel %vm1430, %v1514, %v1490
        %v1516 = vsel %vm1429, %v375, %v1513
        %v1517 = vsel %vm1429, 0, %v1515
        %v1518 = vcosq.f32.pop %v1516
        %v1519 = vsinq.f32.pop %v1516
        %vm1520 = vweird.f32 %v375
        %v1521 = vadd.s32 %v1517, 3
        %v1522 = vand.u32 %v1521, 3
        %vm1523 = vcmp.lt.s32.totalorder %v1522, 2
        %vm1524 = vcmp.eq.s32.totalorder %v1522, 0
        %v1525 = vxor.u32 %v1519, 2147483648
        %v1526 = vsel %vm1524, %v1518, %v1525
        %vm1527 = vcmp.eq.s32.totalorder %v1522, 2
        %v1528 = vxor.u32 %v1518, 2147483648
        %v1529 = vsel %vm1527, %v1528, %v1519
        %v1530 = vsel %vm1523, %v1526, %v1529
        %v1531 = vsel %vm1520, nan, %v1530
        %v1532 = vand.u32 2147483647, %v380
        %vm1533 = vcmp.le.f32.partialorder %v1532, 0.7853982
        %vm1534 = vcmp.lt.s32.totalorder %v380, 0
        %v1535 = vand.u32 %v380, 2139095040
        %v1536 = vshrl.u32 %v1535, 23
        %v1537 = vsub.s32 %v1536, 127
        %v1538 = vand.u32 2147483647, %v380
        %v1539 = vand.u32 %v1538, 8388607
        %v1540 = vor.u32 %v1539, 8388608
        %v1541 = vsub.s32 0, %v1540
        %v1542 = vadd.s32 %v1537, 1
        %vm1543 = vcmp.gt.s32.totalorder %v1542, 0
        %v1544 = vsel %vm1543, %v1542, 0
        %v1545 = vshrl.u32 %v1544, 5
        %v1546 = vand.u32 %v1544, 31
        %v1547 = vsub.s32 32, %v1546
        %v1548 = vshrl.u32 683565275, %v1547
        %v1549 = vshll.u32 683565275, %v1546
        %v1550 = vshrl.u32 2475754826, %v1547
        %v1551 = vor.u32 %v1549, %v1550
        %v1552 = vshll.u32 2475754826, %v1546
        %v1553 = vshrl.u32 2131351028, %v1547
        %v1554 = vor.u32 %v1552, %v1553
        %v1555 = vshll.u32 2131351028, %v1546
        %v1556 = vshrl.u32 2102212464, %v1547
        %v1557 = vor.u32 %v1555, %v1556
        %v1558 = vshll.u32 2102212464, %v1546
        %v1559 = vshrl.u32 920167782, %v1547
        %v1560 = vor.u32 %v1558, %v1559
        %v1561 = vshll.u32 920167782, %v1546
        %v1562 = vshrl.u32 1326507024, %v1547
        %v1563 = vor.u32 %v1561, %v1562
        %vm1564 = vcmp.lt.s32.totalorder %v1545, 1
        %vm1565 = vcmp.lt.s32.totalorder %v1545, 2
        %vm1566 = vcmp.lt.s32.totalorder %v1545, 3
        %vm1567 = vcmp.lt.s32.totalorder %v1545, 4
        %v1568 = vsel %vm1564, %v1548, %v1551
        %v1569 = vsel %vm1567, %v1557, 2102212464
        %v1570 = vsel %vm1566, %v1554, %v1569
        %v1571 = vsel %vm1565, %v1568, %v1570
        %v1572 = vsel %vm1564, %v1551, %v1554
        %v1573 = vsel %vm1567, %v1560, 920167782
        %v1574 = vsel %vm1566, %v1557, %v1573
        %v1575 = vsel %vm1565, %v1572, %v1574
        %v1576 = vsel %vm1564, %v1554, %v1557
        %v1577 = vsel %vm1567, %v1563, 1326507024
        %v1578 = vsel %vm1566, %v1560, %v1577
        %v1579 = vsel %vm1565, %v1576, %v1578
        %v1580 = vshll.u32 %v1540, 8
        %v1581 = vmul.u32.u64.compose %v1580, %v1579
        %v1582 = vextract.low.u32 %v1581
        %v1583 = vextract.high.u32 %v1581
        %v1584 = vmul.u32.u64.compose %v1580, %v1575
        %v1585 = vextract.low.u32 %v1584
        %v1586 = vextract.high.u32 %v1584
        %v1587 = vmul.u32 %v1580, %v1571
        %v1588 = vadd.s32 %v1583, %v1585
        %vm1589 = vc.u32 %v1583, %v1585
        %v1590 = vadd.s32 %v1586, 1
        %v1591 = vsel %vm1589, %v1590, %v1586
        %v1592 = vadd.s32 %v1587, %v1591
        %v1593 = vadd.s32 %v1592, 536870912
        %v1594 = vshrl.u32 %v1593, 30
        %v1595 = vshll.u32 %v1594, 30
        %v1596 = vsub.s32 %v1592, %v1595
        %vm1597 = vcmp.lt.s32.totalorder %v1596, 0
        %v1598 = vsub.s32 0, %v1596
        %v1599 = vsel %vm1597, %v1598, %v1596
        %v1600 = vclz %v1599
        %v1601 = vsub.s32 %v1600, 2
        %vm1602 = vcmp.gt.s32.totalorder 0, %v1601
        %v1603 = vsel %vm1602, 0, %v1601
        %v1604 = vsub.s32 32, %v1603
        %v1605 = vshll.u32 %v1596, %v1603
        %v1606 = vshrl.u32 %v1588, %v1604
        %v1607 = vor.u32 %v1605, %v1606
        %v1608 = vsub.s32 4294967266, %v1603
        %v1609 = vadd.s32 %v1608, 127
        %v1610 = vshll.u32 %v1609, 23
        %v1611 = vor.u32 4788187, %v1610
        %v1612 = vand.u32 2147483647, %v1611
        %v1614 = vcvt.s32.f32 %v1607
        %v1615 = vmul.f32 %v1614, %v1612
        %v1616 = vxor.u32 %v1615, 2147483648
        %v1617 = vsel %vm1534, %v1616, %v1615
        %v1618 = vsub.s32 4, %v1594
        %v1619 = vsel %vm1534, %v1618, %v1594
        %v1620 = vsel %vm1533, %v380, %v1617
        %v1621 = vsel %vm1533, 0, %v1619
        %v1622 = vcosq.f32.pop %v1620
        %v1623 = vsinq.f32.pop %v1620
        %vm1624 = vweird.f32 %v380
        %v1625 = vadd.s32 %v1621, 3
        %v1626 = vand.u32 %v1625, 3
        %vm1627 = vcmp.lt.s32.totalorder %v1626, 2
        %vm1628 = vcmp.eq.s32.totalorder %v1626, 0
        %v1629 = vxor.u32 %v1623, 2147483648
        %v1630 = vsel %vm1628, %v1622, %v1629
        %vm1631 = vcmp.eq.s32.totalorder %v1626, 2
        %v1632 = vxor.u32 %v1622, 2147483648
        %v1633 = vsel %vm1631, %v1632, %v1623
        %v1634 = vsel %vm1627, %v1630, %v1633
        %v1635 = vsel %vm1624, nan, %v1634
        %v1636 = vand.u32 2147483647, %v385
        %vm1637 = vcmp.le.f32.partialorder %v1636, 0.7853982
        %vm1638 = vcmp.lt.s32.totalorder %v385, 0
        %v1639 = vand.u32 %v385, 2139095040
        %v1640 = vshrl.u32 %v1639, 23
        %v1641 = vsub.s32 %v1640, 127
        %v1642 = vand.u32 2147483647, %v385
        %v1643 = vand.u32 %v1642, 8388607
        %v1644 = vor.u32 %v1643, 8388608
        %v1645 = vsub.s32 0, %v1644
        %v1646 = vadd.s32 %v1641, 1
        %vm1647 = vcmp.gt.s32.totalorder %v1646, 0
        %v1648 = vsel %vm1647, %v1646, 0
        %v1649 = vshrl.u32 %v1648, 5
        %v1650 = vand.u32 %v1648, 31
        %v1651 = vsub.s32 32, %v1650
        %v1652 = vshrl.u32 683565275, %v1651
        %v1653 = vshll.u32 683565275, %v1650
        %v1654 = vshrl.u32 2475754826, %v1651
        %v1655 = vor.u32 %v1653, %v1654
        %v1656 = vshll.u32 2475754826, %v1650
        %v1657 = vshrl.u32 2131351028, %v1651
        %v1658 = vor.u32 %v1656, %v1657
        %v1659 = vshll.u32 2131351028, %v1650
        %v1660 = vshrl.u32 2102212464, %v1651
        %v1661 = vor.u32 %v1659, %v1660
        %v1662 = vshll.u32 2102212464, %v1650
        %v1663 = vshrl.u32 920167782, %v1651
        %v1664 = vor.u32 %v1662, %v1663
        %v1665 = vshll.u32 920167782, %v1650
        %v1666 = vshrl.u32 1326507024, %v1651
        %v1667 = vor.u32 %v1665, %v1666
        %vm1668 = vcmp.lt.s32.totalorder %v1649, 1
        %vm1669 = vcmp.lt.s32.totalorder %v1649, 2
        %vm1670 = vcmp.lt.s32.totalorder %v1649, 3
        %vm1671 = vcmp.lt.s32.totalorder %v1649, 4
        %v1672 = vsel %vm1668, %v1652, %v1655
        %v1673 = vsel %vm1671, %v1661, 2102212464
        %v1674 = vsel %vm1670, %v1658, %v1673
        %v1675 = vsel %vm1669, %v1672, %v1674
        %v1676 = vsel %vm1668, %v1655, %v1658
        %v1677 = vsel %vm1671, %v1664, 920167782
        %v1678 = vsel %vm1670, %v1661, %v1677
        %v1679 = vsel %vm1669, %v1676, %v1678
        %v1680 = vsel %vm1668, %v1658, %v1661
        %v1681 = vsel %vm1671, %v1667, 1326507024
        %v1682 = vsel %vm1670, %v1664, %v1681
        %v1683 = vsel %vm1669, %v1680, %v1682
        %v1684 = vshll.u32 %v1644, 8
        %v1685 = vmul.u32.u64.compose %v1684, %v1683
        %v1686 = vextract.low.u32 %v1685
        %v1687 = vextract.high.u32 %v1685
        %v1688 = vmul.u32.u64.compose %v1684, %v1679
        %v1689 = vextract.low.u32 %v1688
        %v1690 = vextract.high.u32 %v1688
        %v1691 = vmul.u32 %v1684, %v1675
        %v1692 = vadd.s32 %v1687, %v1689
        %vm1693 = vc.u32 %v1687, %v1689
        %v1694 = vadd.s32 %v1690, 1
        %v1695 = vsel %vm1693, %v1694, %v1690
        %v1696 = vadd.s32 %v1691, %v1695
        %v1697 = vadd.s32 %v1696, 536870912
        %v1698 = vshrl.u32 %v1697, 30
        %v1699 = vshll.u32 %v1698, 30
        %v1700 = vsub.s32 %v1696, %v1699
        %vm1701 = vcmp.lt.s32.totalorder %v1700, 0
        %v1702 = vsub.s32 0, %v1700
        %v1703 = vsel %vm1701, %v1702, %v1700
        %v1704 = vclz %v1703
        %v1705 = vsub.s32 %v1704, 2
        %vm1706 = vcmp.gt.s32.totalorder 0, %v1705
        %v1707 = vsel %vm1706, 0, %v1705
        %v1708 = vsub.s32 32, %v1707
        %v1709 = vshll.u32 %v1700, %v1707
        %v1710 = vshrl.u32 %v1692, %v1708
        %v1711 = vor.u32 %v1709, %v1710
        %v1712 = vsub.s32 4294967266, %v1707
        %v1713 = vadd.s32 %v1712, 127
        %v1714 = vshll.u32 %v1713, 23
        %v1715 = vor.u32 4788187, %v1714
        %v1716 = vand.u32 2147483647, %v1715
        %v1718 = vcvt.s32.f32 %v1711
        %v1719 = vmul.f32 %v1718, %v1716
        %v1720 = vxor.u32 %v1719, 2147483648
        %v1721 = vsel %vm1638, %v1720, %v1719
        %v1722 = vsub.s32 4, %v1698
        %v1723 = vsel %vm1638, %v1722, %v1698
        %v1724 = vsel %vm1637, %v385, %v1721
        %v1725 = vsel %vm1637, 0, %v1723
        %v1726 = vcosq.f32.pop %v1724
        %v1727 = vsinq.f32.pop %v1724
        %vm1728 = vweird.f32 %v385
        %v1729 = vadd.s32 %v1725, 3
        %v1730 = vand.u32 %v1729, 3
        %vm1731 = vcmp.lt.s32.totalorder %v1730, 2
        %vm1732 = vcmp.eq.s32.totalorder %v1730, 0
        %v1733 = vxor.u32 %v1727, 2147483648
        %v1734 = vsel %vm1732, %v1726, %v1733
        %vm1735 = vcmp.eq.s32.totalorder %v1730, 2
        %v1736 = vxor.u32 %v1726, 2147483648
        %v1737 = vsel %vm1735, %v1736, %v1727
        %v1738 = vsel %vm1731, %v1734, %v1737
        %v1739 = vsel %vm1728, nan, %v1738
        %1740 = vst [vmem:[%s176] sm:$0xff] %v491
        %1741 = vst [vmem:[%s176 + $0x8] sm:$0xff] %v595
        %1742 = vst [vmem:[%s176 + $0x10] sm:$0xff] %v699
        %1743 = vst [vmem:[%s176 + $0x18] sm:$0xff] %v803
        %1744 = vst [vmem:[%s176 + $0x20] sm:$0xff] %v907
        %1745 = vst [vmem:[%s176 + $0x28] sm:$0xff] %v1011
        %1746 = vst [vmem:[%s176 + $0x30] sm:$0xff] %v1115
        %1747 = vst [vmem:[%s176 + $0x38] sm:$0xff] %v1219
        %1748 = vst [vmem:[%s176 + $0x40] sm:$0xff] %v1323
        %1749 = vst [vmem:[%s176 + $0x48] sm:$0xff] %v1427
        %1750 = vst [vmem:[%s176 + $0x50] sm:$0xff] %v1531
        %1751 = vst [vmem:[%s176 + $0x58] sm:$0xff] %v1635
        %1752 = vst [vmem:[%s176 + $0x60] sm:$0xff] %v1739
        %s1753 = sand.u32 %s93, 1
        %s1754 = scalar_lea.sflag [#allocation3], %s1753
        %s1755 = sand.u32 %s93, 1
        %s1756 = smul.addr %s1755, 104
        %s1757 = scalar_lea.vmem [#allocation2], %s1756
        // Predicated region
        $region33: #{tpu_custom_call.1} parent=31 // pred_check
          %p1758 = pneg %p103
        $region34: #{tpu_custom_call.1} parent=31 // pred_check_branch
          %1760 = sbr.rel (%p1758) target = $region36
        $region35: #{tpu_custom_call.1} parent=31 // pred_region
          %s1761 = smul.u32 13, %s17
          %s1762 = ssub.s32 25, %s1761
          %p1763 = scmp.lt.s32.totalorder %s1762, 13
          %s1764 = scalar_select %p1763, %s1762, 13
          %s1765 = smul.u32 128, %s1764
          %s1767 = ssub.s32 1664, %s1765
          %1768 = vsyncadd %s1754, %s1767
          %p1769 = scmp.ne.s32.totalorder 0, %s1765
          %s1770 = smul.addr %s1761, 128
          %s1771 = scalar_lea.hbm %s3, %s1770
          %s1772 = smul.u32 8, %s1764
          %s1773 = sshll.u32 %s1757, 4
          %s1774 = int_to_ptr.vmem [resolvable:$true] %s1773
          %s1775 = sshll.u32 %s1772, 4
          %1779 = dma.vmem_to_hbm [thread:$0]  (%p1769), %s1774, %s1775, %s1771, %s1754, 128, 128, 8
        $region36: #{tpu_custom_call.1} parent=31 // pred_fallthru
          _
      $region32: #{tpu_custom_call.1} parent=5 // pred_fallthru
        _
      %p1780 = scmp.le.s32.totalorder 2, %s12
      // Predicated region
      $region37: #{tpu_custom_call.1} parent=5 // pred_check
        %p1781 = pneg %p1780
      $region38: #{tpu_custom_call.1} parent=5 // pred_check_branch
        %1783 = sbr.rel (%p1781) target = $region40
      $region39: #{tpu_custom_call.1} parent=5 // pred_region
        %s1784 = ssub.s32 %s12, 2
        // Predicated region
        $region41: #{tpu_custom_call.1} parent=39 // pred_check
          %p1785 = pneg %p109
        $region42: #{tpu_custom_call.1} parent=39 // pred_check_branch
          %1787 = sbr.rel (%p1785) target = $region44
        $region43: #{tpu_custom_call.1} parent=39 // pred_region
          %s1788 = sand.u32 %s94, 1
          %s1789 = scalar_lea.sflag [#allocation3], %s1788
          %s1790 = sand.u32 %s94, 1
          %s1791 = smul.addr %s1790, 104
          %s1792 = scalar_lea.vmem [#allocation2], %s1791
          %1793 = dma.done %s1789, 1664
        $region44: #{tpu_custom_call.1} parent=39 // pred_fallthru
          _
      $region40: #{tpu_custom_call.1} parent=5 // pred_fallthru
        _
    $region6: #{tpu_custom_call.1} parent=1 // loop_footer
      %s16 = sadd.s32 1, %s12
    $region7: #{tpu_custom_call.1} parent=1 // loop_footer_branch
      %11 = sbr.rel target = $region3
    $region8: #{tpu_custom_call.1} parent=1 // loop_exit
      _
    %1794 = vsyncpa [#allocation3], 1
    %s1795 = scalar_lea.sflag [#allocation3], 1
    %1796 = vsyncpa %s1795, 1

</llo_original>
